<compile_context>
chip_gen: v6e
topology: v6e:2x2x1
jax: 0.10.0
libtpu: 0.0.40
codegen_flags: <defaults>
</compile_context>

<pallas_src>
import jax
import jax.numpy as jnp
from jax import lax
from jax.experimental import pallas as pl
from jax.experimental.pallas import tpu as pltpu


# ----------------------------- helpers -----------------------------

def _round_up(a, m):
    return (a + m - 1) // m * m


# ----------------------------- fused Pallas kernel -----------------------------

def _fused_block_kernel(Wp2, Q2, R2, depth, inv_hw):
    """One grid step = one image.

    lhs1_ref : (1, R2, 9*Cin) bf16  K-stacked conv1 im2col on the padded ypad grid
    w1k_ref  : (9*Cin, depth) bf16
    alpha_ref: (1, depth)     f32   PReLU slopes
    w2t_ref  : (9, depth, depth) bf16  conv2 taps (bn2 scale folded)
    b2_ref   : (1, depth)     f32   bn2 bias
    xs_ref   : (1, Q2, Cin)   bf16  raw x on the dense (H, W+2) grid (shortcut input)
    wsc_ref  : (Cin, depth)   bf16  1x1 shortcut weights (bnsc scale folded)
    bsc_ref  : (1, depth)     f32   bnsc bias
    wfc1_ref : (depth, depth//16) f32 ; wfc2_ref : (depth//16, depth) f32   SE fc weights
    mask2_ref: (Q2, 1)        f32   1.0 on the ho*wo stride-s sample points
    o_ref    : (1, Q2, depth) f32   dense block output (wrapper subsamples [::s, ::s])
    ypad_ref : (R2, depth)    f32   VMEM scratch: zero-padded conv1+PReLU output
    """
    def kernel(lhs1_ref, w1k_ref, alpha_ref, w2t_ref, b2_ref,
               xs_ref, wsc_ref, bsc_ref, wfc1_ref, wfc2_ref, mask2_ref,
               o_ref, ypad_ref):
        # ---- conv1 (3x3, stride 1, pad 1): one K-stacked bf16 matmul + PReLU ----
        acc1 = jnp.dot(lhs1_ref[0], w1k_ref[...],
                       preferred_element_type=jnp.float32)            # (R2, depth) f32
        alpha = alpha_ref[...]
        ypad_ref[...] = jnp.where(acc1 > 0.0, acc1, acc1 * alpha)     # zero-padded PReLU(conv1)

        # ---- conv2 (3x3, pad 1), dense stride-1 via flat-row shifts + bn2 bias ----
        acc2 = jnp.zeros((Q2, depth), jnp.float32)
        for k in range(9):                                             # static unroll
            ky, kx = divmod(k, 3)
            off = ky * Wp2 + kx                                        # constant flat-row shift
            ys = ypad_ref[pl.ds(off, Q2), :].astype(jnp.bfloat16)
            acc2 = acc2 + jnp.dot(ys, w2t_ref[k],
                                  preferred_element_type=jnp.float32)
        res = acc2 + b2_ref[...]                                       # bn2 scale already folded

        # ---- SEModule(depth, 16): avg-pool over the stride-s sample points only ----
        pooled = jnp.sum(res * mask2_ref[...], axis=0, keepdims=True) * inv_hw   # (1, depth)
        h = jnp.maximum(jnp.dot(pooled, wfc1_ref[...],
                                preferred_element_type=jnp.float32), 0.0)
        gate = jax.nn.sigmoid(jnp.dot(h, wfc2_ref[...],
                                      preferred_element_type=jnp.float32))       # (1, depth)

        # ---- shortcut 1x1 conv (dense; bnsc scale folded) + residual add ----
        short = jnp.dot(xs_ref[0], wsc_ref[...],
                        preferred_element_type=jnp.float32) + bsc_ref[...]
        o_ref[0] = res * gate + short
    return kernel


# ----------------------------- wrapper -----------------------------

def bottleneck_ir_se_forward(x_nchw, p, stride):
    s = stride
    x = jnp.transpose(x_nchw, (0, 2, 3, 1)).astype(jnp.float32)       # NCHW -> NHWC
    N, H, W, Cin = x.shape
    depth = p["alpha"].shape[1]
    dr = p["w_fc1"].shape[1]
    ho = (H - 1) // s + 1
    wo = (W - 1) // s + 1
    Hp2, Wp2 = H + 2, W + 2
    Q2 = H * Wp2                                  # dense conv2/out rows (2 garbage cols / row)
    R2 = _round_up(Hp2 * Wp2, 8)                  # ypad rows (conv1 output grid)

    # BN1 (inference affine) -> zero pad -> 9-tap K-stacked im2col, embedded directly on the
    # padded ypad grid (border rows are all-zero, so PReLU(conv1)=0 there = the zero padding).
    xb = x * p["bn1_scale"] + p["bn1_bias"]
    xp = jnp.pad(xb, ((0, 0), (1, 1), (1, 1), (0, 0)))
    cols = [xp[:, ky:ky + H, kx:kx + W, :] for ky in range(3) for kx in range(3)]
    lhs1 = jnp.concatenate(cols, axis=-1)                              # (N, H, W, 9*Cin)
    lhs1 = jnp.pad(lhs1, ((0, 0), (1, 1), (1, 1), (0, 0)))             # -> ypad grid
    lhs1 = lhs1.reshape(N, Hp2 * Wp2, 9 * Cin)
    lhs1 = jnp.pad(lhs1, ((0, 0), (0, R2 - Hp2 * Wp2), (0, 0))).astype(jnp.bfloat16)

    # Dense shortcut input: raw x on the (H, Wp2) grid (zero garbage cols), bf16.
    xs = jnp.pad(x, ((0, 0), (0, 0), (0, Wp2 - W), (0, 0))).reshape(N, Q2, Cin)
    xs = xs.astype(jnp.bfloat16)

    # SE pooling mask: exactly the ho*wo stride-s sample points of the dense grid.
    yy = jnp.arange(H)[:, None]
    xx = jnp.arange(Wp2)[None, :]
    mask2 = ((yy % s == 0) & (xx % s == 0) & (xx < W)).astype(jnp.float32).reshape(Q2, 1)

    kernel = _fused_block_kernel(Wp2, Q2, R2, depth, 1.0 / (ho * wo))
    out = pl.pallas_call(
        kernel,
        out_shape=jax.ShapeDtypeStruct((N, Q2, depth), jnp.float32),
        grid_spec=pltpu.PrefetchScalarGridSpec(
            num_scalar_prefetch=0,
            grid=(N,),
            in_specs=[
                pl.BlockSpec((1, R2, 9 * Cin), lambda n: (n, 0, 0)),
                pl.BlockSpec((9 * Cin, depth), lambda n: (0, 0)),
                pl.BlockSpec((1, depth), lambda n: (0, 0)),
                pl.BlockSpec((9, depth, depth), lambda n: (0, 0, 0)),
                pl.BlockSpec((1, depth), lambda n: (0, 0)),
                pl.BlockSpec((1, Q2, Cin), lambda n: (n, 0, 0)),
                pl.BlockSpec((Cin, depth), lambda n: (0, 0)),
                pl.BlockSpec((1, depth), lambda n: (0, 0)),
                pl.BlockSpec((depth, dr), lambda n: (0, 0)),
                pl.BlockSpec((dr, depth), lambda n: (0, 0)),
                pl.BlockSpec((Q2, 1), lambda n: (0, 0)),
            ],
            out_specs=pl.BlockSpec((1, Q2, depth), lambda n: (n, 0, 0)),
            scratch_shapes=[pltpu.VMEM((R2, depth), jnp.float32)],
        ),
        compiler_params=pltpu.CompilerParams(
            dimension_semantics=("parallel",)),
        cost_estimate=pl.CostEstimate(
            flops=int(2 * N * (R2 * 9 * Cin * depth
                               + Q2 * 9 * depth * depth
                               + Q2 * Cin * depth
                               + 2 * depth * dr)),
            transcendentals=int(N * depth),
            bytes_accessed=int(2 * N * (R2 * 9 * Cin + Q2 * Cin)
                               + 4 * N * Q2 * depth
                               + 2 * (9 * Cin * depth + 9 * depth * depth + Cin * depth))),
    )(lhs1, p["w1k"], p["alpha"], p["w2_taps"], p["bn2_bias"],
      xs, p["w_sc"], p["bnsc_bias"], p["w_fc1"], p["w_fc2"], mask2)

    # Drop garbage columns and subsample the stride-s grid; NHWC -> NCHW.
    out = out.reshape(N, H, Wp2, depth)[:, ::s, 0:W:s, :]
    return jnp.transpose(out, (0, 3, 1, 2))


# ----------------------------- parameters -----------------------------

def make_raw_params(key, in_c, depth, reduction=16):
    ks = jax.random.split(key, 8)

    def bn(k, c):
        k1, k2, k3, k4 = jax.random.split(k, 4)
        gamma = 1.0 + 0.1 * jax.random.normal(k1, (c,), jnp.float32)
        beta = 0.1 * jax.random.normal(k2, (c,), jnp.float32)
        mean = 0.1 * jax.random.normal(k3, (c,), jnp.float32)
        var = jnp.abs(jax.random.normal(k4, (c,), jnp.float32)) + 0.5
        scale = gamma / jnp.sqrt(var + 1e-5)                           # PyTorch eps default
        bias = beta - mean * scale
        return scale, bias

    w_conv1 = 0.1 * jax.random.normal(ks[0], (depth, in_c, 3, 3), jnp.float32)
    w_conv2 = 0.1 * jax.random.normal(ks[1], (depth, depth, 3, 3), jnp.float32)
    w_sc = 0.1 * jax.random.normal(ks[2], (depth, in_c, 1, 1), jnp.float32)
    w_fc1 = 0.1 * jax.random.normal(ks[3], (depth // reduction, depth, 1, 1), jnp.float32)
    w_fc2 = 0.1 * jax.random.normal(ks[4], (depth, depth // reduction, 1, 1), jnp.float32)
    bn1_s, bn1_b = bn(ks[5], in_c)
    bn2_s, bn2_b = bn(ks[6], depth)
    bnsc_s, bnsc_b = bn(ks[7], depth)
    alpha = jnp.full((depth,), 0.25, jnp.float32)                      # PReLU default init
    return dict(w_conv1=w_conv1, w_conv2=w_conv2, w_sc=w_sc, w_fc1=w_fc1, w_fc2=w_fc2,
                bn1_scale=bn1_s, bn1_bias=bn1_b, bn2_scale=bn2_s, bn2_bias=bn2_b,
                bnsc_scale=bnsc_s, bnsc_bias=bnsc_b, alpha=alpha)


def pack_params(rp):
    depth, in_c = rp["w_conv1"].shape[0], rp["w_conv1"].shape[1]
    # conv1: (ky,kx,Cin) K-stacked columns matching the wrapper im2col order.
    w1k = jnp.transpose(rp["w_conv1"], (2, 3, 1, 0)).reshape(9 * in_c, depth)
    # conv2: per-tap (Cin,Cout) with bn2 scale folded into the output columns (exact).
    w2t = jnp.transpose(rp["w_conv2"], (2, 3, 1, 0)) * rp["bn2_scale"].reshape(1, 1, 1, depth)
    w2t = w2t.reshape(9, depth, depth)
    # shortcut: 1x1 conv with bnsc scale folded.
    wsc = rp["w_sc"][:, :, 0, 0].T * rp["bnsc_scale"].reshape(1, depth)
    return dict(
        w1k=w1k.astype(jnp.bfloat16),
        w2_taps=w2t.astype(jnp.bfloat16),
        w_sc=wsc.astype(jnp.bfloat16),
        w_fc1=rp["w_fc1"][:, :, 0, 0].T.astype(jnp.float32),           # (depth, depth//r)
        w_fc2=rp["w_fc2"][:, :, 0, 0].T.astype(jnp.float32),           # (depth//r, depth)
        bn1_scale=rp["bn1_scale"], bn1_bias=rp["bn1_bias"],
        bn2_bias=rp["bn2_bias"].reshape(1, depth),
        bnsc_bias=rp["bnsc_bias"].reshape(1, depth),
        alpha=rp["alpha"].reshape(1, depth),
    )


# ----------------------------- pure-JAX reference -----------------------------

def reference_forward(x_nchw, rp, stride):
    x = jnp.transpose(x_nchw, (0, 2, 3, 1)).astype(jnp.float32)

    def conv(inp, w_oihw, s_, pad):
        w = jnp.transpose(w_oihw, (2, 3, 1, 0))                        # OIHW -> HWIO
        return lax.conv_general_dilated(inp, w, (s_, s_), ((pad, pad), (pad, pad)),
                                        dimension_numbers=("NHWC", "HWIO", "NHWC"))

    xb = x * rp["bn1_scale"] + rp["bn1_bias"]
    y = conv(xb, rp["w_conv1"], 1, 1)
    y = jnp.where(y > 0, y, y * rp["alpha"])
    y = conv(y, rp["w_conv2"], stride, 1)
    y = y * rp["bn2_scale"] + rp["bn2_bias"]
    pooled = jnp.mean(y, axis=(1, 2), keepdims=True)
    w1 = rp["w_fc1"][:, :, 0, 0]
    w2 = rp["w_fc2"][:, :, 0, 0]
    h = jnp.maximum(jnp.einsum("nhwc,dc->nhwd", pooled, w1), 0.0)
    gate = jax.nn.sigmoid(jnp.einsum("nhwd,cd->nhwc", h, w2))
    res = y * gate
    sc = conv(x, rp["w_sc"], stride, 0)
    sc = sc * rp["bnsc_scale"] + rp["bnsc_bias"]
    return jnp.transpose(res + sc, (0, 3, 1, 2))


# ----------------------------- main -----------------------------

if __name__ == "__main__":
    # bottleneck_IR_SE(in_channel=16, depth=32, stride=2, dropout=None), no att-block
    in_channel, depth, stride = 16, 32, 2
    N, H, W = 2, 16, 16

    key = jax.random.PRNGKey(0)
    kx_, kp_ = jax.random.split(key)
    x = jax.random.normal(kx_, (N, in_channel, H, W), jnp.float32)     # NCHW like PyTorch
    raw = make_raw_params(kp_, in_channel, depth)
    params = pack_params(raw)

    fwd = jax.jit(bottleneck_ir_se_forward, static_argnums=(2,))
    out = jax.block_until_ready(fwd(x, params, stride))
    ho, wo = (H - 1) // stride + 1, (W - 1) // stride + 1
    assert out.shape == (N, depth, ho, wo), out.shape

    ref = jax.block_until_ready(reference_forward(x, raw, stride))
    err = float(jnp.max(jnp.abs(out - ref)))
    # bf16 MXU operands with f32 accumulation: loosened tolerance vs the all-f32 version.
    assert jnp.allclose(out, ref, atol=1e-1, rtol=5e-2), err

    print("KERNEL_OK")
</pallas_src>

<mosaic_0001>
module attributes {stable_mosaic.version = 11 : i64} {
  func.func @kernel(%arg0: i32, %arg1: memref<1x328x144xbf16, #tpu.memory_space<vmem>>, %arg2: memref<144x32xbf16, #tpu.memory_space<vmem>>, %arg3: memref<1x32xf32, #tpu.memory_space<vmem>>, %arg4: memref<9x32x32xbf16, #tpu.memory_space<vmem>>, %arg5: memref<1x32xf32, #tpu.memory_space<vmem>>, %arg6: memref<1x288x16xbf16, #tpu.memory_space<vmem>>, %arg7: memref<16x32xbf16, #tpu.memory_space<vmem>>, %arg8: memref<1x32xf32, #tpu.memory_space<vmem>>, %arg9: memref<32x2xf32, #tpu.memory_space<vmem>>, %arg10: memref<2x32xf32, #tpu.memory_space<vmem>>, %arg11: memref<288x1xf32, #tpu.memory_space<vmem>>, %arg12: memref<1x288x32xf32, #tpu.memory_space<vmem>>, %arg13: memref<328x32xf32, #tpu.memory_space<vmem>>) attributes {dimension_semantics = [#tpu.dimension_semantics<parallel>], iteration_bounds = array<i64: 2>, scalar_prefetch = 0 : i64, scratch_operands = 1 : i64, tpu.core_type = #tpu.core_type<tc>, window_params = [{transform_indices = @transform_0, window_bounds = array<i64: 1, 328, 144>}, {pipeline_mode = #tpu.pipeline_mode<synchronous>, transform_indices = @transform_1, window_bounds = array<i64: 144, 32>}, {pipeline_mode = #tpu.pipeline_mode<synchronous>, transform_indices = @transform_2, window_bounds = array<i64: 1, 32>}, {pipeline_mode = #tpu.pipeline_mode<synchronous>, transform_indices = @transform_3, window_bounds = array<i64: 9, 32, 32>}, {pipeline_mode = #tpu.pipeline_mode<synchronous>, transform_indices = @transform_4, window_bounds = array<i64: 1, 32>}, {transform_indices = @transform_5, window_bounds = array<i64: 1, 288, 16>}, {pipeline_mode = #tpu.pipeline_mode<synchronous>, transform_indices = @transform_6, window_bounds = array<i64: 16, 32>}, {pipeline_mode = #tpu.pipeline_mode<synchronous>, transform_indices = @transform_7, window_bounds = array<i64: 1, 32>}, {pipeline_mode = #tpu.pipeline_mode<synchronous>, transform_indices = @transform_8, window_bounds = array<i64: 32, 2>}, {pipeline_mode = #tpu.pipeline_mode<synchronous>, transform_indices = @transform_9, window_bounds = array<i64: 2, 32>}, {pipeline_mode = #tpu.pipeline_mode<synchronous>, transform_indices = @transform_10, window_bounds = array<i64: 288, 1>}, {transform_indices = @transform_11, window_bounds = array<i64: 1, 288, 32>}]} {
    %c0 = arith.constant 0 : index
    %c0_0 = arith.constant 0 : index
    %c0_1 = arith.constant 0 : index
    %0 = vector.load %arg1[%c0, %c0_0, %c0_1] : memref<1x328x144xbf16, #tpu.memory_space<vmem>>, vector<1x328x144xbf16>
    %1 = vector.shape_cast %0 : vector<1x328x144xbf16> to vector<328x144xbf16>
    %c0_2 = arith.constant 0 : index
    %c0_3 = arith.constant 0 : index
    %2 = vector.load %arg2[%c0_2, %c0_3] : memref<144x32xbf16, #tpu.memory_space<vmem>>, vector<144x32xbf16>
    %cst = arith.constant dense<0.000000e+00> : vector<328x32xf32>
    %3 = tpu.matmul %1, %2, %cst {dimension_numbers = #tpu.dot_dimension_numbers<[1], [0], [0], [1], [0, 0, 1, 1], [], []>} : vector<328x144xbf16>, vector<144x32xbf16>, vector<328x32xf32> -> vector<328x32xf32>
    %c0_4 = arith.constant 0 : index
    %c0_5 = arith.constant 0 : index
    %4 = vector.load %arg3[%c0_4, %c0_5] : memref<1x32xf32, #tpu.memory_space<vmem>>, vector<1x32xf32>
    %cst_6 = arith.constant 0.000000e+00 : f32
    %5 = vector.broadcast %cst_6 : f32 to vector<328x32xf32>
    %6 = arith.cmpf ogt, %3, %5 : vector<328x32xf32>
    %7 = vector.broadcast %4 : vector<1x32xf32> to vector<328x32xf32>
    %8 = arith.mulf %3, %7 : vector<328x32xf32>
    %9 = arith.select %6, %3, %8 : vector<328x32xi1>, vector<328x32xf32>
    %c0_7 = arith.constant 0 : index
    %c0_8 = arith.constant 0 : index
    %10 = vector.load %arg13[%c0_7, %c0_8] : memref<328x32xf32, #tpu.memory_space<vmem>>, vector<328x32xf32>
    tpu.vector_store %arg13[%c0_7, %c0_8], %9 {strides = array<i32>} : memref<328x32xf32, #tpu.memory_space<vmem>>, vector<328x32xf32>,
    %cst_9 = arith.constant 0.000000e+00 : f32
    %11 = vector.broadcast %cst_9 : f32 to vector<288x32xf32>
    %c0_10 = arith.constant 0 : index
    %c0_11 = arith.constant 0 : index
    %12 = vector.load %arg13[%c0_10, %c0_11] : memref<328x32xf32, #tpu.memory_space<vmem>>, vector<288x32xf32>
    %13 = arith.truncf %12 : vector<288x32xf32> to vector<288x32xbf16>
    %c0_12 = arith.constant 0 : index
    %c0_13 = arith.constant 0 : index
    %c0_14 = arith.constant 0 : index
    %14 = vector.load %arg4[%c0_12, %c0_13, %c0_14] : memref<9x32x32xbf16, #tpu.memory_space<vmem>>, vector<1x32x32xbf16>
    %15 = vector.shape_cast %14 : vector<1x32x32xbf16> to vector<32x32xbf16>
    %cst_15 = arith.constant dense<0.000000e+00> : vector<288x32xf32>
    %16 = tpu.matmul %13, %15, %cst_15 {dimension_numbers = #tpu.dot_dimension_numbers<[1], [0], [0], [1], [0, 0, 1, 1], [], []>} : vector<288x32xbf16>, vector<32x32xbf16>, vector<288x32xf32> -> vector<288x32xf32>
    %17 = arith.addf %11, %16 : vector<288x32xf32>
    %c1 = arith.constant 1 : index
    %c0_16 = arith.constant 0 : index
    %18 = vector.load %arg13[%c1, %c0_16] : memref<328x32xf32, #tpu.memory_space<vmem>>, vector<288x32xf32>
    %19 = arith.truncf %18 : vector<288x32xf32> to vector<288x32xbf16>
    %c1_17 = arith.constant 1 : index
    %c0_18 = arith.constant 0 : index
    %c0_19 = arith.constant 0 : index
    %20 = vector.load %arg4[%c1_17, %c0_18, %c0_19] : memref<9x32x32xbf16, #tpu.memory_space<vmem>>, vector<1x32x32xbf16>
    %21 = vector.shape_cast %20 : vector<1x32x32xbf16> to vector<32x32xbf16>
    %cst_20 = arith.constant dense<0.000000e+00> : vector<288x32xf32>
    %22 = tpu.matmul %19, %21, %cst_20 {dimension_numbers = #tpu.dot_dimension_numbers<[1], [0], [0], [1], [0, 0, 1, 1], [], []>} : vector<288x32xbf16>, vector<32x32xbf16>, vector<288x32xf32> -> vector<288x32xf32>
    %23 = arith.addf %17, %22 : vector<288x32xf32>
    %c2 = arith.constant 2 : index
    %c0_21 = arith.constant 0 : index
    %24 = vector.load %arg13[%c2, %c0_21] : memref<328x32xf32, #tpu.memory_space<vmem>>, vector<288x32xf32>
    %25 = arith.truncf %24 : vector<288x32xf32> to vector<288x32xbf16>
    %c2_22 = arith.constant 2 : index
    %c0_23 = arith.constant 0 : index
    %c0_24 = arith.constant 0 : index
    %26 = vector.load %arg4[%c2_22, %c0_23, %c0_24] : memref<9x32x32xbf16, #tpu.memory_space<vmem>>, vector<1x32x32xbf16>
    %27 = vector.shape_cast %26 : vector<1x32x32xbf16> to vector<32x32xbf16>
    %cst_25 = arith.constant dense<0.000000e+00> : vector<288x32xf32>
    %28 = tpu.matmul %25, %27, %cst_25 {dimension_numbers = #tpu.dot_dimension_numbers<[1], [0], [0], [1], [0, 0, 1, 1], [], []>} : vector<288x32xbf16>, vector<32x32xbf16>, vector<288x32xf32> -> vector<288x32xf32>
    %29 = arith.addf %23, %28 : vector<288x32xf32>
    %c18 = arith.constant 18 : index
    %c0_26 = arith.constant 0 : index
    %30 = vector.load %arg13[%c18, %c0_26] : memref<328x32xf32, #tpu.memory_space<vmem>>, vector<288x32xf32>
    %31 = arith.truncf %30 : vector<288x32xf32> to vector<288x32xbf16>
    %c3 = arith.constant 3 : index
    %c0_27 = arith.constant 0 : index
    %c0_28 = arith.constant 0 : index
    %32 = vector.load %arg4[%c3, %c0_27, %c0_28] : memref<9x32x32xbf16, #tpu.memory_space<vmem>>, vector<1x32x32xbf16>
    %33 = vector.shape_cast %32 : vector<1x32x32xbf16> to vector<32x32xbf16>
    %cst_29 = arith.constant dense<0.000000e+00> : vector<288x32xf32>
    %34 = tpu.matmul %31, %33, %cst_29 {dimension_numbers = #tpu.dot_dimension_numbers<[1], [0], [0], [1], [0, 0, 1, 1], [], []>} : vector<288x32xbf16>, vector<32x32xbf16>, vector<288x32xf32> -> vector<288x32xf32>
    %35 = arith.addf %29, %34 : vector<288x32xf32>
    %c19 = arith.constant 19 : index
    %c0_30 = arith.constant 0 : index
    %36 = vector.load %arg13[%c19, %c0_30] : memref<328x32xf32, #tpu.memory_space<vmem>>, vector<288x32xf32>
    %37 = arith.truncf %36 : vector<288x32xf32> to vector<288x32xbf16>
    %c4 = arith.constant 4 : index
    %c0_31 = arith.constant 0 : index
    %c0_32 = arith.constant 0 : index
    %38 = vector.load %arg4[%c4, %c0_31, %c0_32] : memref<9x32x32xbf16, #tpu.memory_space<vmem>>, vector<1x32x32xbf16>
    %39 = vector.shape_cast %38 : vector<1x32x32xbf16> to vector<32x32xbf16>
    %cst_33 = arith.constant dense<0.000000e+00> : vector<288x32xf32>
    %40 = tpu.matmul %37, %39, %cst_33 {dimension_numbers = #tpu.dot_dimension_numbers<[1], [0], [0], [1], [0, 0, 1, 1], [], []>} : vector<288x32xbf16>, vector<32x32xbf16>, vector<288x32xf32> -> vector<288x32xf32>
    %41 = arith.addf %35, %40 : vector<288x32xf32>
    %c20 = arith.constant 20 : index
    %c0_34 = arith.constant 0 : index
    %42 = vector.load %arg13[%c20, %c0_34] : memref<328x32xf32, #tpu.memory_space<vmem>>, vector<288x32xf32>
    %43 = arith.truncf %42 : vector<288x32xf32> to vector<288x32xbf16>
    %c5 = arith.constant 5 : index
    %c0_35 = arith.constant 0 : index
    %c0_36 = arith.constant 0 : index
    %44 = vector.load %arg4[%c5, %c0_35, %c0_36] : memref<9x32x32xbf16, #tpu.memory_space<vmem>>, vector<1x32x32xbf16>
    %45 = vector.shape_cast %44 : vector<1x32x32xbf16> to vector<32x32xbf16>
    %cst_37 = arith.constant dense<0.000000e+00> : vector<288x32xf32>
    %46 = tpu.matmul %43, %45, %cst_37 {dimension_numbers = #tpu.dot_dimension_numbers<[1], [0], [0], [1], [0, 0, 1, 1], [], []>} : vector<288x32xbf16>, vector<32x32xbf16>, vector<288x32xf32> -> vector<288x32xf32>
    %47 = arith.addf %41, %46 : vector<288x32xf32>
    %c36 = arith.constant 36 : index
    %c0_38 = arith.constant 0 : index
    %48 = vector.load %arg13[%c36, %c0_38] : memref<328x32xf32, #tpu.memory_space<vmem>>, vector<288x32xf32>
    %49 = arith.truncf %48 : vector<288x32xf32> to vector<288x32xbf16>
    %c6 = arith.constant 6 : index
    %c0_39 = arith.constant 0 : index
    %c0_40 = arith.constant 0 : index
    %50 = vector.load %arg4[%c6, %c0_39, %c0_40] : memref<9x32x32xbf16, #tpu.memory_space<vmem>>, vector<1x32x32xbf16>
    %51 = vector.shape_cast %50 : vector<1x32x32xbf16> to vector<32x32xbf16>
    %cst_41 = arith.constant dense<0.000000e+00> : vector<288x32xf32>
    %52 = tpu.matmul %49, %51, %cst_41 {dimension_numbers = #tpu.dot_dimension_numbers<[1], [0], [0], [1], [0, 0, 1, 1], [], []>} : vector<288x32xbf16>, vector<32x32xbf16>, vector<288x32xf32> -> vector<288x32xf32>
    %53 = arith.addf %47, %52 : vector<288x32xf32>
    %c37 = arith.constant 37 : index
    %c0_42 = arith.constant 0 : index
    %54 = vector.load %arg13[%c37, %c0_42] : memref<328x32xf32, #tpu.memory_space<vmem>>, vector<288x32xf32>
    %55 = arith.truncf %54 : vector<288x32xf32> to vector<288x32xbf16>
    %c7 = arith.constant 7 : index
    %c0_43 = arith.constant 0 : index
    %c0_44 = arith.constant 0 : index
    %56 = vector.load %arg4[%c7, %c0_43, %c0_44] : memref<9x32x32xbf16, #tpu.memory_space<vmem>>, vector<1x32x32xbf16>
    %57 = vector.shape_cast %56 : vector<1x32x32xbf16> to vector<32x32xbf16>
    %cst_45 = arith.constant dense<0.000000e+00> : vector<288x32xf32>
    %58 = tpu.matmul %55, %57, %cst_45 {dimension_numbers = #tpu.dot_dimension_numbers<[1], [0], [0], [1], [0, 0, 1, 1], [], []>} : vector<288x32xbf16>, vector<32x32xbf16>, vector<288x32xf32> -> vector<288x32xf32>
    %59 = arith.addf %53, %58 : vector<288x32xf32>
    %c38 = arith.constant 38 : index
    %c0_46 = arith.constant 0 : index
    %60 = vector.load %arg13[%c38, %c0_46] : memref<328x32xf32, #tpu.memory_space<vmem>>, vector<288x32xf32>
    %61 = arith.truncf %60 : vector<288x32xf32> to vector<288x32xbf16>
    %c8 = arith.constant 8 : index
    %c0_47 = arith.constant 0 : index
    %c0_48 = arith.constant 0 : index
    %62 = vector.load %arg4[%c8, %c0_47, %c0_48] : memref<9x32x32xbf16, #tpu.memory_space<vmem>>, vector<1x32x32xbf16>
    %63 = vector.shape_cast %62 : vector<1x32x32xbf16> to vector<32x32xbf16>
    %cst_49 = arith.constant dense<0.000000e+00> : vector<288x32xf32>
    %64 = tpu.matmul %61, %63, %cst_49 {dimension_numbers = #tpu.dot_dimension_numbers<[1], [0], [0], [1], [0, 0, 1, 1], [], []>} : vector<288x32xbf16>, vector<32x32xbf16>, vector<288x32xf32> -> vector<288x32xf32>
    %65 = arith.addf %59, %64 : vector<288x32xf32>
    %c0_50 = arith.constant 0 : index
    %c0_51 = arith.constant 0 : index
    %66 = vector.load %arg5[%c0_50, %c0_51] : memref<1x32xf32, #tpu.memory_space<vmem>>, vector<1x32xf32>
    %67 = vector.broadcast %66 : vector<1x32xf32> to vector<288x32xf32>
    %68 = arith.addf %65, %67 : vector<288x32xf32>
    %c0_52 = arith.constant 0 : index
    %c0_53 = arith.constant 0 : index
    %69 = vector.load %arg11[%c0_52, %c0_53] : memref<288x1xf32, #tpu.memory_space<vmem>>, vector<288x1xf32>
    %70 = vector.broadcast %69 : vector<288x1xf32> to vector<288x32xf32>
    %71 = arith.mulf %68, %70 : vector<288x32xf32>
    %cst_54 = arith.constant dense<0.000000e+00> : vector<32xf32>
    %72 = vector.multi_reduction <add>, %71, %cst_54 [0] : vector<288x32xf32> to vector<32xf32>
    %73 = vector.shape_cast %72 : vector<32xf32> to vector<1x32xf32>
    %cst_55 = arith.constant 1.562500e-02 : f32
    %74 = vector.broadcast %cst_55 : f32 to vector<1x32xf32>
    %75 = arith.mulf %73, %74 : vector<1x32xf32>
    %c0_56 = arith.constant 0 : index
    %c0_57 = arith.constant 0 : index
    %76 = vector.load %arg9[%c0_56, %c0_57] : memref<32x2xf32, #tpu.memory_space<vmem>>, vector<32x2xf32>
    %cst_58 = arith.constant dense<0.000000e+00> : vector<1x2xf32>
    %77 = tpu.matmul %75, %76, %cst_58 {dimension_numbers = #tpu.dot_dimension_numbers<[1], [0], [0], [1], [0, 0, 1, 1], [], []>} : vector<1x32xf32>, vector<32x2xf32>, vector<1x2xf32> -> vector<1x2xf32>
    %cst_59 = arith.constant 0.000000e+00 : f32
    %78 = vector.broadcast %cst_59 : f32 to vector<1x2xf32>
    %79 = arith.maximumf %77, %78 : vector<1x2xf32>
    %c0_60 = arith.constant 0 : index
    %c0_61 = arith.constant 0 : index
    %80 = vector.load %arg10[%c0_60, %c0_61] : memref<2x32xf32, #tpu.memory_space<vmem>>, vector<2x32xf32>
    %cst_62 = arith.constant dense<0.000000e+00> : vector<1x32xf32>
    %81 = tpu.matmul %79, %80, %cst_62 {dimension_numbers = #tpu.dot_dimension_numbers<[1], [0], [0], [1], [0, 0, 1, 1], [], []>} : vector<1x2xf32>, vector<2x32xf32>, vector<1x32xf32> -> vector<1x32xf32>
    %82 = arith.negf %81 : vector<1x32xf32>
    %83 = math.exp %82 : vector<1x32xf32>
    %cst_63 = arith.constant 1.000000e+00 : f32
    %84 = vector.broadcast %cst_63 : f32 to vector<1x32xf32>
    %85 = arith.addf %84, %83 : vector<1x32xf32>
    %86 = arith.divf %84, %85 : vector<1x32xf32>
    %c0_64 = arith.constant 0 : index
    %c0_65 = arith.constant 0 : index
    %c0_66 = arith.constant 0 : index
    %87 = vector.load %arg6[%c0_64, %c0_65, %c0_66] : memref<1x288x16xbf16, #tpu.memory_space<vmem>>, vector<1x288x16xbf16>
    %88 = vector.shape_cast %87 : vector<1x288x16xbf16> to vector<288x16xbf16>
    %c0_67 = arith.constant 0 : index
    %c0_68 = arith.constant 0 : index
    %89 = vector.load %arg7[%c0_67, %c0_68] : memref<16x32xbf16, #tpu.memory_space<vmem>>, vector<16x32xbf16>
    %cst_69 = arith.constant dense<0.000000e+00> : vector<288x32xf32>
    %90 = tpu.matmul %88, %89, %cst_69 {dimension_numbers = #tpu.dot_dimension_numbers<[1], [0], [0], [1], [0, 0, 1, 1], [], []>} : vector<288x16xbf16>, vector<16x32xbf16>, vector<288x32xf32> -> vector<288x32xf32>
    %c0_70 = arith.constant 0 : index
    %c0_71 = arith.constant 0 : index
    %91 = vector.load %arg8[%c0_70, %c0_71] : memref<1x32xf32, #tpu.memory_space<vmem>>, vector<1x32xf32>
    %92 = vector.broadcast %91 : vector<1x32xf32> to vector<288x32xf32>
    %93 = arith.addf %90, %92 : vector<288x32xf32>
    %94 = vector.broadcast %86 : vector<1x32xf32> to vector<288x32xf32>
    %95 = arith.mulf %68, %94 : vector<288x32xf32>
    %96 = arith.addf %95, %93 : vector<288x32xf32>
    %c0_72 = arith.constant 0 : index
    %c0_73 = arith.constant 0 : index
    %c0_74 = arith.constant 0 : index
    %97 = vector.load %arg12[%c0_72, %c0_73, %c0_74] : memref<1x288x32xf32, #tpu.memory_space<vmem>>, vector<1x288x32xf32>
    %98 = vector.shape_cast %97 : vector<1x288x32xf32> to vector<288x32xf32>
    %99 = vector.shape_cast %96 : vector<288x32xf32> to vector<1x288x32xf32>
    tpu.vector_store %arg12[%c0_72, %c0_73, %c0_74], %99 {strides = array<i32>} : memref<1x288x32xf32, #tpu.memory_space<vmem>>, vector<1x288x32xf32>,
    return
  }
  func.func @transform_0(%arg0: i32) -> (i32, i32, i32) {
    %c0_i32 = arith.constant 0 : i32
    %c0_i32_0 = arith.constant 0 : i32
    %c0_i32_1 = arith.constant 0 : i32
    return %arg0, %c0_i32, %c0_i32_0 : i32, i32, i32
  }
  func.func @transform_1(%arg0: i32) -> (i32, i32) {
    %c0_i32 = arith.constant 0 : i32
    %c0_i32_0 = arith.constant 0 : i32
    %c0_i32_1 = arith.constant 0 : i32
    return %c0_i32, %c0_i32_0 : i32, i32
  }
  func.func @transform_2(%arg0: i32) -> (i32, i32) {
    %c0_i32 = arith.constant 0 : i32
    %c0_i32_0 = arith.constant 0 : i32
    %c0_i32_1 = arith.constant 0 : i32
    return %c0_i32, %c0_i32_0 : i32, i32
  }
  func.func @transform_3(%arg0: i32) -> (i32, i32, i32) {
    %c0_i32 = arith.constant 0 : i32
    %c0_i32_0 = arith.constant 0 : i32
    %c0_i32_1 = arith.constant 0 : i32
    %c0_i32_2 = arith.constant 0 : i32
    return %c0_i32, %c0_i32_0, %c0_i32_1 : i32, i32, i32
  }
  func.func @transform_4(%arg0: i32) -> (i32, i32) {
    %c0_i32 = arith.constant 0 : i32
    %c0_i32_0 = arith.constant 0 : i32
    %c0_i32_1 = arith.constant 0 : i32
    return %c0_i32, %c0_i32_0 : i32, i32
  }
  func.func @transform_5(%arg0: i32) -> (i32, i32, i32) {
    %c0_i32 = arith.constant 0 : i32
    %c0_i32_0 = arith.constant 0 : i32
    %c0_i32_1 = arith.constant 0 : i32
    return %arg0, %c0_i32, %c0_i32_0 : i32, i32, i32
  }
  func.func @transform_6(%arg0: i32) -> (i32, i32) {
    %c0_i32 = arith.constant 0 : i32
    %c0_i32_0 = arith.constant 0 : i32
    %c0_i32_1 = arith.constant 0 : i32
    return %c0_i32, %c0_i32_0 : i32, i32
  }
  func.func @transform_7(%arg0: i32) -> (i32, i32) {
    %c0_i32 = arith.constant 0 : i32
    %c0_i32_0 = arith.constant 0 : i32
    %c0_i32_1 = arith.constant 0 : i32
    return %c0_i32, %c0_i32_0 : i32, i32
  }
  func.func @transform_8(%arg0: i32) -> (i32, i32) {
    %c0_i32 = arith.constant 0 : i32
    %c0_i32_0 = arith.constant 0 : i32
    %c0_i32_1 = arith.constant 0 : i32
    return %c0_i32, %c0_i32_0 : i32, i32
  }
  func.func @transform_9(%arg0: i32) -> (i32, i32) {
    %c0_i32 = arith.constant 0 : i32
    %c0_i32_0 = arith.constant 0 : i32
    %c0_i32_1 = arith.constant 0 : i32
    return %c0_i32, %c0_i32_0 : i32, i32
  }
  func.func @transform_10(%arg0: i32) -> (i32, i32) {
    %c0_i32 = arith.constant 0 : i32
    %c0_i32_0 = arith.constant 0 : i32
    %c0_i32_1 = arith.constant 0 : i32
    return %c0_i32, %c0_i32_0 : i32, i32
  }
  func.func @transform_11(%arg0: i32) -> (i32, i32, i32) {
    %c0_i32 = arith.constant 0 : i32
    %c0_i32_0 = arith.constant 0 : i32
    %c0_i32_1 = arith.constant 0 : i32
    return %arg0, %c0_i32, %c0_i32_0 : i32, i32, i32
  }
}

</mosaic_0001>

<llo_original>
// kernel: bottleneck_ir_se_forward.1
$region0: #{bottleneck_ir_se_forward.1}
  #allocation0 [shape = 'u32[]', space=smem, size = 0x4, offset = 0x4, fixed_abs, tag = 'smem constant byte address 0x4 - core index']
  #allocation1 [shape = 'u32[144,128]{1,0:T(1,128)}', space=vmem, size = 0x12000, scoped, tag = 'internal scratch']
  #allocation2 [shape = 'f32[328,32]{1,0:T(8,128)}', space=vmem, size = 0x29000, scoped, tag = 'scratch operand']
  %s0 = inlined_call_operand.vmem [shape: bf16[2,328,144], index: 0, kind: input, shape index: {}]
  %s1 = inlined_call_operand.vmem [shape: bf16[144,32], index: 1, kind: input, shape index: {}]
  %s2 = inlined_call_operand.vmem [shape: f32[1,32], index: 2, kind: input, shape index: {}]
  %s3 = inlined_call_operand.vmem [shape: bf16[9,32,32], index: 3, kind: input, shape index: {}]
  %s4 = inlined_call_operand.vmem [shape: f32[1,32], index: 4, kind: input, shape index: {}]
  %s5 = inlined_call_operand.vmem [shape: bf16[2,288,16], index: 5, kind: input, shape index: {}]
  %s6 = inlined_call_operand.vmem [shape: bf16[16,32], index: 6, kind: input, shape index: {}]
  %s7 = inlined_call_operand.vmem [shape: f32[1,32], index: 7, kind: input, shape index: {}]
  %s8 = inlined_call_operand.vmem [shape: f32[32,2], index: 8, kind: input, shape index: {}]
  %s9 = inlined_call_operand.vmem [shape: f32[2,32], index: 9, kind: input, shape index: {}]
  %s10 = inlined_call_operand.vmem [shape: f32[288,1], index: 10, kind: input, shape index: {}]
  %s11 = inlined_call_operand.vmem [shape: f32[2,288,32], index: 11, kind: output, shape index: {}]
  %s12 = sld [smem:[#allocation0]]
  $region77: #{bottleneck_ir_se_forward.1} parent=0
    _
  %s14 = ssub.s32 1, %s12
  %s15 = scalar_select 0, %s14, %s12
  loop: start=0, step=1, limit=4
  $region2: #{bottleneck_ir_se_forward.1} parent=0 // loop_pre_header
    _
  $region3: #{bottleneck_ir_se_forward.1} parent=0 // loop_header
    %s17 = sphi 0, %s21
    %p18 = scmp.ge.s32.totalorder %s17, 4
    %s27 = sphi 0, %s29
    %s30 = sphi 0, %s27
    %s31 = sphi 0, %s30
    %s47 = sphi 0, %s31
    %s51 = sphi 0, %s51
    %s53 = sphi 0, %s51
    %s54 = sphi 0, %s53
    %s68 = sphi 0, %s54
    %s72 = sphi 0, %s72
    %s74 = sphi 0, %s72
    %s75 = sphi 0, %s74
    %s89 = sphi 0, %s75
    %s93 = sphi 0, %s93
    %s95 = sphi 0, %s93
    %s96 = sphi 0, %s95
    %s110 = sphi 0, %s96
    %s114 = sphi 0, %s114
    %s116 = sphi 0, %s114
    %s117 = sphi 0, %s116
    %s131 = sphi 0, %s117
    %s137 = sphi 0, %s139
    %s140 = sphi 0, %s137
    %s141 = sphi 0, %s140
    %s157 = sphi 0, %s141
    %s161 = sphi 0, %s161
    %s163 = sphi 0, %s161
    %s164 = sphi 0, %s163
    %s178 = sphi 0, %s164
    %s182 = sphi 0, %s182
    %s184 = sphi 0, %s182
    %s185 = sphi 0, %s184
    %s199 = sphi 0, %s185
    %s203 = sphi 0, %s203
    %s205 = sphi 0, %s203
    %s206 = sphi 0, %s205
    %s220 = sphi 0, %s206
    %s224 = sphi 0, %s224
    %s226 = sphi 0, %s224
    %s227 = sphi 0, %s226
    %s241 = sphi 0, %s227
    %s245 = sphi 0, %s245
    %s247 = sphi 0, %s245
    %s248 = sphi 0, %s247
    %s262 = sphi 0, %s248
    %s268 = sphi 0, %s270
    %s271 = sphi 0, %s268
    %s272 = sphi 0, %s271
    %s288 = sphi 0, %s272
  $region4: #{bottleneck_ir_se_forward.1} parent=0 // loop_header_branch
    %20 = sbr.rel (%p18) target = $region8
  $region5: #{bottleneck_ir_se_forward.1} parent=0 // loop_body
    %s22 = ssub.s32 %s17, 1
    %s23 = ssub.s32 %s17, 2
    %s24 = sadd.s32 %s17, 1
    %s25 = ssub.s32 %s17, %s24
    %p26 = scmp.eq.s32.totalorder %s25, 0
    %s28 = sadd.s32 %s27, 1
    %s29 = scalar_select %p26, %s27, %s28
    %p32 = pneg %p26
    %p33 = scmp.eq.s32.totalorder %s17, 1
    %p34 = por %p32, %p33
    %p35 = scmp.ne.s32.totalorder %s27, %s30
    %p36 = scmp.eq.s32.totalorder %s17, 0
    %p37 = por %p35, %p36
    %p38 = scmp.ne.s32.totalorder %s27, %s30
    %p39 = scmp.eq.s32.totalorder %s22, 1
    %p40 = por %p38, %p39
    %p41 = scmp.ne.s32.totalorder %s30, %s31
    %p42 = scmp.eq.s32.totalorder %s22, 0
    %p43 = por %p41, %p42
    %p44 = scmp.ne.s32.totalorder %s30, %s31
    %p45 = scmp.eq.s32.totalorder %s23, 1
    %p46 = por %p44, %p45
    %p48 = scmp.ne.s32.totalorder %s31, %s47
    %p49 = scmp.eq.s32.totalorder %s23, 0
    %p50 = por %p48, %p49
    %s52 = sadd.s32 %s51, 1
    %p55 = scmp.eq.s32.totalorder %s17, 1
    %p56 = scmp.ne.s32.totalorder %s51, %s53
    %p57 = scmp.eq.s32.totalorder %s17, 0
    %p58 = por %p56, %p57
    %p59 = scmp.ne.s32.totalorder %s51, %s53
    %p60 = scmp.eq.s32.totalorder %s22, 1
    %p61 = por %p59, %p60
    %p62 = scmp.ne.s32.totalorder %s53, %s54
    %p63 = scmp.eq.s32.totalorder %s22, 0
    %p64 = por %p62, %p63
    %p65 = scmp.ne.s32.totalorder %s53, %s54
    %p66 = scmp.eq.s32.totalorder %s23, 1
    %p67 = por %p65, %p66
    %p69 = scmp.ne.s32.totalorder %s54, %s68
    %p70 = scmp.eq.s32.totalorder %s23, 0
    %p71 = por %p69, %p70
    %s73 = sadd.s32 %s72, 1
    %p76 = scmp.eq.s32.totalorder %s17, 1
    %p77 = scmp.ne.s32.totalorder %s72, %s74
    %p78 = scmp.eq.s32.totalorder %s17, 0
    %p79 = por %p77, %p78
    %p80 = scmp.ne.s32.totalorder %s72, %s74
    %p81 = scmp.eq.s32.totalorder %s22, 1
    %p82 = por %p80, %p81
    %p83 = scmp.ne.s32.totalorder %s74, %s75
    %p84 = scmp.eq.s32.totalorder %s22, 0
    %p85 = por %p83, %p84
    %p86 = scmp.ne.s32.totalorder %s74, %s75
    %p87 = scmp.eq.s32.totalorder %s23, 1
    %p88 = por %p86, %p87
    %p90 = scmp.ne.s32.totalorder %s75, %s89
    %p91 = scmp.eq.s32.totalorder %s23, 0
    %p92 = por %p90, %p91
    %s94 = sadd.s32 %s93, 1
    %p97 = scmp.eq.s32.totalorder %s17, 1
    %p98 = scmp.ne.s32.totalorder %s93, %s95
    %p99 = scmp.eq.s32.totalorder %s17, 0
    %p100 = por %p98, %p99
    %p101 = scmp.ne.s32.totalorder %s93, %s95
    %p102 = scmp.eq.s32.totalorder %s22, 1
    %p103 = por %p101, %p102
    %p104 = scmp.ne.s32.totalorder %s95, %s96
    %p105 = scmp.eq.s32.totalorder %s22, 0
    %p106 = por %p104, %p105
    %p107 = scmp.ne.s32.totalorder %s95, %s96
    %p108 = scmp.eq.s32.totalorder %s23, 1
    %p109 = por %p107, %p108
    %p111 = scmp.ne.s32.totalorder %s96, %s110
    %p112 = scmp.eq.s32.totalorder %s23, 0
    %p113 = por %p111, %p112
    %s115 = sadd.s32 %s114, 1
    %p118 = scmp.eq.s32.totalorder %s17, 1
    %p119 = scmp.ne.s32.totalorder %s114, %s116
    %p120 = scmp.eq.s32.totalorder %s17, 0
    %p121 = por %p119, %p120
    %p122 = scmp.ne.s32.totalorder %s114, %s116
    %p123 = scmp.eq.s32.totalorder %s22, 1
    %p124 = por %p122, %p123
    %p125 = scmp.ne.s32.totalorder %s116, %s117
    %p126 = scmp.eq.s32.totalorder %s22, 0
    %p127 = por %p125, %p126
    %p128 = scmp.ne.s32.totalorder %s116, %s117
    %p129 = scmp.eq.s32.totalorder %s23, 1
    %p130 = por %p128, %p129
    %p132 = scmp.ne.s32.totalorder %s117, %s131
    %p133 = scmp.eq.s32.totalorder %s23, 0
    %p134 = por %p132, %p133
    %s135 = ssub.s32 %s17, %s24
    %p136 = scmp.eq.s32.totalorder %s135, 0
    %s138 = sadd.s32 %s137, 1
    %s139 = scalar_select %p136, %s137, %s138
    %p142 = pneg %p136
    %p143 = scmp.eq.s32.totalorder %s17, 1
    %p144 = por %p142, %p143
    %p145 = scmp.ne.s32.totalorder %s137, %s140
    %p146 = scmp.eq.s32.totalorder %s17, 0
    %p147 = por %p145, %p146
    %p148 = scmp.ne.s32.totalorder %s137, %s140
    %p149 = scmp.eq.s32.totalorder %s22, 1
    %p150 = por %p148, %p149
    %p151 = scmp.ne.s32.totalorder %s140, %s141
    %p152 = scmp.eq.s32.totalorder %s22, 0
    %p153 = por %p151, %p152
    %p154 = scmp.ne.s32.totalorder %s140, %s141
    %p155 = scmp.eq.s32.totalorder %s23, 1
    %p156 = por %p154, %p155
    %p158 = scmp.ne.s32.totalorder %s141, %s157
    %p159 = scmp.eq.s32.totalorder %s23, 0
    %p160 = por %p158, %p159
    %s162 = sadd.s32 %s161, 1
    %p165 = scmp.eq.s32.totalorder %s17, 1
    %p166 = scmp.ne.s32.totalorder %s161, %s163
    %p167 = scmp.eq.s32.totalorder %s17, 0
    %p168 = por %p166, %p167
    %p169 = scmp.ne.s32.totalorder %s161, %s163
    %p170 = scmp.eq.s32.totalorder %s22, 1
    %p171 = por %p169, %p170
    %p172 = scmp.ne.s32.totalorder %s163, %s164
    %p173 = scmp.eq.s32.totalorder %s22, 0
    %p174 = por %p172, %p173
    %p175 = scmp.ne.s32.totalorder %s163, %s164
    %p176 = scmp.eq.s32.totalorder %s23, 1
    %p177 = por %p175, %p176
    %p179 = scmp.ne.s32.totalorder %s164, %s178
    %p180 = scmp.eq.s32.totalorder %s23, 0
    %p181 = por %p179, %p180
    %s183 = sadd.s32 %s182, 1
    %p186 = scmp.eq.s32.totalorder %s17, 1
    %p187 = scmp.ne.s32.totalorder %s182, %s184
    %p188 = scmp.eq.s32.totalorder %s17, 0
    %p189 = por %p187, %p188
    %p190 = scmp.ne.s32.totalorder %s182, %s184
    %p191 = scmp.eq.s32.totalorder %s22, 1
    %p192 = por %p190, %p191
    %p193 = scmp.ne.s32.totalorder %s184, %s185
    %p194 = scmp.eq.s32.totalorder %s22, 0
    %p195 = por %p193, %p194
    %p196 = scmp.ne.s32.totalorder %s184, %s185
    %p197 = scmp.eq.s32.totalorder %s23, 1
    %p198 = por %p196, %p197
    %p200 = scmp.ne.s32.totalorder %s185, %s199
    %p201 = scmp.eq.s32.totalorder %s23, 0
    %p202 = por %p200, %p201
    %s204 = sadd.s32 %s203, 1
    %p207 = scmp.eq.s32.totalorder %s17, 1
    %p208 = scmp.ne.s32.totalorder %s203, %s205
    %p209 = scmp.eq.s32.totalorder %s17, 0
    %p210 = por %p208, %p209
    %p211 = scmp.ne.s32.totalorder %s203, %s205
    %p212 = scmp.eq.s32.totalorder %s22, 1
    %p213 = por %p211, %p212
    %p214 = scmp.ne.s32.totalorder %s205, %s206
    %p215 = scmp.eq.s32.totalorder %s22, 0
    %p216 = por %p214, %p215
    %p217 = scmp.ne.s32.totalorder %s205, %s206
    %p218 = scmp.eq.s32.totalorder %s23, 1
    %p219 = por %p217, %p218
    %p221 = scmp.ne.s32.totalorder %s206, %s220
    %p222 = scmp.eq.s32.totalorder %s23, 0
    %p223 = por %p221, %p222
    %s225 = sadd.s32 %s224, 1
    %p228 = scmp.eq.s32.totalorder %s17, 1
    %p229 = scmp.ne.s32.totalorder %s224, %s226
    %p230 = scmp.eq.s32.totalorder %s17, 0
    %p231 = por %p229, %p230
    %p232 = scmp.ne.s32.totalorder %s224, %s226
    %p233 = scmp.eq.s32.totalorder %s22, 1
    %p234 = por %p232, %p233
    %p235 = scmp.ne.s32.totalorder %s226, %s227
    %p236 = scmp.eq.s32.totalorder %s22, 0
    %p237 = por %p235, %p236
    %p238 = scmp.ne.s32.totalorder %s226, %s227
    %p239 = scmp.eq.s32.totalorder %s23, 1
    %p240 = por %p238, %p239
    %p242 = scmp.ne.s32.totalorder %s227, %s241
    %p243 = scmp.eq.s32.totalorder %s23, 0
    %p244 = por %p242, %p243
    %s246 = sadd.s32 %s245, 1
    %p249 = scmp.eq.s32.totalorder %s17, 1
    %p250 = scmp.ne.s32.totalorder %s245, %s247
    %p251 = scmp.eq.s32.totalorder %s17, 0
    %p252 = por %p250, %p251
    %p253 = scmp.ne.s32.totalorder %s245, %s247
    %p254 = scmp.eq.s32.totalorder %s22, 1
    %p255 = por %p253, %p254
    %p256 = scmp.ne.s32.totalorder %s247, %s248
    %p257 = scmp.eq.s32.totalorder %s22, 0
    %p258 = por %p256, %p257
    %p259 = scmp.ne.s32.totalorder %s247, %s248
    %p260 = scmp.eq.s32.totalorder %s23, 1
    %p261 = por %p259, %p260
    %p263 = scmp.ne.s32.totalorder %s248, %s262
    %p264 = scmp.eq.s32.totalorder %s23, 0
    %p265 = por %p263, %p264
    %s266 = ssub.s32 %s17, %s24
    %p267 = scmp.eq.s32.totalorder %s266, 0
    %s269 = sadd.s32 %s268, 1
    %s270 = scalar_select %p267, %s268, %s269
    %p273 = pneg %p267
    %p274 = scmp.eq.s32.totalorder %s17, 1
    %p275 = por %p273, %p274
    %p276 = scmp.ne.s32.totalorder %s268, %s271
    %p277 = scmp.eq.s32.totalorder %s17, 0
    %p278 = por %p276, %p277
    %p279 = scmp.ne.s32.totalorder %s268, %s271
    %p280 = scmp.eq.s32.totalorder %s22, 1
    %p281 = por %p279, %p280
    %p282 = scmp.ne.s32.totalorder %s271, %s272
    %p283 = scmp.eq.s32.totalorder %s22, 0
    %p284 = por %p282, %p283
    %p285 = scmp.ne.s32.totalorder %s271, %s272
    %p286 = scmp.eq.s32.totalorder %s23, 1
    %p287 = por %p285, %p286
    %p289 = scmp.ne.s32.totalorder %s272, %s288
    %p290 = scmp.eq.s32.totalorder %s23, 0
    %p291 = por %p289, %p290
    %p292 = scmp.le.s32.totalorder 1, %s17
    %p293 = scmp.lt.s32.totalorder %s17, 3
    %p294 = pnand %p292, %p293
    %p295 = pneg %p294
    // Predicated region
    $region9: #{bottleneck_ir_se_forward.1} parent=5 // pred_check
      _
    $region10: #{bottleneck_ir_se_forward.1} parent=5 // pred_check_branch
      %297 = sbr.rel (%p294) target = $region12
    $region11: #{bottleneck_ir_se_forward.1} parent=5 // pred_region
      %s298 = ssub.s32 %s17, 1
      // Predicated region
      $region13: #{bottleneck_ir_se_forward.1} parent=11 // pred_check
        %p299 = pneg %p64
      $region14: #{bottleneck_ir_se_forward.1} parent=11 // pred_check_branch
        %301 = sbr.rel (%p299) target = $region16
      $region15: #{bottleneck_ir_se_forward.1} parent=11 // pred_region
        _
      $region16: #{bottleneck_ir_se_forward.1} parent=11 // pred_fallthru
        _
      // Predicated region
      $region17: #{bottleneck_ir_se_forward.1} parent=11 // pred_check
        %p302 = pneg %p85
      $region18: #{bottleneck_ir_se_forward.1} parent=11 // pred_check_branch
        %304 = sbr.rel (%p302) target = $region20
      $region19: #{bottleneck_ir_se_forward.1} parent=11 // pred_region
        _
      $region20: #{bottleneck_ir_se_forward.1} parent=11 // pred_fallthru
        _
      // Predicated region
      $region21: #{bottleneck_ir_se_forward.1} parent=11 // pred_check
        %p305 = pneg %p106
      $region22: #{bottleneck_ir_se_forward.1} parent=11 // pred_check_branch
        %307 = sbr.rel (%p305) target = $region24
      $region23: #{bottleneck_ir_se_forward.1} parent=11 // pred_region
        _
      $region24: #{bottleneck_ir_se_forward.1} parent=11 // pred_fallthru
        _
      // Predicated region
      $region25: #{bottleneck_ir_se_forward.1} parent=11 // pred_check
        %p308 = pneg %p127
      $region26: #{bottleneck_ir_se_forward.1} parent=11 // pred_check_branch
        %310 = sbr.rel (%p308) target = $region28
      $region27: #{bottleneck_ir_se_forward.1} parent=11 // pred_region
        _
      $region28: #{bottleneck_ir_se_forward.1} parent=11 // pred_fallthru
        _
      // Predicated region
      $region29: #{bottleneck_ir_se_forward.1} parent=11 // pred_check
        %p311 = pneg %p174
      $region30: #{bottleneck_ir_se_forward.1} parent=11 // pred_check_branch
        %313 = sbr.rel (%p311) target = $region32
      $region31: #{bottleneck_ir_se_forward.1} parent=11 // pred_region
        _
      $region32: #{bottleneck_ir_se_forward.1} parent=11 // pred_fallthru
        _
      // Predicated region
      $region33: #{bottleneck_ir_se_forward.1} parent=11 // pred_check
        %p314 = pneg %p195
      $region34: #{bottleneck_ir_se_forward.1} parent=11 // pred_check_branch
        %316 = sbr.rel (%p314) target = $region36
      $region35: #{bottleneck_ir_se_forward.1} parent=11 // pred_region
        _
      $region36: #{bottleneck_ir_se_forward.1} parent=11 // pred_fallthru
        _
      // Predicated region
      $region37: #{bottleneck_ir_se_forward.1} parent=11 // pred_check
        %p317 = pneg %p216
      $region38: #{bottleneck_ir_se_forward.1} parent=11 // pred_check_branch
        %319 = sbr.rel (%p317) target = $region40
      $region39: #{bottleneck_ir_se_forward.1} parent=11 // pred_region
        _
      $region40: #{bottleneck_ir_se_forward.1} parent=11 // pred_fallthru
        _
      // Predicated region
      $region41: #{bottleneck_ir_se_forward.1} parent=11 // pred_check
        %p320 = pneg %p237
      $region42: #{bottleneck_ir_se_forward.1} parent=11 // pred_check_branch
        %322 = sbr.rel (%p320) target = $region44
      $region43: #{bottleneck_ir_se_forward.1} parent=11 // pred_region
        _
      $region44: #{bottleneck_ir_se_forward.1} parent=11 // pred_fallthru
        _
      // Predicated region
      $region45: #{bottleneck_ir_se_forward.1} parent=11 // pred_check
        %p323 = pneg %p258
      $region46: #{bottleneck_ir_se_forward.1} parent=11 // pred_check_branch
        %325 = sbr.rel (%p323) target = $region48
      $region47: #{bottleneck_ir_se_forward.1} parent=11 // pred_region
        _
      $region48: #{bottleneck_ir_se_forward.1} parent=11 // pred_fallthru
        _
    $region12: #{bottleneck_ir_se_forward.1} parent=5 // pred_fallthru
      _
    %p326 = scmp.lt.s32.totalorder %s17, 2
    // Predicated region
    $region49: #{bottleneck_ir_se_forward.1} parent=5 // pred_check
      %p327 = pneg %p326
    $region50: #{bottleneck_ir_se_forward.1} parent=5 // pred_check_branch
      %329 = sbr.rel (%p327) target = $region52
    $region51: #{bottleneck_ir_se_forward.1} parent=5 // pred_region
      // Predicated region
      $region53: #{bottleneck_ir_se_forward.1} parent=51 // pred_check
        %p330 = pneg %p37
      $region54: #{bottleneck_ir_se_forward.1} parent=51 // pred_check_branch
        %332 = sbr.rel (%p330) target = $region56
      $region55: #{bottleneck_ir_se_forward.1} parent=51 // pred_region
        %p333 = scmp.lt.s32.totalorder %s17, 1
        %s334 = scalar_select %p333, %s17, 1
        %s335 = smul.addr %s334, 82
        %s336 = smul.addr %s335, 4
        %s337 = scalar_lea.vmem %s0, %s336
      $region56: #{bottleneck_ir_se_forward.1} parent=51 // pred_fallthru
        _
      // Predicated region
      $region57: #{bottleneck_ir_se_forward.1} parent=51 // pred_check
        %p338 = pneg %p147
      $region58: #{bottleneck_ir_se_forward.1} parent=51 // pred_check_branch
        %340 = sbr.rel (%p338) target = $region60
      $region59: #{bottleneck_ir_se_forward.1} parent=51 // pred_region
        %p341 = scmp.lt.s32.totalorder %s17, 1
        %s342 = scalar_select %p341, %s17, 1
        %s343 = smul.addr %s342, 36
        %s344 = smul.addr %s343, 4
        %s345 = scalar_lea.vmem %s5, %s344
      $region60: #{bottleneck_ir_se_forward.1} parent=51 // pred_fallthru
        _
    $region52: #{bottleneck_ir_se_forward.1} parent=5 // pred_fallthru
      _
    %p346 = scmp.le.s32.totalorder 1, %s17
    %p347 = scmp.lt.s32.totalorder %s17, 3
    %p348 = pnand %p346, %p347
    %p349 = pneg %p348
    // Predicated region
    $region61: #{bottleneck_ir_se_forward.1} parent=5 // pred_check
      _
    $region62: #{bottleneck_ir_se_forward.1} parent=5 // pred_check_branch
      %351 = sbr.rel (%p348) target = $region64
    $region63: #{bottleneck_ir_se_forward.1} parent=5 // pred_region
      %s352 = ssub.s32 %s17, 1
      %p353 = scmp.lt.s32.totalorder %s22, 1
      %s354 = scalar_select %p353, %s22, 1
      %s355 = smul.addr %s354, 82
      %s356 = smul.addr %s355, 4
      %s357 = scalar_lea.vmem %s0, %s356
      %p358 = pneg %p43
      %p359 = pneg %p40
      %p360 = pneg %p64
      %p361 = pneg %p61
      %p362 = pneg %p85
      %p363 = pneg %p82
      %p364 = pneg %p106
      %p365 = pneg %p103
      %p366 = pneg %p127
      %p367 = pneg %p124
      %p368 = scmp.lt.s32.totalorder %s22, 1
      %s369 = scalar_select %p368, %s22, 1
      %s370 = smul.addr %s369, 36
      %s371 = smul.addr %s370, 4
      %s372 = scalar_lea.vmem %s5, %s371
      %p373 = pneg %p153
      %p374 = pneg %p150
      %p375 = pneg %p174
      %p376 = pneg %p171
      %p377 = pneg %p195
      %p378 = pneg %p192
      %p379 = pneg %p216
      %p380 = pneg %p213
      %p381 = pneg %p237
      %p382 = pneg %p234
      %p383 = pneg %p258
      %p384 = pneg %p255
      %p385 = pneg %p284
      %p386 = pneg %p281
      %p387 = scmp.lt.s32.totalorder %s22, 1
      %s388 = scalar_select %p387, %s22, 1
      %s389 = smul.addr %s388, 36
      %s390 = smul.addr %s389, 8
      %s391 = scalar_lea.vmem %s11, %s390
      %p392 = scmp.lt.s32.totalorder %s22, 1
      %s393 = scalar_select %p392, %s22, 1
      %s394 = smul.addr %s393, 82
      %s395 = smul.addr %s394, 4
      %s396 = scalar_lea.vmem %s0, %s395
      %p397 = scmp.lt.s32.totalorder %s22, 1
      %s398 = scalar_select %p397, %s22, 1
      %s399 = smul.addr %s398, 36
      %s400 = smul.addr %s399, 4
      %s401 = scalar_lea.vmem %s5, %s400
      %p402 = scmp.lt.s32.totalorder %s22, 1
      %s403 = scalar_select %p402, %s22, 1
      %s404 = smul.addr %s403, 36
      %s405 = smul.addr %s404, 8
      %s406 = scalar_lea.vmem %s11, %s405
      %v408 = vld [vmem:[%s396] sm:$0xff]
      %v409 = vld [vmem:[%s396 + $0x8] sm:$0xff]
      %v410 = vld [vmem:[%s396 + $0x10] sm:$0xff]
      %v411 = vld [vmem:[%s396 + $0x18] sm:$0xff]
      %v412 = vld [vmem:[%s396 + $0x20] sm:$0xff]
      %v413 = vld [vmem:[%s396 + $0x28] sm:$0xff]
      %v414 = vld [vmem:[%s396 + $0x30] sm:$0xff]
      %v415 = vld [vmem:[%s396 + $0x38] sm:$0xff]
      %v416 = vld [vmem:[%s396 + $0x40] sm:$0xff]
      %v417 = vld [vmem:[%s396 + $0x48] sm:$0xff]
      %v418 = vld [vmem:[%s396 + $0x50] sm:$0xff]
      %v419 = vld [vmem:[%s396 + $0x58] sm:$0xff]
      %v420 = vld [vmem:[%s396 + $0x60] sm:$0xff]
      %v421 = vld [vmem:[%s396 + $0x68] sm:$0xff]
      %v422 = vld [vmem:[%s396 + $0x70] sm:$0xff]
      %v423 = vld [vmem:[%s396 + $0x78] sm:$0xff]
      %v424 = vld [vmem:[%s396 + $0x80] sm:$0xff]
      %v425 = vld [vmem:[%s396 + $0x88] sm:$0xff]
      %v426 = vld [vmem:[%s396 + $0x90] sm:$0xff]
      %v427 = vld [vmem:[%s396 + $0x98] sm:$0xff]
      %v428 = vld [vmem:[%s396 + $0xa0] sm:$0xff]
      %v429 = vld [vmem:[%s396 + $0xa8] sm:$0xff]
      %v430 = vld [vmem:[%s396 + $0xb0] sm:$0xff]
      %v431 = vld [vmem:[%s396 + $0xb8] sm:$0xff]
      %v432 = vld [vmem:[%s396 + $0xc0] sm:$0xff]
      %v433 = vld [vmem:[%s396 + $0xc8] sm:$0xff]
      %v434 = vld [vmem:[%s396 + $0xd0] sm:$0xff]
      %v435 = vld [vmem:[%s396 + $0xd8] sm:$0xff]
      %v436 = vld [vmem:[%s396 + $0xe0] sm:$0xff]
      %v437 = vld [vmem:[%s396 + $0xe8] sm:$0xff]
      %v438 = vld [vmem:[%s396 + $0xf0] sm:$0xff]
      %v439 = vld [vmem:[%s396 + $0xf8] sm:$0xff]
      %v440 = vld [vmem:[%s396 + $0x100] sm:$0xff]
      %v441 = vld [vmem:[%s396 + $0x108] sm:$0xff]
      %v442 = vld [vmem:[%s396 + $0x110] sm:$0xff]
      %v443 = vld [vmem:[%s396 + $0x118] sm:$0xff]
      %v444 = vld [vmem:[%s396 + $0x120] sm:$0xff]
      %v445 = vld [vmem:[%s396 + $0x128] sm:$0xff]
      %v446 = vld [vmem:[%s396 + $0x130] sm:$0xff]
      %v447 = vld [vmem:[%s396 + $0x138] sm:$0xff]
      %v448 = vld [vmem:[%s396 + $0x140] sm:$0xff]
      %v449 = vld [vmem:[%s1] sm:$0xf]
      %v450 = vld [vmem:[%s1 + $0x4] sm:$0xf]
      %v451 = vld [vmem:[%s1 + $0x8] sm:$0xf]
      %v452 = vld [vmem:[%s1 + $0xc] sm:$0xf]
      %v453 = vld [vmem:[%s1 + $0x10] sm:$0xf]
      %v454 = vld [vmem:[%s1 + $0x14] sm:$0xf]
      %v455 = vld [vmem:[%s1 + $0x18] sm:$0xf]
      %v456 = vld [vmem:[%s1 + $0x1c] sm:$0xf]
      %v457 = vld [vmem:[%s1 + $0x20] sm:$0xf]
      %v458 = vld [vmem:[%s1 + $0x24] sm:$0xf]
      %v459 = vld [vmem:[%s1 + $0x28] sm:$0xf]
      %v460 = vld [vmem:[%s1 + $0x2c] sm:$0xf]
      %v461 = vld [vmem:[%s1 + $0x30] sm:$0xf]
      %v462 = vld [vmem:[%s1 + $0x34] sm:$0xf]
      %v463 = vld [vmem:[%s1 + $0x38] sm:$0xf]
      %v464 = vld [vmem:[%s1 + $0x3c] sm:$0xf]
      %v465 = vld [vmem:[%s1 + $0x40] sm:$0xf]
      %v466 = vld [vmem:[%s1 + $0x44] sm:$0xf]
      %v508 = vunpack.c.l.b16 %v408
      %v509 = vunpack.c.h.b16 %v408
      %v510 = vunpack.c.l.b16 %v409
      %v511 = vunpack.c.h.b16 %v409
      %v512 = vunpack.c.l.b16 %v410
      %v513 = vunpack.c.h.b16 %v410
      %v514 = vunpack.c.l.b16 %v411
      %v515 = vunpack.c.h.b16 %v411
      %v516 = vunpack.c.l.b16 %v412
      %v517 = vunpack.c.h.b16 %v412
      %v518 = vunpack.c.l.b16 %v413
      %v519 = vunpack.c.h.b16 %v413
      %v520 = vunpack.c.l.b16 %v414
      %v521 = vunpack.c.h.b16 %v414
      %v522 = vunpack.c.l.b16 %v415
      %v523 = vunpack.c.h.b16 %v415
      %v524 = vunpack.c.l.b16 %v416
      %v525 = vunpack.c.h.b16 %v416
      %v526 = vunpack.c.l.b16 %v417
      %v527 = vunpack.c.h.b16 %v417
      %v528 = vunpack.c.l.b16 %v418
      %v529 = vunpack.c.h.b16 %v418
      %v530 = vunpack.c.l.b16 %v419
      %v531 = vunpack.c.h.b16 %v419
      %v532 = vunpack.c.l.b16 %v420
      %v533 = vunpack.c.h.b16 %v420
      %v534 = vunpack.c.l.b16 %v421
      %v535 = vunpack.c.h.b16 %v421
      %v536 = vunpack.c.l.b16 %v422
      %v537 = vunpack.c.h.b16 %v422
      %v538 = vunpack.c.l.b16 %v423
      %v539 = vunpack.c.h.b16 %v423
      %v540 = vunpack.c.l.b16 %v424
      %v541 = vunpack.c.h.b16 %v424
      %v542 = vunpack.c.l.b16 %v425
      %v543 = vunpack.c.h.b16 %v425
      %v544 = vunpack.c.l.b16 %v426
      %v545 = vunpack.c.h.b16 %v426
      %v546 = vunpack.c.l.b16 %v427
      %v547 = vunpack.c.h.b16 %v427
      %v548 = vunpack.c.l.b16 %v428
      %v549 = vunpack.c.h.b16 %v428
      %v550 = vunpack.c.l.b16 %v429
      %v551 = vunpack.c.h.b16 %v429
      %v552 = vunpack.c.l.b16 %v430
      %v553 = vunpack.c.h.b16 %v430
      %v554 = vunpack.c.l.b16 %v431
      %v555 = vunpack.c.h.b16 %v431
      %v556 = vunpack.c.l.b16 %v432
      %v557 = vunpack.c.h.b16 %v432
      %v558 = vunpack.c.l.b16 %v433
      %v559 = vunpack.c.h.b16 %v433
      %v560 = vunpack.c.l.b16 %v434
      %v561 = vunpack.c.h.b16 %v434
      %v562 = vunpack.c.l.b16 %v435
      %v563 = vunpack.c.h.b16 %v435
      %v564 = vunpack.c.l.b16 %v436
      %v565 = vunpack.c.h.b16 %v436
      %v566 = vunpack.c.l.b16 %v437
      %v567 = vunpack.c.h.b16 %v437
      %v568 = vunpack.c.l.b16 %v438
      %v569 = vunpack.c.h.b16 %v438
      %v570 = vunpack.c.l.b16 %v439
      %v571 = vunpack.c.h.b16 %v439
      %v572 = vunpack.c.l.b16 %v440
      %v573 = vunpack.c.h.b16 %v440
      %v574 = vunpack.c.l.b16 %v441
      %v575 = vunpack.c.h.b16 %v441
      %v576 = vunpack.c.l.b16 %v442
      %v577 = vunpack.c.h.b16 %v442
      %v578 = vunpack.c.l.b16 %v443
      %v579 = vunpack.c.h.b16 %v443
      %v580 = vunpack.c.l.b16 %v444
      %v581 = vunpack.c.h.b16 %v444
      %v582 = vunpack.c.l.b16 %v445
      %v583 = vunpack.c.h.b16 %v445
      %v584 = vunpack.c.l.b16 %v446
      %v585 = vunpack.c.h.b16 %v446
      %v586 = vunpack.c.l.b16 %v447
      %v587 = vunpack.c.h.b16 %v447
      %v588 = vunpack.c.l.b16 %v448
      %v589 = vunpack.c.h.b16 %v448
      %v590 = vpack.c.b16 %v510, %v508
      %v591 = vpack.c.b16 %v511, %v509
      %v592 = vpack.c.b16 %v514, %v512
      %v593 = vpack.c.b16 %v515, %v513
      %v594 = vpack.c.b16 %v518, %v516
      %v595 = vpack.c.b16 %v519, %v517
      %v596 = vpack.c.b16 %v522, %v520
      %v597 = vpack.c.b16 %v523, %v521
      %v598 = vpack.c.b16 %v526, %v524
      %v599 = vpack.c.b16 %v527, %v525
      %v600 = vpack.c.b16 %v530, %v528
      %v601 = vpack.c.b16 %v531, %v529
      %v602 = vpack.c.b16 %v534, %v532
      %v603 = vpack.c.b16 %v535, %v533
      %v604 = vpack.c.b16 %v538, %v536
      %v605 = vpack.c.b16 %v539, %v537
      %v606 = vpack.c.b16 %v542, %v540
      %v607 = vpack.c.b16 %v543, %v541
      %v608 = vpack.c.b16 %v546, %v544
      %v609 = vpack.c.b16 %v547, %v545
      %v610 = vpack.c.b16 %v550, %v548
      %v611 = vpack.c.b16 %v551, %v549
      %v612 = vpack.c.b16 %v554, %v552
      %v613 = vpack.c.b16 %v555, %v553
      %v614 = vpack.c.b16 %v558, %v556
      %v615 = vpack.c.b16 %v559, %v557
      %v616 = vpack.c.b16 %v562, %v560
      %v617 = vpack.c.b16 %v563, %v561
      %v618 = vpack.c.b16 %v566, %v564
      %v619 = vpack.c.b16 %v567, %v565
      %v620 = vpack.c.b16 %v570, %v568
      %v621 = vpack.c.b16 %v571, %v569
      %v622 = vpack.c.b16 %v574, %v572
      %v623 = vpack.c.b16 %v575, %v573
      %v624 = vpack.c.b16 %v578, %v576
      %v625 = vpack.c.b16 %v579, %v577
      %v626 = vpack.c.b16 %v582, %v580
      %v627 = vpack.c.b16 %v583, %v581
      %v628 = vpack.c.b16 %v586, %v584
      %v629 = vpack.c.b16 %v587, %v585
      %v630 = vpack.c.b16 %v588, %v588
      %v631 = vpack.c.b16 %v589, %v589
      %v671 = vunpack.c.l.b16 %v449
      %v672 = vunpack.c.l.b16 %v450
      %v673 = vunpack.c.l.b16 %v451
      %v674 = vunpack.c.l.b16 %v452
      %v675 = vunpack.c.l.b16 %v453
      %v676 = vunpack.c.l.b16 %v454
      %v677 = vunpack.c.l.b16 %v455
      %v678 = vunpack.c.l.b16 %v456
      %v679 = vunpack.c.l.b16 %v457
      %v680 = vunpack.c.l.b16 %v458
      %v681 = vunpack.c.l.b16 %v459
      %v682 = vunpack.c.l.b16 %v460
      %v683 = vunpack.c.l.b16 %v461
      %v684 = vunpack.c.l.b16 %v462
      %v685 = vunpack.c.l.b16 %v463
      %v686 = vunpack.c.l.b16 %v464
      %v687 = vunpack.c.l.b16 %v465
      %v688 = vunpack.c.l.b16 %v466
      %v689 = vpack.c.b16 %v672, %v671
      %v690 = vpack.c.b16 %v674, %v673
      %v691 = vpack.c.b16 %v676, %v675
      %v692 = vpack.c.b16 %v678, %v677
      %v693 = vpack.c.b16 %v680, %v679
      %v694 = vpack.c.b16 %v682, %v681
      %v695 = vpack.c.b16 %v684, %v683
      %v696 = vpack.c.b16 %v686, %v685
      %v697 = vpack.c.b16 %v688, %v687
      %vm707 = vcmask 130048
      %v709 = vsel %vm707, %v591, 0
      %v712 = vsel %vm707, %v593, 0
      %v715 = vsel %vm707, %v595, 0
      %v718 = vsel %vm707, %v597, 0
      %v721 = vsel %vm707, %v599, 0
      %v724 = vsel %vm707, %v601, 0
      %v727 = vsel %vm707, %v603, 0
      %v730 = vsel %vm707, %v605, 0
      %v733 = vsel %vm707, %v607, 0
      %v736 = vsel %vm707, %v609, 0
      %v739 = vsel %vm707, %v611, 0
      %v742 = vsel %vm707, %v613, 0
      %v745 = vsel %vm707, %v615, 0
      %v748 = vsel %vm707, %v617, 0
      %v751 = vsel %vm707, %v619, 0
      %v754 = vsel %vm707, %v621, 0
      %v757 = vsel %vm707, %v623, 0
      %v760 = vsel %vm707, %v625, 0
      %v763 = vsel %vm707, %v627, 0
      %v766 = vsel %vm707, %v629, 0
      %v769 = vsel %vm707, %v631, 0
      %771 = vmatprep.subr.bf16.mxu0 0
      %772 = vmatpush1.bf16.msra.mxu0 %v696
      %773 = vmatprep.subr.bf16.mxu0 0
      %774 = vmatpush1.bf16.msra.mxu0 %v695
      %775 = vmatprep.subr.bf16.mxu0 0
      %776 = vmatpush1.bf16.msra.mxu0 %v694
      %777 = vmatprep.subr.bf16.mxu0 0
      %778 = vmatpush1.bf16.msra.mxu0 %v693
      %779 = vmatprep.subr.bf16.mxu0 0
      %780 = vmatpush1.bf16.msra.mxu0 %v692
      %781 = vmatprep.subr.bf16.mxu0 0
      %782 = vmatpush1.bf16.msra.mxu0 %v691
      %783 = vmatprep.subr.bf16.mxu0 0
      %784 = vmatpush1.bf16.msra.mxu0 %v690
      %785 = vmatprep.subr.bf16.mxu0 0
      %786 = vmatpush1.bf16.msra.mxu0 %v689
      %787 = vmatprep.subr.bf16.mxu0 0
      %788 = vmatpush2.bf16.msra.mxu0 0
      %789 = vmatprep.subr.bf16.mxu0 0
      %790 = vmatpush2.bf16.msra.mxu0 0
      %791 = vmatprep.subr.bf16.mxu0 0
      %792 = vmatpush2.bf16.msra.mxu0 0
      %793 = vmatprep.subr.bf16.mxu0 0
      %794 = vmatpush2.bf16.msra.mxu0 0
      %795 = vmatprep.subr.bf16.mxu0 0
      %796 = vmatpush2.bf16.msra.mxu0 0
      %797 = vmatprep.subr.bf16.mxu0 0
      %798 = vmatpush2.bf16.msra.mxu0 0
      %799 = vmatprep.subr.bf16.mxu0 0
      %800 = vmatpush2.bf16.msra.mxu0 0
      %801 = vmatprep.subr.bf16.mxu0 0
      %802 = vmatpush2.bf16.msra.mxu0 %v697
      %803 = vmatprep.mubr.bf16.mxu0 %v709
      %804 = vmatmul.mubr.bf16.gmra.mxu0 %v590
      %v805 = vpop.f32.mrf.mxu0
      %v806 = vadd.f32 0.0, %v805
      %v807 = vpop.f32.mrf.mxu0
      %v808 = vpop.f32.mrf.mxu0
      %v809 = vadd.f32 0.0, %v808
      %v810 = vpop.f32.mrf.mxu0
      %811 = vmatprep.mubr.bf16.mxu0 %v712
      %812 = vmatmul.mubr.bf16.gmra.mxu0 %v592
      %v813 = vpop.f32.mrf.mxu0
      %v814 = vadd.f32 0.0, %v813
      %v815 = vpop.f32.mrf.mxu0
      %v816 = vpop.f32.mrf.mxu0
      %v817 = vadd.f32 0.0, %v816
      %v818 = vpop.f32.mrf.mxu0
      %819 = vmatprep.mubr.bf16.mxu0 %v715
      %820 = vmatmul.mubr.bf16.gmra.mxu0 %v594
      %v821 = vpop.f32.mrf.mxu0
      %v822 = vadd.f32 0.0, %v821
      %v823 = vpop.f32.mrf.mxu0
      %v824 = vpop.f32.mrf.mxu0
      %v825 = vadd.f32 0.0, %v824
      %v826 = vpop.f32.mrf.mxu0
      %827 = vmatprep.mubr.bf16.mxu0 %v718
      %828 = vmatmul.mubr.bf16.gmra.mxu0 %v596
      %v829 = vpop.f32.mrf.mxu0
      %v830 = vadd.f32 0.0, %v829
      %v831 = vpop.f32.mrf.mxu0
      %v832 = vpop.f32.mrf.mxu0
      %v833 = vadd.f32 0.0, %v832
      %v834 = vpop.f32.mrf.mxu0
      %835 = vmatprep.mubr.bf16.mxu0 %v721
      %836 = vmatmul.mubr.bf16.gmra.mxu0 %v598
      %v837 = vpop.f32.mrf.mxu0
      %v838 = vadd.f32 0.0, %v837
      %v839 = vpop.f32.mrf.mxu0
      %v840 = vpop.f32.mrf.mxu0
      %v841 = vadd.f32 0.0, %v840
      %v842 = vpop.f32.mrf.mxu0
      %843 = vmatprep.mubr.bf16.mxu0 %v724
      %844 = vmatmul.mubr.bf16.gmra.mxu0 %v600
      %v845 = vpop.f32.mrf.mxu0
      %v846 = vadd.f32 0.0, %v845
      %v847 = vpop.f32.mrf.mxu0
      %v848 = vpop.f32.mrf.mxu0
      %v849 = vadd.f32 0.0, %v848
      %v850 = vpop.f32.mrf.mxu0
      %851 = vmatprep.mubr.bf16.mxu0 %v727
      %852 = vmatmul.mubr.bf16.gmra.mxu0 %v602
      %v853 = vpop.f32.mrf.mxu0
      %v854 = vadd.f32 0.0, %v853
      %v855 = vpop.f32.mrf.mxu0
      %v856 = vpop.f32.mrf.mxu0
      %v857 = vadd.f32 0.0, %v856
      %v858 = vpop.f32.mrf.mxu0
      %859 = vmatprep.mubr.bf16.mxu0 %v730
      %860 = vmatmul.mubr.bf16.gmra.mxu0 %v604
      %v861 = vpop.f32.mrf.mxu0
      %v862 = vadd.f32 0.0, %v861
      %v863 = vpop.f32.mrf.mxu0
      %v864 = vpop.f32.mrf.mxu0
      %v865 = vadd.f32 0.0, %v864
      %v866 = vpop.f32.mrf.mxu0
      %867 = vmatprep.mubr.bf16.mxu0 %v733
      %868 = vmatmul.mubr.bf16.gmra.mxu0 %v606
      %v869 = vpop.f32.mrf.mxu0
      %v870 = vadd.f32 0.0, %v869
      %v871 = vpop.f32.mrf.mxu0
      %v872 = vpop.f32.mrf.mxu0
      %v873 = vadd.f32 0.0, %v872
      %v874 = vpop.f32.mrf.mxu0
      %875 = vmatprep.mubr.bf16.mxu0 %v736
      %876 = vmatmul.mubr.bf16.gmra.mxu0 %v608
      %v877 = vpop.f32.mrf.mxu0
      %v878 = vadd.f32 0.0, %v877
      %v879 = vpop.f32.mrf.mxu0
      %v880 = vpop.f32.mrf.mxu0
      %v881 = vadd.f32 0.0, %v880
      %v882 = vpop.f32.mrf.mxu0
      %883 = vmatprep.mubr.bf16.mxu0 %v739
      %884 = vmatmul.mubr.bf16.gmra.mxu0 %v610
      %v885 = vpop.f32.mrf.mxu0
      %v886 = vadd.f32 0.0, %v885
      %v887 = vpop.f32.mrf.mxu0
      %v888 = vpop.f32.mrf.mxu0
      %v889 = vadd.f32 0.0, %v888
      %v890 = vpop.f32.mrf.mxu0
      %891 = vmatprep.mubr.bf16.mxu0 %v742
      %892 = vmatmul.mubr.bf16.gmra.mxu0 %v612
      %v893 = vpop.f32.mrf.mxu0
      %v894 = vadd.f32 0.0, %v893
      %v895 = vpop.f32.mrf.mxu0
      %v896 = vpop.f32.mrf.mxu0
      %v897 = vadd.f32 0.0, %v896
      %v898 = vpop.f32.mrf.mxu0
      %899 = vmatprep.mubr.bf16.mxu0 %v745
      %900 = vmatmul.mubr.bf16.gmra.mxu0 %v614
      %v901 = vpop.f32.mrf.mxu0
      %v902 = vadd.f32 0.0, %v901
      %v903 = vpop.f32.mrf.mxu0
      %v904 = vpop.f32.mrf.mxu0
      %v905 = vadd.f32 0.0, %v904
      %v906 = vpop.f32.mrf.mxu0
      %907 = vmatprep.mubr.bf16.mxu0 %v748
      %908 = vmatmul.mubr.bf16.gmra.mxu0 %v616
      %v909 = vpop.f32.mrf.mxu0
      %v910 = vadd.f32 0.0, %v909
      %v911 = vpop.f32.mrf.mxu0
      %v912 = vpop.f32.mrf.mxu0
      %v913 = vadd.f32 0.0, %v912
      %v914 = vpop.f32.mrf.mxu0
      %915 = vmatprep.mubr.bf16.mxu0 %v751
      %916 = vmatmul.mubr.bf16.gmra.mxu0 %v618
      %v917 = vpop.f32.mrf.mxu0
      %v918 = vadd.f32 0.0, %v917
      %v919 = vpop.f32.mrf.mxu0
      %v920 = vpop.f32.mrf.mxu0
      %v921 = vadd.f32 0.0, %v920
      %v922 = vpop.f32.mrf.mxu0
      %923 = vmatprep.mubr.bf16.mxu0 %v754
      %924 = vmatmul.mubr.bf16.gmra.mxu0 %v620
      %v925 = vpop.f32.mrf.mxu0
      %v926 = vadd.f32 0.0, %v925
      %v927 = vpop.f32.mrf.mxu0
      %v928 = vpop.f32.mrf.mxu0
      %v929 = vadd.f32 0.0, %v928
      %v930 = vpop.f32.mrf.mxu0
      %931 = vmatprep.mubr.bf16.mxu0 %v757
      %932 = vmatmul.mubr.bf16.gmra.mxu0 %v622
      %v933 = vpop.f32.mrf.mxu0
      %v934 = vadd.f32 0.0, %v933
      %v935 = vpop.f32.mrf.mxu0
      %v936 = vpop.f32.mrf.mxu0
      %v937 = vadd.f32 0.0, %v936
      %v938 = vpop.f32.mrf.mxu0
      %939 = vmatprep.mubr.bf16.mxu0 %v760
      %940 = vmatmul.mubr.bf16.gmra.mxu0 %v624
      %v941 = vpop.f32.mrf.mxu0
      %v942 = vadd.f32 0.0, %v941
      %v943 = vpop.f32.mrf.mxu0
      %v944 = vpop.f32.mrf.mxu0
      %v945 = vadd.f32 0.0, %v944
      %v946 = vpop.f32.mrf.mxu0
      %947 = vmatprep.mubr.bf16.mxu0 %v763
      %948 = vmatmul.mubr.bf16.gmra.mxu0 %v626
      %v949 = vpop.f32.mrf.mxu0
      %v950 = vadd.f32 0.0, %v949
      %v951 = vpop.f32.mrf.mxu0
      %v952 = vpop.f32.mrf.mxu0
      %v953 = vadd.f32 0.0, %v952
      %v954 = vpop.f32.mrf.mxu0
      %955 = vmatprep.mubr.bf16.mxu0 %v766
      %956 = vmatmul.mubr.bf16.gmra.mxu0 %v628
      %v957 = vpop.f32.mrf.mxu0
      %v958 = vadd.f32 0.0, %v957
      %v959 = vpop.f32.mrf.mxu0
      %v960 = vpop.f32.mrf.mxu0
      %v961 = vadd.f32 0.0, %v960
      %v962 = vpop.f32.mrf.mxu0
      %963 = vmatprep.mubr.bf16.mxu0 %v769
      %964 = vmatmul.mubr.bf16.gmra.mxu0 %v630
      %v965 = vpop.f32.mrf.mxu0
      %v966 = vadd.f32 0.0, %v965
      %v967 = vpop.f32.mrf.mxu0
      %v968 = vpop.f32.mrf.mxu0
      %v969 = vpop.f32.mrf.mxu0
      %970 = vdwg.mxu0
      %v971 = vld [vmem:[%s2] sm:$0x1]
      %vm972 = vcmp.gt.f32.partialorder %v806, 0.0
      %vm973 = vcmp.gt.f32.partialorder %v809, 0.0
      %vm974 = vcmp.gt.f32.partialorder %v814, 0.0
      %vm975 = vcmp.gt.f32.partialorder %v817, 0.0
      %vm976 = vcmp.gt.f32.partialorder %v822, 0.0
      %vm977 = vcmp.gt.f32.partialorder %v825, 0.0
      %vm978 = vcmp.gt.f32.partialorder %v830, 0.0
      %vm979 = vcmp.gt.f32.partialorder %v833, 0.0
      %vm980 = vcmp.gt.f32.partialorder %v838, 0.0
      %vm981 = vcmp.gt.f32.partialorder %v841, 0.0
      %vm982 = vcmp.gt.f32.partialorder %v846, 0.0
      %vm983 = vcmp.gt.f32.partialorder %v849, 0.0
      %vm984 = vcmp.gt.f32.partialorder %v854, 0.0
      %vm985 = vcmp.gt.f32.partialorder %v857, 0.0
      %vm986 = vcmp.gt.f32.partialorder %v862, 0.0
      %vm987 = vcmp.gt.f32.partialorder %v865, 0.0
      %vm988 = vcmp.gt.f32.partialorder %v870, 0.0
      %vm989 = vcmp.gt.f32.partialorder %v873, 0.0
      %vm990 = vcmp.gt.f32.partialorder %v878, 0.0
      %vm991 = vcmp.gt.f32.partialorder %v881, 0.0
      %vm992 = vcmp.gt.f32.partialorder %v886, 0.0
      %vm993 = vcmp.gt.f32.partialorder %v889, 0.0
      %vm994 = vcmp.gt.f32.partialorder %v894, 0.0
      %vm995 = vcmp.gt.f32.partialorder %v897, 0.0
      %vm996 = vcmp.gt.f32.partialorder %v902, 0.0
      %vm997 = vcmp.gt.f32.partialorder %v905, 0.0
      %vm998 = vcmp.gt.f32.partialorder %v910, 0.0
      %vm999 = vcmp.gt.f32.partialorder %v913, 0.0
      %vm1000 = vcmp.gt.f32.partialorder %v918, 0.0
      %vm1001 = vcmp.gt.f32.partialorder %v921, 0.0
      %vm1002 = vcmp.gt.f32.partialorder %v926, 0.0
      %vm1003 = vcmp.gt.f32.partialorder %v929, 0.0
      %vm1004 = vcmp.gt.f32.partialorder %v934, 0.0
      %vm1005 = vcmp.gt.f32.partialorder %v937, 0.0
      %vm1006 = vcmp.gt.f32.partialorder %v942, 0.0
      %vm1007 = vcmp.gt.f32.partialorder %v945, 0.0
      %vm1008 = vcmp.gt.f32.partialorder %v950, 0.0
      %vm1009 = vcmp.gt.f32.partialorder %v953, 0.0
      %vm1010 = vcmp.gt.f32.partialorder %v958, 0.0
      %vm1011 = vcmp.gt.f32.partialorder %v961, 0.0
      %vm1012 = vcmp.gt.f32.partialorder %v966, 0.0
      %v1014 = vlaneseq
      %v1015 = vshrl.u32 %v1014, 7
      %v1016 = vsub.s32 0, %v1015
      %v1017 = vrot.slane %v971, %v1016
      %v1019 = vmul.f32 %v806, %v1017
      %v1020 = vmul.f32 %v809, %v1017
      %v1021 = vmul.f32 %v814, %v1017
      %v1022 = vmul.f32 %v817, %v1017
      %v1023 = vmul.f32 %v822, %v1017
      %v1024 = vmul.f32 %v825, %v1017
      %v1025 = vmul.f32 %v830, %v1017
      %v1026 = vmul.f32 %v833, %v1017
      %v1027 = vmul.f32 %v838, %v1017
      %v1028 = vmul.f32 %v841, %v1017
      %v1029 = vmul.f32 %v846, %v1017
      %v1030 = vmul.f32 %v849, %v1017
      %v1031 = vmul.f32 %v854, %v1017
      %v1032 = vmul.f32 %v857, %v1017
      %v1033 = vmul.f32 %v862, %v1017
      %v1034 = vmul.f32 %v865, %v1017
      %v1035 = vmul.f32 %v870, %v1017
      %v1036 = vmul.f32 %v873, %v1017
      %v1037 = vmul.f32 %v878, %v1017
      %v1038 = vmul.f32 %v881, %v1017
      %v1039 = vmul.f32 %v886, %v1017
      %v1040 = vmul.f32 %v889, %v1017
      %v1041 = vmul.f32 %v894, %v1017
      %v1042 = vmul.f32 %v897, %v1017
      %v1043 = vmul.f32 %v902, %v1017
      %v1044 = vmul.f32 %v905, %v1017
      %v1045 = vmul.f32 %v910, %v1017
      %v1046 = vmul.f32 %v913, %v1017
      %v1047 = vmul.f32 %v918, %v1017
      %v1048 = vmul.f32 %v921, %v1017
      %v1049 = vmul.f32 %v926, %v1017
      %v1050 = vmul.f32 %v929, %v1017
      %v1051 = vmul.f32 %v934, %v1017
      %v1052 = vmul.f32 %v937, %v1017
      %v1053 = vmul.f32 %v942, %v1017
      %v1054 = vmul.f32 %v945, %v1017
      %v1055 = vmul.f32 %v950, %v1017
      %v1056 = vmul.f32 %v953, %v1017
      %v1057 = vmul.f32 %v958, %v1017
      %v1058 = vmul.f32 %v961, %v1017
      %v1059 = vmul.f32 %v966, %v1017
      %v1060 = vsel %vm972, %v806, %v1019
      %v1061 = vsel %vm973, %v809, %v1020
      %v1062 = vsel %vm974, %v814, %v1021
      %v1063 = vsel %vm975, %v817, %v1022
      %v1064 = vsel %vm976, %v822, %v1023
      %v1065 = vsel %vm977, %v825, %v1024
      %v1066 = vsel %vm978, %v830, %v1025
      %v1067 = vsel %vm979, %v833, %v1026
      %v1068 = vsel %vm980, %v838, %v1027
      %v1069 = vsel %vm981, %v841, %v1028
      %v1070 = vsel %vm982, %v846, %v1029
      %v1071 = vsel %vm983, %v849, %v1030
      %v1072 = vsel %vm984, %v854, %v1031
      %v1073 = vsel %vm985, %v857, %v1032
      %v1074 = vsel %vm986, %v862, %v1033
      %v1075 = vsel %vm987, %v865, %v1034
      %v1076 = vsel %vm988, %v870, %v1035
      %v1077 = vsel %vm989, %v873, %v1036
      %v1078 = vsel %vm990, %v878, %v1037
      %v1079 = vsel %vm991, %v881, %v1038
      %v1080 = vsel %vm992, %v886, %v1039
      %v1081 = vsel %vm993, %v889, %v1040
      %v1082 = vsel %vm994, %v894, %v1041
      %v1083 = vsel %vm995, %v897, %v1042
      %v1084 = vsel %vm996, %v902, %v1043
      %v1085 = vsel %vm997, %v905, %v1044
      %v1086 = vsel %vm998, %v910, %v1045
      %v1087 = vsel %vm999, %v913, %v1046
      %v1088 = vsel %vm1000, %v918, %v1047
      %v1089 = vsel %vm1001, %v921, %v1048
      %v1090 = vsel %vm1002, %v926, %v1049
      %v1091 = vsel %vm1003, %v929, %v1050
      %v1092 = vsel %vm1004, %v934, %v1051
      %v1093 = vsel %vm1005, %v937, %v1052
      %v1094 = vsel %vm1006, %v942, %v1053
      %v1095 = vsel %vm1007, %v945, %v1054
      %v1096 = vsel %vm1008, %v950, %v1055
      %v1097 = vsel %vm1009, %v953, %v1056
      %v1098 = vsel %vm1010, %v958, %v1057
      %v1099 = vsel %vm1011, %v961, %v1058
      %v1100 = vsel %vm1012, %v966, %v1059
      %vm1101 = vcmask 261120
      %1102 = vst.msk [vmem:[#allocation2] sm:$0xff] %vm1101, %v1060
      %1103 = vst.msk [vmem:[#allocation2 + $0x8] sm:$0xff] %vm1101, %v1061
      %1104 = vst.msk [vmem:[#allocation2 + $0x10] sm:$0xff] %vm1101, %v1062
      %1105 = vst.msk [vmem:[#allocation2 + $0x18] sm:$0xff] %vm1101, %v1063
      %1106 = vst.msk [vmem:[#allocation2 + $0x20] sm:$0xff] %vm1101, %v1064
      %1107 = vst.msk [vmem:[#allocation2 + $0x28] sm:$0xff] %vm1101, %v1065
      %1108 = vst.msk [vmem:[#allocation2 + $0x30] sm:$0xff] %vm1101, %v1066
      %1109 = vst.msk [vmem:[#allocation2 + $0x38] sm:$0xff] %vm1101, %v1067
      %1110 = vst.msk [vmem:[#allocation2 + $0x40] sm:$0xff] %vm1101, %v1068
      %1111 = vst.msk [vmem:[#allocation2 + $0x48] sm:$0xff] %vm1101, %v1069
      %1112 = vst.msk [vmem:[#allocation2 + $0x50] sm:$0xff] %vm1101, %v1070
      %1113 = vst.msk [vmem:[#allocation2 + $0x58] sm:$0xff] %vm1101, %v1071
      %1114 = vst.msk [vmem:[#allocation2 + $0x60] sm:$0xff] %vm1101, %v1072
      %1115 = vst.msk [vmem:[#allocation2 + $0x68] sm:$0xff] %vm1101, %v1073
      %1116 = vst.msk [vmem:[#allocation2 + $0x70] sm:$0xff] %vm1101, %v1074
      %1117 = vst.msk [vmem:[#allocation2 + $0x78] sm:$0xff] %vm1101, %v1075
      %1118 = vst.msk [vmem:[#allocation2 + $0x80] sm:$0xff] %vm1101, %v1076
      %1119 = vst.msk [vmem:[#allocation2 + $0x88] sm:$0xff] %vm1101, %v1077
      %1120 = vst.msk [vmem:[#allocation2 + $0x90] sm:$0xff] %vm1101, %v1078
      %1121 = vst.msk [vmem:[#allocation2 + $0x98] sm:$0xff] %vm1101, %v1079
      %1122 = vst.msk [vmem:[#allocation2 + $0xa0] sm:$0xff] %vm1101, %v1080
      %1123 = vst.msk [vmem:[#allocation2 + $0xa8] sm:$0xff] %vm1101, %v1081
      %1124 = vst.msk [vmem:[#allocation2 + $0xb0] sm:$0xff] %vm1101, %v1082
      %1125 = vst.msk [vmem:[#allocation2 + $0xb8] sm:$0xff] %vm1101, %v1083
      %1126 = vst.msk [vmem:[#allocation2 + $0xc0] sm:$0xff] %vm1101, %v1084
      %1127 = vst.msk [vmem:[#allocation2 + $0xc8] sm:$0xff] %vm1101, %v1085
      %1128 = vst.msk [vmem:[#allocation2 + $0xd0] sm:$0xff] %vm1101, %v1086
      %1129 = vst.msk [vmem:[#allocation2 + $0xd8] sm:$0xff] %vm1101, %v1087
      %1130 = vst.msk [vmem:[#allocation2 + $0xe0] sm:$0xff] %vm1101, %v1088
      %1131 = vst.msk [vmem:[#allocation2 + $0xe8] sm:$0xff] %vm1101, %v1089
      %1132 = vst.msk [vmem:[#allocation2 + $0xf0] sm:$0xff] %vm1101, %v1090
      %1133 = vst.msk [vmem:[#allocation2 + $0xf8] sm:$0xff] %vm1101, %v1091
      %1134 = vst.msk [vmem:[#allocation2 + $0x100] sm:$0xff] %vm1101, %v1092
      %1135 = vst.msk [vmem:[#allocation2 + $0x108] sm:$0xff] %vm1101, %v1093
      %1136 = vst.msk [vmem:[#allocation2 + $0x110] sm:$0xff] %vm1101, %v1094
      %1137 = vst.msk [vmem:[#allocation2 + $0x118] sm:$0xff] %vm1101, %v1095
      %1138 = vst.msk [vmem:[#allocation2 + $0x120] sm:$0xff] %vm1101, %v1096
      %1139 = vst.msk [vmem:[#allocation2 + $0x128] sm:$0xff] %vm1101, %v1097
      %1140 = vst.msk [vmem:[#allocation2 + $0x130] sm:$0xff] %vm1101, %v1098
      %1141 = vst.msk [vmem:[#allocation2 + $0x138] sm:$0xff] %vm1101, %v1099
      %1142 = vst.msk [vmem:[#allocation2 + $0x140] sm:$0xff] %vm1101, %v1100
      %v1143 = vld [vmem:[#allocation2] sm:$0xff]
      %v1144 = vld [vmem:[#allocation2 + $0x8] sm:$0xff]
      %v1145 = vld [vmem:[#allocation2 + $0x10] sm:$0xff]
      %v1146 = vld [vmem:[#allocation2 + $0x18] sm:$0xff]
      %v1147 = vld [vmem:[#allocation2 + $0x20] sm:$0xff]
      %v1148 = vld [vmem:[#allocation2 + $0x28] sm:$0xff]
      %v1149 = vld [vmem:[#allocation2 + $0x30] sm:$0xff]
      %v1150 = vld [vmem:[#allocation2 + $0x38] sm:$0xff]
      %v1151 = vld [vmem:[#allocation2 + $0x40] sm:$0xff]
      %v1152 = vld [vmem:[#allocation2 + $0x48] sm:$0xff]
      %v1153 = vld [vmem:[#allocation2 + $0x50] sm:$0xff]
      %v1154 = vld [vmem:[#allocation2 + $0x58] sm:$0xff]
      %v1155 = vld [vmem:[#allocation2 + $0x60] sm:$0xff]
      %v1156 = vld [vmem:[#allocation2 + $0x68] sm:$0xff]
      %v1157 = vld [vmem:[#allocation2 + $0x70] sm:$0xff]
      %v1158 = vld [vmem:[#allocation2 + $0x78] sm:$0xff]
      %v1159 = vld [vmem:[#allocation2 + $0x80] sm:$0xff]
      %v1160 = vld [vmem:[#allocation2 + $0x88] sm:$0xff]
      %v1161 = vld [vmem:[#allocation2 + $0x90] sm:$0xff]
      %v1162 = vld [vmem:[#allocation2 + $0x98] sm:$0xff]
      %v1163 = vld [vmem:[#allocation2 + $0xa0] sm:$0xff]
      %v1164 = vld [vmem:[#allocation2 + $0xa8] sm:$0xff]
      %v1165 = vld [vmem:[#allocation2 + $0xb0] sm:$0xff]
      %v1166 = vld [vmem:[#allocation2 + $0xb8] sm:$0xff]
      %v1167 = vld [vmem:[#allocation2 + $0xc0] sm:$0xff]
      %v1168 = vld [vmem:[#allocation2 + $0xc8] sm:$0xff]
      %v1169 = vld [vmem:[#allocation2 + $0xd0] sm:$0xff]
      %v1170 = vld [vmem:[#allocation2 + $0xd8] sm:$0xff]
      %v1171 = vld [vmem:[#allocation2 + $0xe0] sm:$0xff]
      %v1172 = vld [vmem:[#allocation2 + $0xe8] sm:$0xff]
      %v1173 = vld [vmem:[#allocation2 + $0xf0] sm:$0xff]
      %v1174 = vld [vmem:[#allocation2 + $0xf8] sm:$0xff]
      %v1175 = vld [vmem:[#allocation2 + $0x100] sm:$0xff]
      %v1176 = vld [vmem:[#allocation2 + $0x108] sm:$0xff]
      %v1177 = vld [vmem:[#allocation2 + $0x110] sm:$0xff]
      %v1178 = vld [vmem:[#allocation2 + $0x118] sm:$0xff]
      %v1179 = vpack.c.bf16 %v1144, %v1143
      %v1180 = vpack.c.bf16 %v1146, %v1145
      %v1181 = vpack.c.bf16 %v1148, %v1147
      %v1182 = vpack.c.bf16 %v1150, %v1149
      %v1183 = vpack.c.bf16 %v1152, %v1151
      %v1184 = vpack.c.bf16 %v1154, %v1153
      %v1185 = vpack.c.bf16 %v1156, %v1155
      %v1186 = vpack.c.bf16 %v1158, %v1157
      %v1187 = vpack.c.bf16 %v1160, %v1159
      %v1188 = vpack.c.bf16 %v1162, %v1161
      %v1189 = vpack.c.bf16 %v1164, %v1163
      %v1190 = vpack.c.bf16 %v1166, %v1165
      %v1191 = vpack.c.bf16 %v1168, %v1167
      %v1192 = vpack.c.bf16 %v1170, %v1169
      %v1193 = vpack.c.bf16 %v1172, %v1171
      %v1194 = vpack.c.bf16 %v1174, %v1173
      %v1195 = vpack.c.bf16 %v1176, %v1175
      %v1196 = vpack.c.bf16 %v1178, %v1177
      %v1197 = vld [vmem:[%s3] sm:$0xf]
      %v1198 = vld [vmem:[%s3 + $0x4] sm:$0xf]
      %v1199 = vld [vmem:[%s3 + $0x8] sm:$0xf]
      %v1200 = vld [vmem:[%s3 + $0xc] sm:$0xf]
      %v1201 = vld [vmem:[#allocation2 + $0x1] sm:$0xff]
      %v1202 = vld [vmem:[#allocation2 + $0x9] sm:$0xff]
      %v1203 = vld [vmem:[#allocation2 + $0x11] sm:$0xff]
      %v1204 = vld [vmem:[#allocation2 + $0x19] sm:$0xff]
      %v1205 = vld [vmem:[#allocation2 + $0x21] sm:$0xff]
      %v1206 = vld [vmem:[#allocation2 + $0x29] sm:$0xff]
      %v1207 = vld [vmem:[#allocation2 + $0x31] sm:$0xff]
      %v1208 = vld [vmem:[#allocation2 + $0x39] sm:$0xff]
      %v1209 = vld [vmem:[#allocation2 + $0x41] sm:$0xff]
      %v1210 = vld [vmem:[#allocation2 + $0x49] sm:$0xff]
      %v1211 = vld [vmem:[#allocation2 + $0x51] sm:$0xff]
      %v1212 = vld [vmem:[#allocation2 + $0x59] sm:$0xff]
      %v1213 = vld [vmem:[#allocation2 + $0x61] sm:$0xff]
      %v1214 = vld [vmem:[#allocation2 + $0x69] sm:$0xff]
      %v1215 = vld [vmem:[#allocation2 + $0x71] sm:$0xff]
      %v1216 = vld [vmem:[#allocation2 + $0x79] sm:$0xff]
      %v1217 = vld [vmem:[#allocation2 + $0x81] sm:$0xff]
      %v1218 = vld [vmem:[#allocation2 + $0x89] sm:$0xff]
      %v1219 = vld [vmem:[#allocation2 + $0x91] sm:$0xff]
      %v1220 = vld [vmem:[#allocation2 + $0x99] sm:$0xff]
      %v1221 = vld [vmem:[#allocation2 + $0xa1] sm:$0xff]
      %v1222 = vld [vmem:[#allocation2 + $0xa9] sm:$0xff]
      %v1223 = vld [vmem:[#allocation2 + $0xb1] sm:$0xff]
      %v1224 = vld [vmem:[#allocation2 + $0xb9] sm:$0xff]
      %v1225 = vld [vmem:[#allocation2 + $0xc1] sm:$0xff]
      %v1226 = vld [vmem:[#allocation2 + $0xc9] sm:$0xff]
      %v1227 = vld [vmem:[#allocation2 + $0xd1] sm:$0xff]
      %v1228 = vld [vmem:[#allocation2 + $0xd9] sm:$0xff]
      %v1229 = vld [vmem:[#allocation2 + $0xe1] sm:$0xff]
      %v1230 = vld [vmem:[#allocation2 + $0xe9] sm:$0xff]
      %v1231 = vld [vmem:[#allocation2 + $0xf1] sm:$0xff]
      %v1232 = vld [vmem:[#allocation2 + $0xf9] sm:$0xff]
      %v1233 = vld [vmem:[#allocation2 + $0x101] sm:$0xff]
      %v1234 = vld [vmem:[#allocation2 + $0x109] sm:$0xff]
      %v1235 = vld [vmem:[#allocation2 + $0x111] sm:$0xff]
      %v1236 = vld [vmem:[#allocation2 + $0x119] sm:$0xff]
      %v1237 = vpack.c.bf16 %v1202, %v1201
      %v1238 = vpack.c.bf16 %v1204, %v1203
      %v1239 = vpack.c.bf16 %v1206, %v1205
      %v1240 = vpack.c.bf16 %v1208, %v1207
      %v1241 = vpack.c.bf16 %v1210, %v1209
      %v1242 = vpack.c.bf16 %v1212, %v1211
      %v1243 = vpack.c.bf16 %v1214, %v1213
      %v1244 = vpack.c.bf16 %v1216, %v1215
      %v1245 = vpack.c.bf16 %v1218, %v1217
      %v1246 = vpack.c.bf16 %v1220, %v1219
      %v1247 = vpack.c.bf16 %v1222, %v1221
      %v1248 = vpack.c.bf16 %v1224, %v1223
      %v1249 = vpack.c.bf16 %v1226, %v1225
      %v1250 = vpack.c.bf16 %v1228, %v1227
      %v1251 = vpack.c.bf16 %v1230, %v1229
      %v1252 = vpack.c.bf16 %v1232, %v1231
      %v1253 = vpack.c.bf16 %v1234, %v1233
      %v1254 = vpack.c.bf16 %v1236, %v1235
      %s1255 = scalar_lea.vmem %s3, 16
      %v1256 = vld [vmem:[%s1255] sm:$0xf]
      %v1257 = vld [vmem:[%s1255 + $0x4] sm:$0xf]
      %v1258 = vld [vmem:[%s1255 + $0x8] sm:$0xf]
      %v1259 = vld [vmem:[%s1255 + $0xc] sm:$0xf]
      %v1264 = vunpack.c.l.b16 %v1256
      %v1265 = vunpack.c.l.b16 %v1257
      %v1266 = vunpack.c.l.b16 %v1258
      %v1267 = vunpack.c.l.b16 %v1259
      %v1268 = vpack.c.b16 %v1265, %v1264
      %v1269 = vpack.c.b16 %v1267, %v1266
      %v1273 = vsel %vm1101, %v1237, 0
      %v1276 = vsel %vm1101, %v1238, 0
      %v1279 = vsel %vm1101, %v1239, 0
      %v1282 = vsel %vm1101, %v1240, 0
      %v1285 = vsel %vm1101, %v1241, 0
      %v1288 = vsel %vm1101, %v1242, 0
      %v1291 = vsel %vm1101, %v1243, 0
      %v1294 = vsel %vm1101, %v1244, 0
      %v1297 = vsel %vm1101, %v1245, 0
      %v1300 = vsel %vm1101, %v1246, 0
      %v1303 = vsel %vm1101, %v1247, 0
      %v1306 = vsel %vm1101, %v1248, 0
      %v1309 = vsel %vm1101, %v1249, 0
      %v1312 = vsel %vm1101, %v1250, 0
      %v1315 = vsel %vm1101, %v1251, 0
      %v1318 = vsel %vm1101, %v1252, 0
      %v1321 = vsel %vm1101, %v1253, 0
      %v1324 = vsel %vm1101, %v1254, 0
      %1326 = vmatprep.subr.bf16.mxu0 0
      %1327 = vmatpush1.bf16.msra.mxu0 0
      %1328 = vmatprep.subr.bf16.mxu0 0
      %1329 = vmatpush1.bf16.msra.mxu0 0
      %1330 = vmatprep.subr.bf16.mxu0 0
      %1331 = vmatpush1.bf16.msra.mxu0 0
      %1332 = vmatprep.subr.bf16.mxu0 0
      %1333 = vmatpush1.bf16.msra.mxu0 0
      %1334 = vmatprep.subr.bf16.mxu0 0
      %1335 = vmatpush1.bf16.msra.mxu0 0
      %1336 = vmatprep.subr.bf16.mxu0 0
      %1337 = vmatpush1.bf16.msra.mxu0 0
      %1338 = vmatprep.subr.bf16.mxu0 0
      %1339 = vmatpush1.bf16.msra.mxu0 %v1269
      %1340 = vmatprep.subr.bf16.mxu0 0
      %1341 = vmatpush1.bf16.msra.mxu0 %v1268
      %1342 = vmatprep.subr.bf16.mxu0 0
      %1343 = vmatpush2.bf16.msra.mxu0 0
      %1344 = vmatprep.subr.bf16.mxu0 0
      %1345 = vmatpush2.bf16.msra.mxu0 0
      %1346 = vmatprep.subr.bf16.mxu0 0
      %1347 = vmatpush2.bf16.msra.mxu0 0
      %1348 = vmatprep.subr.bf16.mxu0 0
      %1349 = vmatpush2.bf16.msra.mxu0 0
      %1350 = vmatprep.subr.bf16.mxu0 0
      %1351 = vmatpush2.bf16.msra.mxu0 0
      %1352 = vmatprep.subr.bf16.mxu0 0
      %1353 = vmatpush2.bf16.msra.mxu0 0
      %1354 = vmatprep.subr.bf16.mxu0 0
      %1355 = vmatpush2.bf16.msra.mxu0 0
      %1356 = vmatprep.subr.bf16.mxu0 0
      %1357 = vmatpush2.bf16.msra.mxu0 0
      %1358 = vmatprep.mubr.bf16.mxu0 0
      %1359 = vmatmul.mubr.bf16.gmra.mxu0 %v1273
      %v1360 = vpop.f32.mrf.mxu0
      %v1361 = vadd.f32 0.0, %v1360
      %v1362 = vpop.f32.mrf.mxu0
      %v1363 = vpop.f32.mrf.mxu0
      %v1364 = vadd.f32 0.0, %v1363
      %v1365 = vpop.f32.mrf.mxu0
      %1366 = vmatprep.mubr.bf16.mxu0 0
      %1367 = vmatmul.mubr.bf16.gmra.mxu0 %v1276
      %v1368 = vpop.f32.mrf.mxu0
      %v1369 = vadd.f32 0.0, %v1368
      %v1370 = vpop.f32.mrf.mxu0
      %v1371 = vpop.f32.mrf.mxu0
      %v1372 = vadd.f32 0.0, %v1371
      %v1373 = vpop.f32.mrf.mxu0
      %1374 = vmatprep.mubr.bf16.mxu0 0
      %1375 = vmatmul.mubr.bf16.gmra.mxu0 %v1279
      %v1376 = vpop.f32.mrf.mxu0
      %v1377 = vadd.f32 0.0, %v1376
      %v1378 = vpop.f32.mrf.mxu0
      %v1379 = vpop.f32.mrf.mxu0
      %v1380 = vadd.f32 0.0, %v1379
      %v1381 = vpop.f32.mrf.mxu0
      %1382 = vmatprep.mubr.bf16.mxu0 0
      %1383 = vmatmul.mubr.bf16.gmra.mxu0 %v1282
      %v1384 = vpop.f32.mrf.mxu0
      %v1385 = vadd.f32 0.0, %v1384
      %v1386 = vpop.f32.mrf.mxu0
      %v1387 = vpop.f32.mrf.mxu0
      %v1388 = vadd.f32 0.0, %v1387
      %v1389 = vpop.f32.mrf.mxu0
      %1390 = vmatprep.mubr.bf16.mxu0 0
      %1391 = vmatmul.mubr.bf16.gmra.mxu0 %v1285
      %v1392 = vpop.f32.mrf.mxu0
      %v1393 = vadd.f32 0.0, %v1392
      %v1394 = vpop.f32.mrf.mxu0
      %v1395 = vpop.f32.mrf.mxu0
      %v1396 = vadd.f32 0.0, %v1395
      %v1397 = vpop.f32.mrf.mxu0
      %1398 = vmatprep.mubr.bf16.mxu0 0
      %1399 = vmatmul.mubr.bf16.gmra.mxu0 %v1288
      %v1400 = vpop.f32.mrf.mxu0
      %v1401 = vadd.f32 0.0, %v1400
      %v1402 = vpop.f32.mrf.mxu0
      %v1403 = vpop.f32.mrf.mxu0
      %v1404 = vadd.f32 0.0, %v1403
      %v1405 = vpop.f32.mrf.mxu0
      %1406 = vmatprep.mubr.bf16.mxu0 0
      %1407 = vmatmul.mubr.bf16.gmra.mxu0 %v1291
      %v1408 = vpop.f32.mrf.mxu0
      %v1409 = vadd.f32 0.0, %v1408
      %v1410 = vpop.f32.mrf.mxu0
      %v1411 = vpop.f32.mrf.mxu0
      %v1412 = vadd.f32 0.0, %v1411
      %v1413 = vpop.f32.mrf.mxu0
      %1414 = vmatprep.mubr.bf16.mxu0 0
      %1415 = vmatmul.mubr.bf16.gmra.mxu0 %v1294
      %v1416 = vpop.f32.mrf.mxu0
      %v1417 = vadd.f32 0.0, %v1416
      %v1418 = vpop.f32.mrf.mxu0
      %v1419 = vpop.f32.mrf.mxu0
      %v1420 = vadd.f32 0.0, %v1419
      %v1421 = vpop.f32.mrf.mxu0
      %1422 = vmatprep.mubr.bf16.mxu0 0
      %1423 = vmatmul.mubr.bf16.gmra.mxu0 %v1297
      %v1424 = vpop.f32.mrf.mxu0
      %v1425 = vadd.f32 0.0, %v1424
      %v1426 = vpop.f32.mrf.mxu0
      %v1427 = vpop.f32.mrf.mxu0
      %v1428 = vadd.f32 0.0, %v1427
      %v1429 = vpop.f32.mrf.mxu0
      %1430 = vmatprep.mubr.bf16.mxu0 0
      %1431 = vmatmul.mubr.bf16.gmra.mxu0 %v1300
      %v1432 = vpop.f32.mrf.mxu0
      %v1433 = vadd.f32 0.0, %v1432
      %v1434 = vpop.f32.mrf.mxu0
      %v1435 = vpop.f32.mrf.mxu0
      %v1436 = vadd.f32 0.0, %v1435
      %v1437 = vpop.f32.mrf.mxu0
      %1438 = vmatprep.mubr.bf16.mxu0 0
      %1439 = vmatmul.mubr.bf16.gmra.mxu0 %v1303
      %v1440 = vpop.f32.mrf.mxu0
      %v1441 = vadd.f32 0.0, %v1440
      %v1442 = vpop.f32.mrf.mxu0
      %v1443 = vpop.f32.mrf.mxu0
      %v1444 = vadd.f32 0.0, %v1443
      %v1445 = vpop.f32.mrf.mxu0
      %1446 = vmatprep.mubr.bf16.mxu0 0
      %1447 = vmatmul.mubr.bf16.gmra.mxu0 %v1306
      %v1448 = vpop.f32.mrf.mxu0
      %v1449 = vadd.f32 0.0, %v1448
      %v1450 = vpop.f32.mrf.mxu0
      %v1451 = vpop.f32.mrf.mxu0
      %v1452 = vadd.f32 0.0, %v1451
      %v1453 = vpop.f32.mrf.mxu0
      %1454 = vmatprep.mubr.bf16.mxu0 0
      %1455 = vmatmul.mubr.bf16.gmra.mxu0 %v1309
      %v1456 = vpop.f32.mrf.mxu0
      %v1457 = vadd.f32 0.0, %v1456
      %v1458 = vpop.f32.mrf.mxu0
      %v1459 = vpop.f32.mrf.mxu0
      %v1460 = vadd.f32 0.0, %v1459
      %v1461 = vpop.f32.mrf.mxu0
      %1462 = vmatprep.mubr.bf16.mxu0 0
      %1463 = vmatmul.mubr.bf16.gmra.mxu0 %v1312
      %v1464 = vpop.f32.mrf.mxu0
      %v1465 = vadd.f32 0.0, %v1464
      %v1466 = vpop.f32.mrf.mxu0
      %v1467 = vpop.f32.mrf.mxu0
      %v1468 = vadd.f32 0.0, %v1467
      %v1469 = vpop.f32.mrf.mxu0
      %1470 = vmatprep.mubr.bf16.mxu0 0
      %1471 = vmatmul.mubr.bf16.gmra.mxu0 %v1315
      %v1472 = vpop.f32.mrf.mxu0
      %v1473 = vadd.f32 0.0, %v1472
      %v1474 = vpop.f32.mrf.mxu0
      %v1475 = vpop.f32.mrf.mxu0
      %v1476 = vadd.f32 0.0, %v1475
      %v1477 = vpop.f32.mrf.mxu0
      %1478 = vmatprep.mubr.bf16.mxu0 0
      %1479 = vmatmul.mubr.bf16.gmra.mxu0 %v1318
      %v1480 = vpop.f32.mrf.mxu0
      %v1481 = vadd.f32 0.0, %v1480
      %v1482 = vpop.f32.mrf.mxu0
      %v1483 = vpop.f32.mrf.mxu0
      %v1484 = vadd.f32 0.0, %v1483
      %v1485 = vpop.f32.mrf.mxu0
      %1486 = vmatprep.mubr.bf16.mxu0 0
      %1487 = vmatmul.mubr.bf16.gmra.mxu0 %v1321
      %v1488 = vpop.f32.mrf.mxu0
      %v1489 = vadd.f32 0.0, %v1488
      %v1490 = vpop.f32.mrf.mxu0
      %v1491 = vpop.f32.mrf.mxu0
      %v1492 = vadd.f32 0.0, %v1491
      %v1493 = vpop.f32.mrf.mxu0
      %1494 = vmatprep.mubr.bf16.mxu0 0
      %1495 = vmatmul.mubr.bf16.gmra.mxu0 %v1324
      %v1496 = vpop.f32.mrf.mxu0
      %v1497 = vadd.f32 0.0, %v1496
      %v1498 = vpop.f32.mrf.mxu0
      %v1499 = vpop.f32.mrf.mxu0
      %v1500 = vadd.f32 0.0, %v1499
      %v1501 = vpop.f32.mrf.mxu0
      %1502 = vdwg.mxu0
      %v1507 = vunpack.c.l.b16 %v1197
      %v1508 = vunpack.c.l.b16 %v1198
      %v1509 = vunpack.c.l.b16 %v1199
      %v1510 = vunpack.c.l.b16 %v1200
      %v1511 = vpack.c.b16 %v1508, %v1507
      %v1512 = vpack.c.b16 %v1510, %v1509
      %v1516 = vsel %vm1101, %v1179, 0
      %v1519 = vsel %vm1101, %v1180, 0
      %v1522 = vsel %vm1101, %v1181, 0
      %v1525 = vsel %vm1101, %v1182, 0
      %v1528 = vsel %vm1101, %v1183, 0
      %v1531 = vsel %vm1101, %v1184, 0
      %v1534 = vsel %vm1101, %v1185, 0
      %v1537 = vsel %vm1101, %v1186, 0
      %v1540 = vsel %vm1101, %v1187, 0
      %v1543 = vsel %vm1101, %v1188, 0
      %v1546 = vsel %vm1101, %v1189, 0
      %v1549 = vsel %vm1101, %v1190, 0
      %v1552 = vsel %vm1101, %v1191, 0
      %v1555 = vsel %vm1101, %v1192, 0
      %v1558 = vsel %vm1101, %v1193, 0
      %v1561 = vsel %vm1101, %v1194, 0
      %v1564 = vsel %vm1101, %v1195, 0
      %v1567 = vsel %vm1101, %v1196, 0
      %1569 = vmatprep.subr.bf16.mxu0 0
      %1570 = vmatpush1.bf16.msra.mxu0 0
      %1571 = vmatprep.subr.bf16.mxu0 0
      %1572 = vmatpush1.bf16.msra.mxu0 0
      %1573 = vmatprep.subr.bf16.mxu0 0
      %1574 = vmatpush1.bf16.msra.mxu0 0
      %1575 = vmatprep.subr.bf16.mxu0 0
      %1576 = vmatpush1.bf16.msra.mxu0 0
      %1577 = vmatprep.subr.bf16.mxu0 0
      %1578 = vmatpush1.bf16.msra.mxu0 0
      %1579 = vmatprep.subr.bf16.mxu0 0
      %1580 = vmatpush1.bf16.msra.mxu0 0
      %1581 = vmatprep.subr.bf16.mxu0 0
      %1582 = vmatpush1.bf16.msra.mxu0 %v1512
      %1583 = vmatprep.subr.bf16.mxu0 0
      %1584 = vmatpush1.bf16.msra.mxu0 %v1511
      %1585 = vmatprep.subr.bf16.mxu0 0
      %1586 = vmatpush2.bf16.msra.mxu0 0
      %1587 = vmatprep.subr.bf16.mxu0 0
      %1588 = vmatpush2.bf16.msra.mxu0 0
      %1589 = vmatprep.subr.bf16.mxu0 0
      %1590 = vmatpush2.bf16.msra.mxu0 0
      %1591 = vmatprep.subr.bf16.mxu0 0
      %1592 = vmatpush2.bf16.msra.mxu0 0
      %1593 = vmatprep.subr.bf16.mxu0 0
      %1594 = vmatpush2.bf16.msra.mxu0 0
      %1595 = vmatprep.subr.bf16.mxu0 0
      %1596 = vmatpush2.bf16.msra.mxu0 0
      %1597 = vmatprep.subr.bf16.mxu0 0
      %1598 = vmatpush2.bf16.msra.mxu0 0
      %1599 = vmatprep.subr.bf16.mxu0 0
      %1600 = vmatpush2.bf16.msra.mxu0 0
      %1601 = vmatprep.mubr.bf16.mxu0 0
      %1602 = vmatmul.mubr.bf16.gmra.mxu0 %v1516
      %v1603 = vpop.f32.mrf.mxu0
      %v1604 = vadd.f32 %v1361, %v1603
      %v1605 = vpop.f32.mrf.mxu0
      %v1606 = vpop.f32.mrf.mxu0
      %v1607 = vadd.f32 %v1364, %v1606
      %v1608 = vpop.f32.mrf.mxu0
      %1609 = vmatprep.mubr.bf16.mxu0 0
      %1610 = vmatmul.mubr.bf16.gmra.mxu0 %v1519
      %v1611 = vpop.f32.mrf.mxu0
      %v1612 = vadd.f32 %v1369, %v1611
      %v1613 = vpop.f32.mrf.mxu0
      %v1614 = vpop.f32.mrf.mxu0
      %v1615 = vadd.f32 %v1372, %v1614
      %v1616 = vpop.f32.mrf.mxu0
      %1617 = vmatprep.mubr.bf16.mxu0 0
      %1618 = vmatmul.mubr.bf16.gmra.mxu0 %v1522
      %v1619 = vpop.f32.mrf.mxu0
      %v1620 = vadd.f32 %v1377, %v1619
      %v1621 = vpop.f32.mrf.mxu0
      %v1622 = vpop.f32.mrf.mxu0
      %v1623 = vadd.f32 %v1380, %v1622
      %v1624 = vpop.f32.mrf.mxu0
      %1625 = vmatprep.mubr.bf16.mxu0 0
      %1626 = vmatmul.mubr.bf16.gmra.mxu0 %v1525
      %v1627 = vpop.f32.mrf.mxu0
      %v1628 = vadd.f32 %v1385, %v1627
      %v1629 = vpop.f32.mrf.mxu0
      %v1630 = vpop.f32.mrf.mxu0
      %v1631 = vadd.f32 %v1388, %v1630
      %v1632 = vpop.f32.mrf.mxu0
      %1633 = vmatprep.mubr.bf16.mxu0 0
      %1634 = vmatmul.mubr.bf16.gmra.mxu0 %v1528
      %v1635 = vpop.f32.mrf.mxu0
      %v1636 = vadd.f32 %v1393, %v1635
      %v1637 = vpop.f32.mrf.mxu0
      %v1638 = vpop.f32.mrf.mxu0
      %v1639 = vadd.f32 %v1396, %v1638
      %v1640 = vpop.f32.mrf.mxu0
      %1641 = vmatprep.mubr.bf16.mxu0 0
      %1642 = vmatmul.mubr.bf16.gmra.mxu0 %v1531
      %v1643 = vpop.f32.mrf.mxu0
      %v1644 = vadd.f32 %v1401, %v1643
      %v1645 = vpop.f32.mrf.mxu0
      %v1646 = vpop.f32.mrf.mxu0
      %v1647 = vadd.f32 %v1404, %v1646
      %v1648 = vpop.f32.mrf.mxu0
      %1649 = vmatprep.mubr.bf16.mxu0 0
      %1650 = vmatmul.mubr.bf16.gmra.mxu0 %v1534
      %v1651 = vpop.f32.mrf.mxu0
      %v1652 = vadd.f32 %v1409, %v1651
      %v1653 = vpop.f32.mrf.mxu0
      %v1654 = vpop.f32.mrf.mxu0
      %v1655 = vadd.f32 %v1412, %v1654
      %v1656 = vpop.f32.mrf.mxu0
      %1657 = vmatprep.mubr.bf16.mxu0 0
      %1658 = vmatmul.mubr.bf16.gmra.mxu0 %v1537
      %v1659 = vpop.f32.mrf.mxu0
      %v1660 = vadd.f32 %v1417, %v1659
      %v1661 = vpop.f32.mrf.mxu0
      %v1662 = vpop.f32.mrf.mxu0
      %v1663 = vadd.f32 %v1420, %v1662
      %v1664 = vpop.f32.mrf.mxu0
      %1665 = vmatprep.mubr.bf16.mxu0 0
      %1666 = vmatmul.mubr.bf16.gmra.mxu0 %v1540
      %v1667 = vpop.f32.mrf.mxu0
      %v1668 = vadd.f32 %v1425, %v1667
      %v1669 = vpop.f32.mrf.mxu0
      %v1670 = vpop.f32.mrf.mxu0
      %v1671 = vadd.f32 %v1428, %v1670
      %v1672 = vpop.f32.mrf.mxu0
      %1673 = vmatprep.mubr.bf16.mxu0 0
      %1674 = vmatmul.mubr.bf16.gmra.mxu0 %v1543
      %v1675 = vpop.f32.mrf.mxu0
      %v1676 = vadd.f32 %v1433, %v1675
      %v1677 = vpop.f32.mrf.mxu0
      %v1678 = vpop.f32.mrf.mxu0
      %v1679 = vadd.f32 %v1436, %v1678
      %v1680 = vpop.f32.mrf.mxu0
      %1681 = vmatprep.mubr.bf16.mxu0 0
      %1682 = vmatmul.mubr.bf16.gmra.mxu0 %v1546
      %v1683 = vpop.f32.mrf.mxu0
      %v1684 = vadd.f32 %v1441, %v1683
      %v1685 = vpop.f32.mrf.mxu0
      %v1686 = vpop.f32.mrf.mxu0
      %v1687 = vadd.f32 %v1444, %v1686
      %v1688 = vpop.f32.mrf.mxu0
      %1689 = vmatprep.mubr.bf16.mxu0 0
      %1690 = vmatmul.mubr.bf16.gmra.mxu0 %v1549
      %v1691 = vpop.f32.mrf.mxu0
      %v1692 = vadd.f32 %v1449, %v1691
      %v1693 = vpop.f32.mrf.mxu0
      %v1694 = vpop.f32.mrf.mxu0
      %v1695 = vadd.f32 %v1452, %v1694
      %v1696 = vpop.f32.mrf.mxu0
      %1697 = vmatprep.mubr.bf16.mxu0 0
      %1698 = vmatmul.mubr.bf16.gmra.mxu0 %v1552
      %v1699 = vpop.f32.mrf.mxu0
      %v1700 = vadd.f32 %v1457, %v1699
      %v1701 = vpop.f32.mrf.mxu0
      %v1702 = vpop.f32.mrf.mxu0
      %v1703 = vadd.f32 %v1460, %v1702
      %v1704 = vpop.f32.mrf.mxu0
      %1705 = vmatprep.mubr.bf16.mxu0 0
      %1706 = vmatmul.mubr.bf16.gmra.mxu0 %v1555
      %v1707 = vpop.f32.mrf.mxu0
      %v1708 = vadd.f32 %v1465, %v1707
      %v1709 = vpop.f32.mrf.mxu0
      %v1710 = vpop.f32.mrf.mxu0
      %v1711 = vadd.f32 %v1468, %v1710
      %v1712 = vpop.f32.mrf.mxu0
      %1713 = vmatprep.mubr.bf16.mxu0 0
      %1714 = vmatmul.mubr.bf16.gmra.mxu0 %v1558
      %v1715 = vpop.f32.mrf.mxu0
      %v1716 = vadd.f32 %v1473, %v1715
      %v1717 = vpop.f32.mrf.mxu0
      %v1718 = vpop.f32.mrf.mxu0
      %v1719 = vadd.f32 %v1476, %v1718
      %v1720 = vpop.f32.mrf.mxu0
      %1721 = vmatprep.mubr.bf16.mxu0 0
      %1722 = vmatmul.mubr.bf16.gmra.mxu0 %v1561
      %v1723 = vpop.f32.mrf.mxu0
      %v1724 = vadd.f32 %v1481, %v1723
      %v1725 = vpop.f32.mrf.mxu0
      %v1726 = vpop.f32.mrf.mxu0
      %v1727 = vadd.f32 %v1484, %v1726
      %v1728 = vpop.f32.mrf.mxu0
      %1729 = vmatprep.mubr.bf16.mxu0 0
      %1730 = vmatmul.mubr.bf16.gmra.mxu0 %v1564
      %v1731 = vpop.f32.mrf.mxu0
      %v1732 = vadd.f32 %v1489, %v1731
      %v1733 = vpop.f32.mrf.mxu0
      %v1734 = vpop.f32.mrf.mxu0
      %v1735 = vadd.f32 %v1492, %v1734
      %v1736 = vpop.f32.mrf.mxu0
      %1737 = vmatprep.mubr.bf16.mxu0 0
      %1738 = vmatmul.mubr.bf16.gmra.mxu0 %v1567
      %v1739 = vpop.f32.mrf.mxu0
      %v1740 = vadd.f32 %v1497, %v1739
      %v1741 = vpop.f32.mrf.mxu0
      %v1742 = vpop.f32.mrf.mxu0
      %v1743 = vadd.f32 %v1500, %v1742
      %v1744 = vpop.f32.mrf.mxu0
      %1745 = vdwg.mxu0
      %v1746 = vld [vmem:[#allocation2 + $0x2] sm:$0xff]
      %v1747 = vld [vmem:[#allocation2 + $0xa] sm:$0xff]
      %v1748 = vld [vmem:[#allocation2 + $0x12] sm:$0xff]
      %v1749 = vld [vmem:[#allocation2 + $0x1a] sm:$0xff]
      %v1750 = vld [vmem:[#allocation2 + $0x22] sm:$0xff]
      %v1751 = vld [vmem:[#allocation2 + $0x2a] sm:$0xff]
      %v1752 = vld [vmem:[#allocation2 + $0x32] sm:$0xff]
      %v1753 = vld [vmem:[#allocation2 + $0x3a] sm:$0xff]
      %v1754 = vld [vmem:[#allocation2 + $0x42] sm:$0xff]
      %v1755 = vld [vmem:[#allocation2 + $0x4a] sm:$0xff]
      %v1756 = vld [vmem:[#allocation2 + $0x52] sm:$0xff]
      %v1757 = vld [vmem:[#allocation2 + $0x5a] sm:$0xff]
      %v1758 = vld [vmem:[#allocation2 + $0x62] sm:$0xff]
      %v1759 = vld [vmem:[#allocation2 + $0x6a] sm:$0xff]
      %v1760 = vld [vmem:[#allocation2 + $0x72] sm:$0xff]
      %v1761 = vld [vmem:[#allocation2 + $0x7a] sm:$0xff]
      %v1762 = vld [vmem:[#allocation2 + $0x82] sm:$0xff]
      %v1763 = vld [vmem:[#allocation2 + $0x8a] sm:$0xff]
      %v1764 = vld [vmem:[#allocation2 + $0x92] sm:$0xff]
      %v1765 = vld [vmem:[#allocation2 + $0x9a] sm:$0xff]
      %v1766 = vld [vmem:[#allocation2 + $0xa2] sm:$0xff]
      %v1767 = vld [vmem:[#allocation2 + $0xaa] sm:$0xff]
      %v1768 = vld [vmem:[#allocation2 + $0xb2] sm:$0xff]
      %v1769 = vld [vmem:[#allocation2 + $0xba] sm:$0xff]
      %v1770 = vld [vmem:[#allocation2 + $0xc2] sm:$0xff]
      %v1771 = vld [vmem:[#allocation2 + $0xca] sm:$0xff]
      %v1772 = vld [vmem:[#allocation2 + $0xd2] sm:$0xff]
      %v1773 = vld [vmem:[#allocation2 + $0xda] sm:$0xff]
      %v1774 = vld [vmem:[#allocation2 + $0xe2] sm:$0xff]
      %v1775 = vld [vmem:[#allocation2 + $0xea] sm:$0xff]
      %v1776 = vld [vmem:[#allocation2 + $0xf2] sm:$0xff]
      %v1777 = vld [vmem:[#allocation2 + $0xfa] sm:$0xff]
      %v1778 = vld [vmem:[#allocation2 + $0x102] sm:$0xff]
      %v1779 = vld [vmem:[#allocation2 + $0x10a] sm:$0xff]
      %v1780 = vld [vmem:[#allocation2 + $0x112] sm:$0xff]
      %v1781 = vld [vmem:[#allocation2 + $0x11a] sm:$0xff]
      %v1782 = vpack.c.bf16 %v1747, %v1746
      %v1783 = vpack.c.bf16 %v1749, %v1748
      %v1784 = vpack.c.bf16 %v1751, %v1750
      %v1785 = vpack.c.bf16 %v1753, %v1752
      %v1786 = vpack.c.bf16 %v1755, %v1754
      %v1787 = vpack.c.bf16 %v1757, %v1756
      %v1788 = vpack.c.bf16 %v1759, %v1758
      %v1789 = vpack.c.bf16 %v1761, %v1760
      %v1790 = vpack.c.bf16 %v1763, %v1762
      %v1791 = vpack.c.bf16 %v1765, %v1764
      %v1792 = vpack.c.bf16 %v1767, %v1766
      %v1793 = vpack.c.bf16 %v1769, %v1768
      %v1794 = vpack.c.bf16 %v1771, %v1770
      %v1795 = vpack.c.bf16 %v1773, %v1772
      %v1796 = vpack.c.bf16 %v1775, %v1774
      %v1797 = vpack.c.bf16 %v1777, %v1776
      %v1798 = vpack.c.bf16 %v1779, %v1778
      %v1799 = vpack.c.bf16 %v1781, %v1780
      %s1800 = scalar_lea.vmem %s3, 32
      %v1801 = vld [vmem:[%s1800] sm:$0xf]
      %v1802 = vld [vmem:[%s1800 + $0x4] sm:$0xf]
      %v1803 = vld [vmem:[%s1800 + $0x8] sm:$0xf]
      %v1804 = vld [vmem:[%s1800 + $0xc] sm:$0xf]
      %v1809 = vunpack.c.l.b16 %v1801
      %v1810 = vunpack.c.l.b16 %v1802
      %v1811 = vunpack.c.l.b16 %v1803
      %v1812 = vunpack.c.l.b16 %v1804
      %v1813 = vpack.c.b16 %v1810, %v1809
      %v1814 = vpack.c.b16 %v1812, %v1811
      %v1818 = vsel %vm1101, %v1782, 0
      %v1821 = vsel %vm1101, %v1783, 0
      %v1824 = vsel %vm1101, %v1784, 0
      %v1827 = vsel %vm1101, %v1785, 0
      %v1830 = vsel %vm1101, %v1786, 0
      %v1833 = vsel %vm1101, %v1787, 0
      %v1836 = vsel %vm1101, %v1788, 0
      %v1839 = vsel %vm1101, %v1789, 0
      %v1842 = vsel %vm1101, %v1790, 0
      %v1845 = vsel %vm1101, %v1791, 0
      %v1848 = vsel %vm1101, %v1792, 0
      %v1851 = vsel %vm1101, %v1793, 0
      %v1854 = vsel %vm1101, %v1794, 0
      %v1857 = vsel %vm1101, %v1795, 0
      %v1860 = vsel %vm1101, %v1796, 0
      %v1863 = vsel %vm1101, %v1797, 0
      %v1866 = vsel %vm1101, %v1798, 0
      %v1869 = vsel %vm1101, %v1799, 0
      %1871 = vmatprep.subr.bf16.mxu0 0
      %1872 = vmatpush1.bf16.msra.mxu0 0
      %1873 = vmatprep.subr.bf16.mxu0 0
      %1874 = vmatpush1.bf16.msra.mxu0 0
      %1875 = vmatprep.subr.bf16.mxu0 0
      %1876 = vmatpush1.bf16.msra.mxu0 0
      %1877 = vmatprep.subr.bf16.mxu0 0
      %1878 = vmatpush1.bf16.msra.mxu0 0
      %1879 = vmatprep.subr.bf16.mxu0 0
      %1880 = vmatpush1.bf16.msra.mxu0 0
      %1881 = vmatprep.subr.bf16.mxu0 0
      %1882 = vmatpush1.bf16.msra.mxu0 0
      %1883 = vmatprep.subr.bf16.mxu0 0
      %1884 = vmatpush1.bf16.msra.mxu0 %v1814
      %1885 = vmatprep.subr.bf16.mxu0 0
      %1886 = vmatpush1.bf16.msra.mxu0 %v1813
      %1887 = vmatprep.subr.bf16.mxu0 0
      %1888 = vmatpush2.bf16.msra.mxu0 0
      %1889 = vmatprep.subr.bf16.mxu0 0
      %1890 = vmatpush2.bf16.msra.mxu0 0
      %1891 = vmatprep.subr.bf16.mxu0 0
      %1892 = vmatpush2.bf16.msra.mxu0 0
      %1893 = vmatprep.subr.bf16.mxu0 0
      %1894 = vmatpush2.bf16.msra.mxu0 0
      %1895 = vmatprep.subr.bf16.mxu0 0
      %1896 = vmatpush2.bf16.msra.mxu0 0
      %1897 = vmatprep.subr.bf16.mxu0 0
      %1898 = vmatpush2.bf16.msra.mxu0 0
      %1899 = vmatprep.subr.bf16.mxu0 0
      %1900 = vmatpush2.bf16.msra.mxu0 0
      %1901 = vmatprep.subr.bf16.mxu0 0
      %1902 = vmatpush2.bf16.msra.mxu0 0
      %1903 = vmatprep.mubr.bf16.mxu0 0
      %1904 = vmatmul.mubr.bf16.gmra.mxu0 %v1818
      %v1905 = vpop.f32.mrf.mxu0
      %v1906 = vadd.f32 0.0, %v1905
      %v1907 = vpop.f32.mrf.mxu0
      %v1908 = vpop.f32.mrf.mxu0
      %v1909 = vadd.f32 0.0, %v1908
      %v1910 = vpop.f32.mrf.mxu0
      %1911 = vmatprep.mubr.bf16.mxu0 0
      %1912 = vmatmul.mubr.bf16.gmra.mxu0 %v1821
      %v1913 = vpop.f32.mrf.mxu0
      %v1914 = vadd.f32 0.0, %v1913
      %v1915 = vpop.f32.mrf.mxu0
      %v1916 = vpop.f32.mrf.mxu0
      %v1917 = vadd.f32 0.0, %v1916
      %v1918 = vpop.f32.mrf.mxu0
      %1919 = vmatprep.mubr.bf16.mxu0 0
      %1920 = vmatmul.mubr.bf16.gmra.mxu0 %v1824
      %v1921 = vpop.f32.mrf.mxu0
      %v1922 = vadd.f32 0.0, %v1921
      %v1923 = vpop.f32.mrf.mxu0
      %v1924 = vpop.f32.mrf.mxu0
      %v1925 = vadd.f32 0.0, %v1924
      %v1926 = vpop.f32.mrf.mxu0
      %1927 = vmatprep.mubr.bf16.mxu0 0
      %1928 = vmatmul.mubr.bf16.gmra.mxu0 %v1827
      %v1929 = vpop.f32.mrf.mxu0
      %v1930 = vadd.f32 0.0, %v1929
      %v1931 = vpop.f32.mrf.mxu0
      %v1932 = vpop.f32.mrf.mxu0
      %v1933 = vadd.f32 0.0, %v1932
      %v1934 = vpop.f32.mrf.mxu0
      %1935 = vmatprep.mubr.bf16.mxu0 0
      %1936 = vmatmul.mubr.bf16.gmra.mxu0 %v1830
      %v1937 = vpop.f32.mrf.mxu0
      %v1938 = vadd.f32 0.0, %v1937
      %v1939 = vpop.f32.mrf.mxu0
      %v1940 = vpop.f32.mrf.mxu0
      %v1941 = vadd.f32 0.0, %v1940
      %v1942 = vpop.f32.mrf.mxu0
      %1943 = vmatprep.mubr.bf16.mxu0 0
      %1944 = vmatmul.mubr.bf16.gmra.mxu0 %v1833
      %v1945 = vpop.f32.mrf.mxu0
      %v1946 = vadd.f32 0.0, %v1945
      %v1947 = vpop.f32.mrf.mxu0
      %v1948 = vpop.f32.mrf.mxu0
      %v1949 = vadd.f32 0.0, %v1948
      %v1950 = vpop.f32.mrf.mxu0
      %1951 = vmatprep.mubr.bf16.mxu0 0
      %1952 = vmatmul.mubr.bf16.gmra.mxu0 %v1836
      %v1953 = vpop.f32.mrf.mxu0
      %v1954 = vadd.f32 0.0, %v1953
      %v1955 = vpop.f32.mrf.mxu0
      %v1956 = vpop.f32.mrf.mxu0
      %v1957 = vadd.f32 0.0, %v1956
      %v1958 = vpop.f32.mrf.mxu0
      %1959 = vmatprep.mubr.bf16.mxu0 0
      %1960 = vmatmul.mubr.bf16.gmra.mxu0 %v1839
      %v1961 = vpop.f32.mrf.mxu0
      %v1962 = vadd.f32 0.0, %v1961
      %v1963 = vpop.f32.mrf.mxu0
      %v1964 = vpop.f32.mrf.mxu0
      %v1965 = vadd.f32 0.0, %v1964
      %v1966 = vpop.f32.mrf.mxu0
      %1967 = vmatprep.mubr.bf16.mxu0 0
      %1968 = vmatmul.mubr.bf16.gmra.mxu0 %v1842
      %v1969 = vpop.f32.mrf.mxu0
      %v1970 = vadd.f32 0.0, %v1969
      %v1971 = vpop.f32.mrf.mxu0
      %v1972 = vpop.f32.mrf.mxu0
      %v1973 = vadd.f32 0.0, %v1972
      %v1974 = vpop.f32.mrf.mxu0
      %1975 = vmatprep.mubr.bf16.mxu0 0
      %1976 = vmatmul.mubr.bf16.gmra.mxu0 %v1845
      %v1977 = vpop.f32.mrf.mxu0
      %v1978 = vadd.f32 0.0, %v1977
      %v1979 = vpop.f32.mrf.mxu0
      %v1980 = vpop.f32.mrf.mxu0
      %v1981 = vadd.f32 0.0, %v1980
      %v1982 = vpop.f32.mrf.mxu0
      %1983 = vmatprep.mubr.bf16.mxu0 0
      %1984 = vmatmul.mubr.bf16.gmra.mxu0 %v1848
      %v1985 = vpop.f32.mrf.mxu0
      %v1986 = vadd.f32 0.0, %v1985
      %v1987 = vpop.f32.mrf.mxu0
      %v1988 = vpop.f32.mrf.mxu0
      %v1989 = vadd.f32 0.0, %v1988
      %v1990 = vpop.f32.mrf.mxu0
      %1991 = vmatprep.mubr.bf16.mxu0 0
      %1992 = vmatmul.mubr.bf16.gmra.mxu0 %v1851
      %v1993 = vpop.f32.mrf.mxu0
      %v1994 = vadd.f32 0.0, %v1993
      %v1995 = vpop.f32.mrf.mxu0
      %v1996 = vpop.f32.mrf.mxu0
      %v1997 = vadd.f32 0.0, %v1996
      %v1998 = vpop.f32.mrf.mxu0
      %1999 = vmatprep.mubr.bf16.mxu0 0
      %2000 = vmatmul.mubr.bf16.gmra.mxu0 %v1854
      %v2001 = vpop.f32.mrf.mxu0
      %v2002 = vadd.f32 0.0, %v2001
      %v2003 = vpop.f32.mrf.mxu0
      %v2004 = vpop.f32.mrf.mxu0
      %v2005 = vadd.f32 0.0, %v2004
      %v2006 = vpop.f32.mrf.mxu0
      %2007 = vmatprep.mubr.bf16.mxu0 0
      %2008 = vmatmul.mubr.bf16.gmra.mxu0 %v1857
      %v2009 = vpop.f32.mrf.mxu0
      %v2010 = vadd.f32 0.0, %v2009
      %v2011 = vpop.f32.mrf.mxu0
      %v2012 = vpop.f32.mrf.mxu0
      %v2013 = vadd.f32 0.0, %v2012
      %v2014 = vpop.f32.mrf.mxu0
      %2015 = vmatprep.mubr.bf16.mxu0 0
      %2016 = vmatmul.mubr.bf16.gmra.mxu0 %v1860
      %v2017 = vpop.f32.mrf.mxu0
      %v2018 = vadd.f32 0.0, %v2017
      %v2019 = vpop.f32.mrf.mxu0
      %v2020 = vpop.f32.mrf.mxu0
      %v2021 = vadd.f32 0.0, %v2020
      %v2022 = vpop.f32.mrf.mxu0
      %2023 = vmatprep.mubr.bf16.mxu0 0
      %2024 = vmatmul.mubr.bf16.gmra.mxu0 %v1863
      %v2025 = vpop.f32.mrf.mxu0
      %v2026 = vadd.f32 0.0, %v2025
      %v2027 = vpop.f32.mrf.mxu0
      %v2028 = vpop.f32.mrf.mxu0
      %v2029 = vadd.f32 0.0, %v2028
      %v2030 = vpop.f32.mrf.mxu0
      %2031 = vmatprep.mubr.bf16.mxu0 0
      %2032 = vmatmul.mubr.bf16.gmra.mxu0 %v1866
      %v2033 = vpop.f32.mrf.mxu0
      %v2034 = vadd.f32 0.0, %v2033
      %v2035 = vpop.f32.mrf.mxu0
      %v2036 = vpop.f32.mrf.mxu0
      %v2037 = vadd.f32 0.0, %v2036
      %v2038 = vpop.f32.mrf.mxu0
      %2039 = vmatprep.mubr.bf16.mxu0 0
      %2040 = vmatmul.mubr.bf16.gmra.mxu0 %v1869
      %v2041 = vpop.f32.mrf.mxu0
      %v2042 = vadd.f32 0.0, %v2041
      %v2043 = vpop.f32.mrf.mxu0
      %v2044 = vpop.f32.mrf.mxu0
      %v2045 = vadd.f32 0.0, %v2044
      %v2046 = vpop.f32.mrf.mxu0
      %2047 = vdwg.mxu0
      %v2048 = vadd.f32 %v1604, %v1906
      %v2049 = vadd.f32 %v1607, %v1909
      %v2050 = vadd.f32 %v1612, %v1914
      %v2051 = vadd.f32 %v1615, %v1917
      %v2052 = vadd.f32 %v1620, %v1922
      %v2053 = vadd.f32 %v1623, %v1925
      %v2054 = vadd.f32 %v1628, %v1930
      %v2055 = vadd.f32 %v1631, %v1933
      %v2056 = vadd.f32 %v1636, %v1938
      %v2057 = vadd.f32 %v1639, %v1941
      %v2058 = vadd.f32 %v1644, %v1946
      %v2059 = vadd.f32 %v1647, %v1949
      %v2060 = vadd.f32 %v1652, %v1954
      %v2061 = vadd.f32 %v1655, %v1957
      %v2062 = vadd.f32 %v1660, %v1962
      %v2063 = vadd.f32 %v1663, %v1965
      %v2064 = vadd.f32 %v1668, %v1970
      %v2065 = vadd.f32 %v1671, %v1973
      %v2066 = vadd.f32 %v1676, %v1978
      %v2067 = vadd.f32 %v1679, %v1981
      %v2068 = vadd.f32 %v1684, %v1986
      %v2069 = vadd.f32 %v1687, %v1989
      %v2070 = vadd.f32 %v1692, %v1994
      %v2071 = vadd.f32 %v1695, %v1997
      %v2072 = vadd.f32 %v1700, %v2002
      %v2073 = vadd.f32 %v1703, %v2005
      %v2074 = vadd.f32 %v1708, %v2010
      %v2075 = vadd.f32 %v1711, %v2013
      %v2076 = vadd.f32 %v1716, %v2018
      %v2077 = vadd.f32 %v1719, %v2021
      %v2078 = vadd.f32 %v1724, %v2026
      %v2079 = vadd.f32 %v1727, %v2029
      %v2080 = vadd.f32 %v1732, %v2034
      %v2081 = vadd.f32 %v1735, %v2037
      %v2082 = vadd.f32 %v1740, %v2042
      %v2083 = vadd.f32 %v1743, %v2045
      %v2084 = vld [vmem:[#allocation2 + $0x12] sm:$0xff]
      %v2085 = vld [vmem:[#allocation2 + $0x1a] sm:$0xff]
      %v2086 = vld [vmem:[#allocation2 + $0x22] sm:$0xff]
      %v2087 = vld [vmem:[#allocation2 + $0x2a] sm:$0xff]
      %v2088 = vld [vmem:[#allocation2 + $0x32] sm:$0xff]
      %v2089 = vld [vmem:[#allocation2 + $0x3a] sm:$0xff]
      %v2090 = vld [vmem:[#allocation2 + $0x42] sm:$0xff]
      %v2091 = vld [vmem:[#allocation2 + $0x4a] sm:$0xff]
      %v2092 = vld [vmem:[#allocation2 + $0x52] sm:$0xff]
      %v2093 = vld [vmem:[#allocation2 + $0x5a] sm:$0xff]
      %v2094 = vld [vmem:[#allocation2 + $0x62] sm:$0xff]
      %v2095 = vld [vmem:[#allocation2 + $0x6a] sm:$0xff]
      %v2096 = vld [vmem:[#allocation2 + $0x72] sm:$0xff]
      %v2097 = vld [vmem:[#allocation2 + $0x7a] sm:$0xff]
      %v2098 = vld [vmem:[#allocation2 + $0x82] sm:$0xff]
      %v2099 = vld [vmem:[#allocation2 + $0x8a] sm:$0xff]
      %v2100 = vld [vmem:[#allocation2 + $0x92] sm:$0xff]
      %v2101 = vld [vmem:[#allocation2 + $0x9a] sm:$0xff]
      %v2102 = vld [vmem:[#allocation2 + $0xa2] sm:$0xff]
      %v2103 = vld [vmem:[#allocation2 + $0xaa] sm:$0xff]
      %v2104 = vld [vmem:[#allocation2 + $0xb2] sm:$0xff]
      %v2105 = vld [vmem:[#allocation2 + $0xba] sm:$0xff]
      %v2106 = vld [vmem:[#allocation2 + $0xc2] sm:$0xff]
      %v2107 = vld [vmem:[#allocation2 + $0xca] sm:$0xff]
      %v2108 = vld [vmem:[#allocation2 + $0xd2] sm:$0xff]
      %v2109 = vld [vmem:[#allocation2 + $0xda] sm:$0xff]
      %v2110 = vld [vmem:[#allocation2 + $0xe2] sm:$0xff]
      %v2111 = vld [vmem:[#allocation2 + $0xea] sm:$0xff]
      %v2112 = vld [vmem:[#allocation2 + $0xf2] sm:$0xff]
      %v2113 = vld [vmem:[#allocation2 + $0xfa] sm:$0xff]
      %v2114 = vld [vmem:[#allocation2 + $0x102] sm:$0xff]
      %v2115 = vld [vmem:[#allocation2 + $0x10a] sm:$0xff]
      %v2116 = vld [vmem:[#allocation2 + $0x112] sm:$0xff]
      %v2117 = vld [vmem:[#allocation2 + $0x11a] sm:$0xff]
      %v2118 = vld [vmem:[#allocation2 + $0x122] sm:$0xff]
      %v2119 = vld [vmem:[#allocation2 + $0x12a] sm:$0xff]
      %v2120 = vpack.c.bf16 %v2085, %v2084
      %v2121 = vpack.c.bf16 %v2087, %v2086
      %v2122 = vpack.c.bf16 %v2089, %v2088
      %v2123 = vpack.c.bf16 %v2091, %v2090
      %v2124 = vpack.c.bf16 %v2093, %v2092
      %v2125 = vpack.c.bf16 %v2095, %v2094
      %v2126 = vpack.c.bf16 %v2097, %v2096
      %v2127 = vpack.c.bf16 %v2099, %v2098
      %v2128 = vpack.c.bf16 %v2101, %v2100
      %v2129 = vpack.c.bf16 %v2103, %v2102
      %v2130 = vpack.c.bf16 %v2105, %v2104
      %v2131 = vpack.c.bf16 %v2107, %v2106
      %v2132 = vpack.c.bf16 %v2109, %v2108
      %v2133 = vpack.c.bf16 %v2111, %v2110
      %v2134 = vpack.c.bf16 %v2113, %v2112
      %v2135 = vpack.c.bf16 %v2115, %v2114
      %v2136 = vpack.c.bf16 %v2117, %v2116
      %v2137 = vpack.c.bf16 %v2119, %v2118
      %s2138 = scalar_lea.vmem %s3, 48
      %v2139 = vld [vmem:[%s2138] sm:$0xf]
      %v2140 = vld [vmem:[%s2138 + $0x4] sm:$0xf]
      %v2141 = vld [vmem:[%s2138 + $0x8] sm:$0xf]
      %v2142 = vld [vmem:[%s2138 + $0xc] sm:$0xf]
      %v2147 = vunpack.c.l.b16 %v2139
      %v2148 = vunpack.c.l.b16 %v2140
      %v2149 = vunpack.c.l.b16 %v2141
      %v2150 = vunpack.c.l.b16 %v2142
      %v2151 = vpack.c.b16 %v2148, %v2147
      %v2152 = vpack.c.b16 %v2150, %v2149
      %v2156 = vsel %vm1101, %v2120, 0
      %v2159 = vsel %vm1101, %v2121, 0
      %v2162 = vsel %vm1101, %v2122, 0
      %v2165 = vsel %vm1101, %v2123, 0
      %v2168 = vsel %vm1101, %v2124, 0
      %v2171 = vsel %vm1101, %v2125, 0
      %v2174 = vsel %vm1101, %v2126, 0
      %v2177 = vsel %vm1101, %v2127, 0
      %v2180 = vsel %vm1101, %v2128, 0
      %v2183 = vsel %vm1101, %v2129, 0
      %v2186 = vsel %vm1101, %v2130, 0
      %v2189 = vsel %vm1101, %v2131, 0
      %v2192 = vsel %vm1101, %v2132, 0
      %v2195 = vsel %vm1101, %v2133, 0
      %v2198 = vsel %vm1101, %v2134, 0
      %v2201 = vsel %vm1101, %v2135, 0
      %v2204 = vsel %vm1101, %v2136, 0
      %v2207 = vsel %vm1101, %v2137, 0
      %2209 = vmatprep.subr.bf16.mxu0 0
      %2210 = vmatpush1.bf16.msra.mxu0 0
      %2211 = vmatprep.subr.bf16.mxu0 0
      %2212 = vmatpush1.bf16.msra.mxu0 0
      %2213 = vmatprep.subr.bf16.mxu0 0
      %2214 = vmatpush1.bf16.msra.mxu0 0
      %2215 = vmatprep.subr.bf16.mxu0 0
      %2216 = vmatpush1.bf16.msra.mxu0 0
      %2217 = vmatprep.subr.bf16.mxu0 0
      %2218 = vmatpush1.bf16.msra.mxu0 0
      %2219 = vmatprep.subr.bf16.mxu0 0
      %2220 = vmatpush1.bf16.msra.mxu0 0
      %2221 = vmatprep.subr.bf16.mxu0 0
      %2222 = vmatpush1.bf16.msra.mxu0 %v2152
      %2223 = vmatprep.subr.bf16.mxu0 0
      %2224 = vmatpush1.bf16.msra.mxu0 %v2151
      %2225 = vmatprep.subr.bf16.mxu0 0
      %2226 = vmatpush2.bf16.msra.mxu0 0
      %2227 = vmatprep.subr.bf16.mxu0 0
      %2228 = vmatpush2.bf16.msra.mxu0 0
      %2229 = vmatprep.subr.bf16.mxu0 0
      %2230 = vmatpush2.bf16.msra.mxu0 0
      %2231 = vmatprep.subr.bf16.mxu0 0
      %2232 = vmatpush2.bf16.msra.mxu0 0
      %2233 = vmatprep.subr.bf16.mxu0 0
      %2234 = vmatpush2.bf16.msra.mxu0 0
      %2235 = vmatprep.subr.bf16.mxu0 0
      %2236 = vmatpush2.bf16.msra.mxu0 0
      %2237 = vmatprep.subr.bf16.mxu0 0
      %2238 = vmatpush2.bf16.msra.mxu0 0
      %2239 = vmatprep.subr.bf16.mxu0 0
      %2240 = vmatpush2.bf16.msra.mxu0 0
      %2241 = vmatprep.mubr.bf16.mxu0 0
      %2242 = vmatmul.mubr.bf16.gmra.mxu0 %v2156
      %v2243 = vpop.f32.mrf.mxu0
      %v2244 = vadd.f32 0.0, %v2243
      %v2245 = vpop.f32.mrf.mxu0
      %v2246 = vpop.f32.mrf.mxu0
      %v2247 = vadd.f32 0.0, %v2246
      %v2248 = vpop.f32.mrf.mxu0
      %2249 = vmatprep.mubr.bf16.mxu0 0
      %2250 = vmatmul.mubr.bf16.gmra.mxu0 %v2159
      %v2251 = vpop.f32.mrf.mxu0
      %v2252 = vadd.f32 0.0, %v2251
      %v2253 = vpop.f32.mrf.mxu0
      %v2254 = vpop.f32.mrf.mxu0
      %v2255 = vadd.f32 0.0, %v2254
      %v2256 = vpop.f32.mrf.mxu0
      %2257 = vmatprep.mubr.bf16.mxu0 0
      %2258 = vmatmul.mubr.bf16.gmra.mxu0 %v2162
      %v2259 = vpop.f32.mrf.mxu0
      %v2260 = vadd.f32 0.0, %v2259
      %v2261 = vpop.f32.mrf.mxu0
      %v2262 = vpop.f32.mrf.mxu0
      %v2263 = vadd.f32 0.0, %v2262
      %v2264 = vpop.f32.mrf.mxu0
      %2265 = vmatprep.mubr.bf16.mxu0 0
      %2266 = vmatmul.mubr.bf16.gmra.mxu0 %v2165
      %v2267 = vpop.f32.mrf.mxu0
      %v2268 = vadd.f32 0.0, %v2267
      %v2269 = vpop.f32.mrf.mxu0
      %v2270 = vpop.f32.mrf.mxu0
      %v2271 = vadd.f32 0.0, %v2270
      %v2272 = vpop.f32.mrf.mxu0
      %2273 = vmatprep.mubr.bf16.mxu0 0
      %2274 = vmatmul.mubr.bf16.gmra.mxu0 %v2168
      %v2275 = vpop.f32.mrf.mxu0
      %v2276 = vadd.f32 0.0, %v2275
      %v2277 = vpop.f32.mrf.mxu0
      %v2278 = vpop.f32.mrf.mxu0
      %v2279 = vadd.f32 0.0, %v2278
      %v2280 = vpop.f32.mrf.mxu0
      %2281 = vmatprep.mubr.bf16.mxu0 0
      %2282 = vmatmul.mubr.bf16.gmra.mxu0 %v2171
      %v2283 = vpop.f32.mrf.mxu0
      %v2284 = vadd.f32 0.0, %v2283
      %v2285 = vpop.f32.mrf.mxu0
      %v2286 = vpop.f32.mrf.mxu0
      %v2287 = vadd.f32 0.0, %v2286
      %v2288 = vpop.f32.mrf.mxu0
      %2289 = vmatprep.mubr.bf16.mxu0 0
      %2290 = vmatmul.mubr.bf16.gmra.mxu0 %v2174
      %v2291 = vpop.f32.mrf.mxu0
      %v2292 = vadd.f32 0.0, %v2291
      %v2293 = vpop.f32.mrf.mxu0
      %v2294 = vpop.f32.mrf.mxu0
      %v2295 = vadd.f32 0.0, %v2294
      %v2296 = vpop.f32.mrf.mxu0
      %2297 = vmatprep.mubr.bf16.mxu0 0
      %2298 = vmatmul.mubr.bf16.gmra.mxu0 %v2177
      %v2299 = vpop.f32.mrf.mxu0
      %v2300 = vadd.f32 0.0, %v2299
      %v2301 = vpop.f32.mrf.mxu0
      %v2302 = vpop.f32.mrf.mxu0
      %v2303 = vadd.f32 0.0, %v2302
      %v2304 = vpop.f32.mrf.mxu0
      %2305 = vmatprep.mubr.bf16.mxu0 0
      %2306 = vmatmul.mubr.bf16.gmra.mxu0 %v2180
      %v2307 = vpop.f32.mrf.mxu0
      %v2308 = vadd.f32 0.0, %v2307
      %v2309 = vpop.f32.mrf.mxu0
      %v2310 = vpop.f32.mrf.mxu0
      %v2311 = vadd.f32 0.0, %v2310
      %v2312 = vpop.f32.mrf.mxu0
      %2313 = vmatprep.mubr.bf16.mxu0 0
      %2314 = vmatmul.mubr.bf16.gmra.mxu0 %v2183
      %v2315 = vpop.f32.mrf.mxu0
      %v2316 = vadd.f32 0.0, %v2315
      %v2317 = vpop.f32.mrf.mxu0
      %v2318 = vpop.f32.mrf.mxu0
      %v2319 = vadd.f32 0.0, %v2318
      %v2320 = vpop.f32.mrf.mxu0
      %2321 = vmatprep.mubr.bf16.mxu0 0
      %2322 = vmatmul.mubr.bf16.gmra.mxu0 %v2186
      %v2323 = vpop.f32.mrf.mxu0
      %v2324 = vadd.f32 0.0, %v2323
      %v2325 = vpop.f32.mrf.mxu0
      %v2326 = vpop.f32.mrf.mxu0
      %v2327 = vadd.f32 0.0, %v2326
      %v2328 = vpop.f32.mrf.mxu0
      %2329 = vmatprep.mubr.bf16.mxu0 0
      %2330 = vmatmul.mubr.bf16.gmra.mxu0 %v2189
      %v2331 = vpop.f32.mrf.mxu0
      %v2332 = vadd.f32 0.0, %v2331
      %v2333 = vpop.f32.mrf.mxu0
      %v2334 = vpop.f32.mrf.mxu0
      %v2335 = vadd.f32 0.0, %v2334
      %v2336 = vpop.f32.mrf.mxu0
      %2337 = vmatprep.mubr.bf16.mxu0 0
      %2338 = vmatmul.mubr.bf16.gmra.mxu0 %v2192
      %v2339 = vpop.f32.mrf.mxu0
      %v2340 = vadd.f32 0.0, %v2339
      %v2341 = vpop.f32.mrf.mxu0
      %v2342 = vpop.f32.mrf.mxu0
      %v2343 = vadd.f32 0.0, %v2342
      %v2344 = vpop.f32.mrf.mxu0
      %2345 = vmatprep.mubr.bf16.mxu0 0
      %2346 = vmatmul.mubr.bf16.gmra.mxu0 %v2195
      %v2347 = vpop.f32.mrf.mxu0
      %v2348 = vadd.f32 0.0, %v2347
      %v2349 = vpop.f32.mrf.mxu0
      %v2350 = vpop.f32.mrf.mxu0
      %v2351 = vadd.f32 0.0, %v2350
      %v2352 = vpop.f32.mrf.mxu0
      %2353 = vmatprep.mubr.bf16.mxu0 0
      %2354 = vmatmul.mubr.bf16.gmra.mxu0 %v2198
      %v2355 = vpop.f32.mrf.mxu0
      %v2356 = vadd.f32 0.0, %v2355
      %v2357 = vpop.f32.mrf.mxu0
      %v2358 = vpop.f32.mrf.mxu0
      %v2359 = vadd.f32 0.0, %v2358
      %v2360 = vpop.f32.mrf.mxu0
      %2361 = vmatprep.mubr.bf16.mxu0 0
      %2362 = vmatmul.mubr.bf16.gmra.mxu0 %v2201
      %v2363 = vpop.f32.mrf.mxu0
      %v2364 = vadd.f32 0.0, %v2363
      %v2365 = vpop.f32.mrf.mxu0
      %v2366 = vpop.f32.mrf.mxu0
      %v2367 = vadd.f32 0.0, %v2366
      %v2368 = vpop.f32.mrf.mxu0
      %2369 = vmatprep.mubr.bf16.mxu0 0
      %2370 = vmatmul.mubr.bf16.gmra.mxu0 %v2204
      %v2371 = vpop.f32.mrf.mxu0
      %v2372 = vadd.f32 0.0, %v2371
      %v2373 = vpop.f32.mrf.mxu0
      %v2374 = vpop.f32.mrf.mxu0
      %v2375 = vadd.f32 0.0, %v2374
      %v2376 = vpop.f32.mrf.mxu0
      %2377 = vmatprep.mubr.bf16.mxu0 0
      %2378 = vmatmul.mubr.bf16.gmra.mxu0 %v2207
      %v2379 = vpop.f32.mrf.mxu0
      %v2380 = vadd.f32 0.0, %v2379
      %v2381 = vpop.f32.mrf.mxu0
      %v2382 = vpop.f32.mrf.mxu0
      %v2383 = vadd.f32 0.0, %v2382
      %v2384 = vpop.f32.mrf.mxu0
      %2385 = vdwg.mxu0
      %v2386 = vadd.f32 %v2048, %v2244
      %v2387 = vadd.f32 %v2049, %v2247
      %v2388 = vadd.f32 %v2050, %v2252
      %v2389 = vadd.f32 %v2051, %v2255
      %v2390 = vadd.f32 %v2052, %v2260
      %v2391 = vadd.f32 %v2053, %v2263
      %v2392 = vadd.f32 %v2054, %v2268
      %v2393 = vadd.f32 %v2055, %v2271
      %v2394 = vadd.f32 %v2056, %v2276
      %v2395 = vadd.f32 %v2057, %v2279
      %v2396 = vadd.f32 %v2058, %v2284
      %v2397 = vadd.f32 %v2059, %v2287
      %v2398 = vadd.f32 %v2060, %v2292
      %v2399 = vadd.f32 %v2061, %v2295
      %v2400 = vadd.f32 %v2062, %v2300
      %v2401 = vadd.f32 %v2063, %v2303
      %v2402 = vadd.f32 %v2064, %v2308
      %v2403 = vadd.f32 %v2065, %v2311
      %v2404 = vadd.f32 %v2066, %v2316
      %v2405 = vadd.f32 %v2067, %v2319
      %v2406 = vadd.f32 %v2068, %v2324
      %v2407 = vadd.f32 %v2069, %v2327
      %v2408 = vadd.f32 %v2070, %v2332
      %v2409 = vadd.f32 %v2071, %v2335
      %v2410 = vadd.f32 %v2072, %v2340
      %v2411 = vadd.f32 %v2073, %v2343
      %v2412 = vadd.f32 %v2074, %v2348
      %v2413 = vadd.f32 %v2075, %v2351
      %v2414 = vadd.f32 %v2076, %v2356
      %v2415 = vadd.f32 %v2077, %v2359
      %v2416 = vadd.f32 %v2078, %v2364
      %v2417 = vadd.f32 %v2079, %v2367
      %v2418 = vadd.f32 %v2080, %v2372
      %v2419 = vadd.f32 %v2081, %v2375
      %v2420 = vadd.f32 %v2082, %v2380
      %v2421 = vadd.f32 %v2083, %v2383
      %v2422 = vld [vmem:[#allocation2 + $0x13] sm:$0xff]
      %v2423 = vld [vmem:[#allocation2 + $0x1b] sm:$0xff]
      %v2424 = vld [vmem:[#allocation2 + $0x23] sm:$0xff]
      %v2425 = vld [vmem:[#allocation2 + $0x2b] sm:$0xff]
      %v2426 = vld [vmem:[#allocation2 + $0x33] sm:$0xff]
      %v2427 = vld [vmem:[#allocation2 + $0x3b] sm:$0xff]
      %v2428 = vld [vmem:[#allocation2 + $0x43] sm:$0xff]
      %v2429 = vld [vmem:[#allocation2 + $0x4b] sm:$0xff]
      %v2430 = vld [vmem:[#allocation2 + $0x53] sm:$0xff]
      %v2431 = vld [vmem:[#allocation2 + $0x5b] sm:$0xff]
      %v2432 = vld [vmem:[#allocation2 + $0x63] sm:$0xff]
      %v2433 = vld [vmem:[#allocation2 + $0x6b] sm:$0xff]
      %v2434 = vld [vmem:[#allocation2 + $0x73] sm:$0xff]
      %v2435 = vld [vmem:[#allocation2 + $0x7b] sm:$0xff]
      %v2436 = vld [vmem:[#allocation2 + $0x83] sm:$0xff]
      %v2437 = vld [vmem:[#allocation2 + $0x8b] sm:$0xff]
      %v2438 = vld [vmem:[#allocation2 + $0x93] sm:$0xff]
      %v2439 = vld [vmem:[#allocation2 + $0x9b] sm:$0xff]
      %v2440 = vld [vmem:[#allocation2 + $0xa3] sm:$0xff]
      %v2441 = vld [vmem:[#allocation2 + $0xab] sm:$0xff]
      %v2442 = vld [vmem:[#allocation2 + $0xb3] sm:$0xff]
      %v2443 = vld [vmem:[#allocation2 + $0xbb] sm:$0xff]
      %v2444 = vld [vmem:[#allocation2 + $0xc3] sm:$0xff]
      %v2445 = vld [vmem:[#allocation2 + $0xcb] sm:$0xff]
      %v2446 = vld [vmem:[#allocation2 + $0xd3] sm:$0xff]
      %v2447 = vld [vmem:[#allocation2 + $0xdb] sm:$0xff]
      %v2448 = vld [vmem:[#allocation2 + $0xe3] sm:$0xff]
      %v2449 = vld [vmem:[#allocation2 + $0xeb] sm:$0xff]
      %v2450 = vld [vmem:[#allocation2 + $0xf3] sm:$0xff]
      %v2451 = vld [vmem:[#allocation2 + $0xfb] sm:$0xff]
      %v2452 = vld [vmem:[#allocation2 + $0x103] sm:$0xff]
      %v2453 = vld [vmem:[#allocation2 + $0x10b] sm:$0xff]
      %v2454 = vld [vmem:[#allocation2 + $0x113] sm:$0xff]
      %v2455 = vld [vmem:[#allocation2 + $0x11b] sm:$0xff]
      %v2456 = vld [vmem:[#allocation2 + $0x123] sm:$0xff]
      %v2457 = vld [vmem:[#allocation2 + $0x12b] sm:$0xff]
      %v2458 = vpack.c.bf16 %v2423, %v2422
      %v2459 = vpack.c.bf16 %v2425, %v2424
      %v2460 = vpack.c.bf16 %v2427, %v2426
      %v2461 = vpack.c.bf16 %v2429, %v2428
      %v2462 = vpack.c.bf16 %v2431, %v2430
      %v2463 = vpack.c.bf16 %v2433, %v2432
      %v2464 = vpack.c.bf16 %v2435, %v2434
      %v2465 = vpack.c.bf16 %v2437, %v2436
      %v2466 = vpack.c.bf16 %v2439, %v2438
      %v2467 = vpack.c.bf16 %v2441, %v2440
      %v2468 = vpack.c.bf16 %v2443, %v2442
      %v2469 = vpack.c.bf16 %v2445, %v2444
      %v2470 = vpack.c.bf16 %v2447, %v2446
      %v2471 = vpack.c.bf16 %v2449, %v2448
      %v2472 = vpack.c.bf16 %v2451, %v2450
      %v2473 = vpack.c.bf16 %v2453, %v2452
      %v2474 = vpack.c.bf16 %v2455, %v2454
      %v2475 = vpack.c.bf16 %v2457, %v2456
      %s2476 = scalar_lea.vmem %s3, 64
      %v2477 = vld [vmem:[%s2476] sm:$0xf]
      %v2478 = vld [vmem:[%s2476 + $0x4] sm:$0xf]
      %v2479 = vld [vmem:[%s2476 + $0x8] sm:$0xf]
      %v2480 = vld [vmem:[%s2476 + $0xc] sm:$0xf]
      %v2485 = vunpack.c.l.b16 %v2477
      %v2486 = vunpack.c.l.b16 %v2478
      %v2487 = vunpack.c.l.b16 %v2479
      %v2488 = vunpack.c.l.b16 %v2480
      %v2489 = vpack.c.b16 %v2486, %v2485
      %v2490 = vpack.c.b16 %v2488, %v2487
      %v2494 = vsel %vm1101, %v2458, 0
      %v2497 = vsel %vm1101, %v2459, 0
      %v2500 = vsel %vm1101, %v2460, 0
      %v2503 = vsel %vm1101, %v2461, 0
      %v2506 = vsel %vm1101, %v2462, 0
      %v2509 = vsel %vm1101, %v2463, 0
      %v2512 = vsel %vm1101, %v2464, 0
      %v2515 = vsel %vm1101, %v2465, 0
      %v2518 = vsel %vm1101, %v2466, 0
      %v2521 = vsel %vm1101, %v2467, 0
      %v2524 = vsel %vm1101, %v2468, 0
      %v2527 = vsel %vm1101, %v2469, 0
      %v2530 = vsel %vm1101, %v2470, 0
      %v2533 = vsel %vm1101, %v2471, 0
      %v2536 = vsel %vm1101, %v2472, 0
      %v2539 = vsel %vm1101, %v2473, 0
      %v2542 = vsel %vm1101, %v2474, 0
      %v2545 = vsel %vm1101, %v2475, 0
      %2547 = vmatprep.subr.bf16.mxu0 0
      %2548 = vmatpush1.bf16.msra.mxu0 0
      %2549 = vmatprep.subr.bf16.mxu0 0
      %2550 = vmatpush1.bf16.msra.mxu0 0
      %2551 = vmatprep.subr.bf16.mxu0 0
      %2552 = vmatpush1.bf16.msra.mxu0 0
      %2553 = vmatprep.subr.bf16.mxu0 0
      %2554 = vmatpush1.bf16.msra.mxu0 0
      %2555 = vmatprep.subr.bf16.mxu0 0
      %2556 = vmatpush1.bf16.msra.mxu0 0
      %2557 = vmatprep.subr.bf16.mxu0 0
      %2558 = vmatpush1.bf16.msra.mxu0 0
      %2559 = vmatprep.subr.bf16.mxu0 0
      %2560 = vmatpush1.bf16.msra.mxu0 %v2490
      %2561 = vmatprep.subr.bf16.mxu0 0
      %2562 = vmatpush1.bf16.msra.mxu0 %v2489
      %2563 = vmatprep.subr.bf16.mxu0 0
      %2564 = vmatpush2.bf16.msra.mxu0 0
      %2565 = vmatprep.subr.bf16.mxu0 0
      %2566 = vmatpush2.bf16.msra.mxu0 0
      %2567 = vmatprep.subr.bf16.mxu0 0
      %2568 = vmatpush2.bf16.msra.mxu0 0
      %2569 = vmatprep.subr.bf16.mxu0 0
      %2570 = vmatpush2.bf16.msra.mxu0 0
      %2571 = vmatprep.subr.bf16.mxu0 0
      %2572 = vmatpush2.bf16.msra.mxu0 0
      %2573 = vmatprep.subr.bf16.mxu0 0
      %2574 = vmatpush2.bf16.msra.mxu0 0
      %2575 = vmatprep.subr.bf16.mxu0 0
      %2576 = vmatpush2.bf16.msra.mxu0 0
      %2577 = vmatprep.subr.bf16.mxu0 0
      %2578 = vmatpush2.bf16.msra.mxu0 0
      %2579 = vmatprep.mubr.bf16.mxu0 0
      %2580 = vmatmul.mubr.bf16.gmra.mxu0 %v2494
      %v2581 = vpop.f32.mrf.mxu0
      %v2582 = vadd.f32 0.0, %v2581
      %v2583 = vpop.f32.mrf.mxu0
      %v2584 = vpop.f32.mrf.mxu0
      %v2585 = vadd.f32 0.0, %v2584
      %v2586 = vpop.f32.mrf.mxu0
      %2587 = vmatprep.mubr.bf16.mxu0 0
      %2588 = vmatmul.mubr.bf16.gmra.mxu0 %v2497
      %v2589 = vpop.f32.mrf.mxu0
      %v2590 = vadd.f32 0.0, %v2589
      %v2591 = vpop.f32.mrf.mxu0
      %v2592 = vpop.f32.mrf.mxu0
      %v2593 = vadd.f32 0.0, %v2592
      %v2594 = vpop.f32.mrf.mxu0
      %2595 = vmatprep.mubr.bf16.mxu0 0
      %2596 = vmatmul.mubr.bf16.gmra.mxu0 %v2500
      %v2597 = vpop.f32.mrf.mxu0
      %v2598 = vadd.f32 0.0, %v2597
      %v2599 = vpop.f32.mrf.mxu0
      %v2600 = vpop.f32.mrf.mxu0
      %v2601 = vadd.f32 0.0, %v2600
      %v2602 = vpop.f32.mrf.mxu0
      %2603 = vmatprep.mubr.bf16.mxu0 0
      %2604 = vmatmul.mubr.bf16.gmra.mxu0 %v2503
      %v2605 = vpop.f32.mrf.mxu0
      %v2606 = vadd.f32 0.0, %v2605
      %v2607 = vpop.f32.mrf.mxu0
      %v2608 = vpop.f32.mrf.mxu0
      %v2609 = vadd.f32 0.0, %v2608
      %v2610 = vpop.f32.mrf.mxu0
      %2611 = vmatprep.mubr.bf16.mxu0 0
      %2612 = vmatmul.mubr.bf16.gmra.mxu0 %v2506
      %v2613 = vpop.f32.mrf.mxu0
      %v2614 = vadd.f32 0.0, %v2613
      %v2615 = vpop.f32.mrf.mxu0
      %v2616 = vpop.f32.mrf.mxu0
      %v2617 = vadd.f32 0.0, %v2616
      %v2618 = vpop.f32.mrf.mxu0
      %2619 = vmatprep.mubr.bf16.mxu0 0
      %2620 = vmatmul.mubr.bf16.gmra.mxu0 %v2509
      %v2621 = vpop.f32.mrf.mxu0
      %v2622 = vadd.f32 0.0, %v2621
      %v2623 = vpop.f32.mrf.mxu0
      %v2624 = vpop.f32.mrf.mxu0
      %v2625 = vadd.f32 0.0, %v2624
      %v2626 = vpop.f32.mrf.mxu0
      %2627 = vmatprep.mubr.bf16.mxu0 0
      %2628 = vmatmul.mubr.bf16.gmra.mxu0 %v2512
      %v2629 = vpop.f32.mrf.mxu0
      %v2630 = vadd.f32 0.0, %v2629
      %v2631 = vpop.f32.mrf.mxu0
      %v2632 = vpop.f32.mrf.mxu0
      %v2633 = vadd.f32 0.0, %v2632
      %v2634 = vpop.f32.mrf.mxu0
      %2635 = vmatprep.mubr.bf16.mxu0 0
      %2636 = vmatmul.mubr.bf16.gmra.mxu0 %v2515
      %v2637 = vpop.f32.mrf.mxu0
      %v2638 = vadd.f32 0.0, %v2637
      %v2639 = vpop.f32.mrf.mxu0
      %v2640 = vpop.f32.mrf.mxu0
      %v2641 = vadd.f32 0.0, %v2640
      %v2642 = vpop.f32.mrf.mxu0
      %2643 = vmatprep.mubr.bf16.mxu0 0
      %2644 = vmatmul.mubr.bf16.gmra.mxu0 %v2518
      %v2645 = vpop.f32.mrf.mxu0
      %v2646 = vadd.f32 0.0, %v2645
      %v2647 = vpop.f32.mrf.mxu0
      %v2648 = vpop.f32.mrf.mxu0
      %v2649 = vadd.f32 0.0, %v2648
      %v2650 = vpop.f32.mrf.mxu0
      %2651 = vmatprep.mubr.bf16.mxu0 0
      %2652 = vmatmul.mubr.bf16.gmra.mxu0 %v2521
      %v2653 = vpop.f32.mrf.mxu0
      %v2654 = vadd.f32 0.0, %v2653
      %v2655 = vpop.f32.mrf.mxu0
      %v2656 = vpop.f32.mrf.mxu0
      %v2657 = vadd.f32 0.0, %v2656
      %v2658 = vpop.f32.mrf.mxu0
      %2659 = vmatprep.mubr.bf16.mxu0 0
      %2660 = vmatmul.mubr.bf16.gmra.mxu0 %v2524
      %v2661 = vpop.f32.mrf.mxu0
      %v2662 = vadd.f32 0.0, %v2661
      %v2663 = vpop.f32.mrf.mxu0
      %v2664 = vpop.f32.mrf.mxu0
      %v2665 = vadd.f32 0.0, %v2664
      %v2666 = vpop.f32.mrf.mxu0
      %2667 = vmatprep.mubr.bf16.mxu0 0
      %2668 = vmatmul.mubr.bf16.gmra.mxu0 %v2527
      %v2669 = vpop.f32.mrf.mxu0
      %v2670 = vadd.f32 0.0, %v2669
      %v2671 = vpop.f32.mrf.mxu0
      %v2672 = vpop.f32.mrf.mxu0
      %v2673 = vadd.f32 0.0, %v2672
      %v2674 = vpop.f32.mrf.mxu0
      %2675 = vmatprep.mubr.bf16.mxu0 0
      %2676 = vmatmul.mubr.bf16.gmra.mxu0 %v2530
      %v2677 = vpop.f32.mrf.mxu0
      %v2678 = vadd.f32 0.0, %v2677
      %v2679 = vpop.f32.mrf.mxu0
      %v2680 = vpop.f32.mrf.mxu0
      %v2681 = vadd.f32 0.0, %v2680
      %v2682 = vpop.f32.mrf.mxu0
      %2683 = vmatprep.mubr.bf16.mxu0 0
      %2684 = vmatmul.mubr.bf16.gmra.mxu0 %v2533
      %v2685 = vpop.f32.mrf.mxu0
      %v2686 = vadd.f32 0.0, %v2685
      %v2687 = vpop.f32.mrf.mxu0
      %v2688 = vpop.f32.mrf.mxu0
      %v2689 = vadd.f32 0.0, %v2688
      %v2690 = vpop.f32.mrf.mxu0
      %2691 = vmatprep.mubr.bf16.mxu0 0
      %2692 = vmatmul.mubr.bf16.gmra.mxu0 %v2536
      %v2693 = vpop.f32.mrf.mxu0
      %v2694 = vadd.f32 0.0, %v2693
      %v2695 = vpop.f32.mrf.mxu0
      %v2696 = vpop.f32.mrf.mxu0
      %v2697 = vadd.f32 0.0, %v2696
      %v2698 = vpop.f32.mrf.mxu0
      %2699 = vmatprep.mubr.bf16.mxu0 0
      %2700 = vmatmul.mubr.bf16.gmra.mxu0 %v2539
      %v2701 = vpop.f32.mrf.mxu0
      %v2702 = vadd.f32 0.0, %v2701
      %v2703 = vpop.f32.mrf.mxu0
      %v2704 = vpop.f32.mrf.mxu0
      %v2705 = vadd.f32 0.0, %v2704
      %v2706 = vpop.f32.mrf.mxu0
      %2707 = vmatprep.mubr.bf16.mxu0 0
      %2708 = vmatmul.mubr.bf16.gmra.mxu0 %v2542
      %v2709 = vpop.f32.mrf.mxu0
      %v2710 = vadd.f32 0.0, %v2709
      %v2711 = vpop.f32.mrf.mxu0
      %v2712 = vpop.f32.mrf.mxu0
      %v2713 = vadd.f32 0.0, %v2712
      %v2714 = vpop.f32.mrf.mxu0
      %2715 = vmatprep.mubr.bf16.mxu0 0
      %2716 = vmatmul.mubr.bf16.gmra.mxu0 %v2545
      %v2717 = vpop.f32.mrf.mxu0
      %v2718 = vadd.f32 0.0, %v2717
      %v2719 = vpop.f32.mrf.mxu0
      %v2720 = vpop.f32.mrf.mxu0
      %v2721 = vadd.f32 0.0, %v2720
      %v2722 = vpop.f32.mrf.mxu0
      %2723 = vdwg.mxu0
      %v2724 = vadd.f32 %v2386, %v2582
      %v2725 = vadd.f32 %v2387, %v2585
      %v2726 = vadd.f32 %v2388, %v2590
      %v2727 = vadd.f32 %v2389, %v2593
      %v2728 = vadd.f32 %v2390, %v2598
      %v2729 = vadd.f32 %v2391, %v2601
      %v2730 = vadd.f32 %v2392, %v2606
      %v2731 = vadd.f32 %v2393, %v2609
      %v2732 = vadd.f32 %v2394, %v2614
      %v2733 = vadd.f32 %v2395, %v2617
      %v2734 = vadd.f32 %v2396, %v2622
      %v2735 = vadd.f32 %v2397, %v2625
      %v2736 = vadd.f32 %v2398, %v2630
      %v2737 = vadd.f32 %v2399, %v2633
      %v2738 = vadd.f32 %v2400, %v2638
      %v2739 = vadd.f32 %v2401, %v2641
      %v2740 = vadd.f32 %v2402, %v2646
      %v2741 = vadd.f32 %v2403, %v2649
      %v2742 = vadd.f32 %v2404, %v2654
      %v2743 = vadd.f32 %v2405, %v2657
      %v2744 = vadd.f32 %v2406, %v2662
      %v2745 = vadd.f32 %v2407, %v2665
      %v2746 = vadd.f32 %v2408, %v2670
      %v2747 = vadd.f32 %v2409, %v2673
      %v2748 = vadd.f32 %v2410, %v2678
      %v2749 = vadd.f32 %v2411, %v2681
      %v2750 = vadd.f32 %v2412, %v2686
      %v2751 = vadd.f32 %v2413, %v2689
      %v2752 = vadd.f32 %v2414, %v2694
      %v2753 = vadd.f32 %v2415, %v2697
      %v2754 = vadd.f32 %v2416, %v2702
      %v2755 = vadd.f32 %v2417, %v2705
      %v2756 = vadd.f32 %v2418, %v2710
      %v2757 = vadd.f32 %v2419, %v2713
      %v2758 = vadd.f32 %v2420, %v2718
      %v2759 = vadd.f32 %v2421, %v2721
      %v2760 = vld [vmem:[#allocation2 + $0x14] sm:$0xff]
      %v2761 = vld [vmem:[#allocation2 + $0x1c] sm:$0xff]
      %v2762 = vld [vmem:[#allocation2 + $0x24] sm:$0xff]
      %v2763 = vld [vmem:[#allocation2 + $0x2c] sm:$0xff]
      %v2764 = vld [vmem:[#allocation2 + $0x34] sm:$0xff]
      %v2765 = vld [vmem:[#allocation2 + $0x3c] sm:$0xff]
      %v2766 = vld [vmem:[#allocation2 + $0x44] sm:$0xff]
      %v2767 = vld [vmem:[#allocation2 + $0x4c] sm:$0xff]
      %v2768 = vld [vmem:[#allocation2 + $0x54] sm:$0xff]
      %v2769 = vld [vmem:[#allocation2 + $0x5c] sm:$0xff]
      %v2770 = vld [vmem:[#allocation2 + $0x64] sm:$0xff]
      %v2771 = vld [vmem:[#allocation2 + $0x6c] sm:$0xff]
      %v2772 = vld [vmem:[#allocation2 + $0x74] sm:$0xff]
      %v2773 = vld [vmem:[#allocation2 + $0x7c] sm:$0xff]
      %v2774 = vld [vmem:[#allocation2 + $0x84] sm:$0xff]
      %v2775 = vld [vmem:[#allocation2 + $0x8c] sm:$0xff]
      %v2776 = vld [vmem:[#allocation2 + $0x94] sm:$0xff]
      %v2777 = vld [vmem:[#allocation2 + $0x9c] sm:$0xff]
      %v2778 = vld [vmem:[#allocation2 + $0xa4] sm:$0xff]
      %v2779 = vld [vmem:[#allocation2 + $0xac] sm:$0xff]
      %v2780 = vld [vmem:[#allocation2 + $0xb4] sm:$0xff]
      %v2781 = vld [vmem:[#allocation2 + $0xbc] sm:$0xff]
      %v2782 = vld [vmem:[#allocation2 + $0xc4] sm:$0xff]
      %v2783 = vld [vmem:[#allocation2 + $0xcc] sm:$0xff]
      %v2784 = vld [vmem:[#allocation2 + $0xd4] sm:$0xff]
      %v2785 = vld [vmem:[#allocation2 + $0xdc] sm:$0xff]
      %v2786 = vld [vmem:[#allocation2 + $0xe4] sm:$0xff]
      %v2787 = vld [vmem:[#allocation2 + $0xec] sm:$0xff]
      %v2788 = vld [vmem:[#allocation2 + $0xf4] sm:$0xff]
      %v2789 = vld [vmem:[#allocation2 + $0xfc] sm:$0xff]
      %v2790 = vld [vmem:[#allocation2 + $0x104] sm:$0xff]
      %v2791 = vld [vmem:[#allocation2 + $0x10c] sm:$0xff]
      %v2792 = vld [vmem:[#allocation2 + $0x114] sm:$0xff]
      %v2793 = vld [vmem:[#allocation2 + $0x11c] sm:$0xff]
      %v2794 = vld [vmem:[#allocation2 + $0x124] sm:$0xff]
      %v2795 = vld [vmem:[#allocation2 + $0x12c] sm:$0xff]
      %v2796 = vpack.c.bf16 %v2761, %v2760
      %v2797 = vpack.c.bf16 %v2763, %v2762
      %v2798 = vpack.c.bf16 %v2765, %v2764
      %v2799 = vpack.c.bf16 %v2767, %v2766
      %v2800 = vpack.c.bf16 %v2769, %v2768
      %v2801 = vpack.c.bf16 %v2771, %v2770
      %v2802 = vpack.c.bf16 %v2773, %v2772
      %v2803 = vpack.c.bf16 %v2775, %v2774
      %v2804 = vpack.c.bf16 %v2777, %v2776
      %v2805 = vpack.c.bf16 %v2779, %v2778
      %v2806 = vpack.c.bf16 %v2781, %v2780
      %v2807 = vpack.c.bf16 %v2783, %v2782
      %v2808 = vpack.c.bf16 %v2785, %v2784
      %v2809 = vpack.c.bf16 %v2787, %v2786
      %v2810 = vpack.c.bf16 %v2789, %v2788
      %v2811 = vpack.c.bf16 %v2791, %v2790
      %v2812 = vpack.c.bf16 %v2793, %v2792
      %v2813 = vpack.c.bf16 %v2795, %v2794
      %s2814 = scalar_lea.vmem %s3, 80
      %v2815 = vld [vmem:[%s2814] sm:$0xf]
      %v2816 = vld [vmem:[%s2814 + $0x4] sm:$0xf]
      %v2817 = vld [vmem:[%s2814 + $0x8] sm:$0xf]
      %v2818 = vld [vmem:[%s2814 + $0xc] sm:$0xf]
      %v2823 = vunpack.c.l.b16 %v2815
      %v2824 = vunpack.c.l.b16 %v2816
      %v2825 = vunpack.c.l.b16 %v2817
      %v2826 = vunpack.c.l.b16 %v2818
      %v2827 = vpack.c.b16 %v2824, %v2823
      %v2828 = vpack.c.b16 %v2826, %v2825
      %v2832 = vsel %vm1101, %v2796, 0
      %v2835 = vsel %vm1101, %v2797, 0
      %v2838 = vsel %vm1101, %v2798, 0
      %v2841 = vsel %vm1101, %v2799, 0
      %v2844 = vsel %vm1101, %v2800, 0
      %v2847 = vsel %vm1101, %v2801, 0
      %v2850 = vsel %vm1101, %v2802, 0
      %v2853 = vsel %vm1101, %v2803, 0
      %v2856 = vsel %vm1101, %v2804, 0
      %v2859 = vsel %vm1101, %v2805, 0
      %v2862 = vsel %vm1101, %v2806, 0
      %v2865 = vsel %vm1101, %v2807, 0
      %v2868 = vsel %vm1101, %v2808, 0
      %v2871 = vsel %vm1101, %v2809, 0
      %v2874 = vsel %vm1101, %v2810, 0
      %v2877 = vsel %vm1101, %v2811, 0
      %v2880 = vsel %vm1101, %v2812, 0
      %v2883 = vsel %vm1101, %v2813, 0
      %2885 = vmatprep.subr.bf16.mxu0 0
      %2886 = vmatpush1.bf16.msra.mxu0 0
      %2887 = vmatprep.subr.bf16.mxu0 0
      %2888 = vmatpush1.bf16.msra.mxu0 0
      %2889 = vmatprep.subr.bf16.mxu0 0
      %2890 = vmatpush1.bf16.msra.mxu0 0
      %2891 = vmatprep.subr.bf16.mxu0 0
      %2892 = vmatpush1.bf16.msra.mxu0 0
      %2893 = vmatprep.subr.bf16.mxu0 0
      %2894 = vmatpush1.bf16.msra.mxu0 0
      %2895 = vmatprep.subr.bf16.mxu0 0
      %2896 = vmatpush1.bf16.msra.mxu0 0
      %2897 = vmatprep.subr.bf16.mxu0 0
      %2898 = vmatpush1.bf16.msra.mxu0 %v2828
      %2899 = vmatprep.subr.bf16.mxu0 0
      %2900 = vmatpush1.bf16.msra.mxu0 %v2827
      %2901 = vmatprep.subr.bf16.mxu0 0
      %2902 = vmatpush2.bf16.msra.mxu0 0
      %2903 = vmatprep.subr.bf16.mxu0 0
      %2904 = vmatpush2.bf16.msra.mxu0 0
      %2905 = vmatprep.subr.bf16.mxu0 0
      %2906 = vmatpush2.bf16.msra.mxu0 0
      %2907 = vmatprep.subr.bf16.mxu0 0
      %2908 = vmatpush2.bf16.msra.mxu0 0
      %2909 = vmatprep.subr.bf16.mxu0 0
      %2910 = vmatpush2.bf16.msra.mxu0 0
      %2911 = vmatprep.subr.bf16.mxu0 0
      %2912 = vmatpush2.bf16.msra.mxu0 0
      %2913 = vmatprep.subr.bf16.mxu0 0
      %2914 = vmatpush2.bf16.msra.mxu0 0
      %2915 = vmatprep.subr.bf16.mxu0 0
      %2916 = vmatpush2.bf16.msra.mxu0 0
      %2917 = vmatprep.mubr.bf16.mxu0 0
      %2918 = vmatmul.mubr.bf16.gmra.mxu0 %v2832
      %v2919 = vpop.f32.mrf.mxu0
      %v2920 = vadd.f32 0.0, %v2919
      %v2921 = vpop.f32.mrf.mxu0
      %v2922 = vpop.f32.mrf.mxu0
      %v2923 = vadd.f32 0.0, %v2922
      %v2924 = vpop.f32.mrf.mxu0
      %2925 = vmatprep.mubr.bf16.mxu0 0
      %2926 = vmatmul.mubr.bf16.gmra.mxu0 %v2835
      %v2927 = vpop.f32.mrf.mxu0
      %v2928 = vadd.f32 0.0, %v2927
      %v2929 = vpop.f32.mrf.mxu0
      %v2930 = vpop.f32.mrf.mxu0
      %v2931 = vadd.f32 0.0, %v2930
      %v2932 = vpop.f32.mrf.mxu0
      %2933 = vmatprep.mubr.bf16.mxu0 0
      %2934 = vmatmul.mubr.bf16.gmra.mxu0 %v2838
      %v2935 = vpop.f32.mrf.mxu0
      %v2936 = vadd.f32 0.0, %v2935
      %v2937 = vpop.f32.mrf.mxu0
      %v2938 = vpop.f32.mrf.mxu0
      %v2939 = vadd.f32 0.0, %v2938
      %v2940 = vpop.f32.mrf.mxu0
      %2941 = vmatprep.mubr.bf16.mxu0 0
      %2942 = vmatmul.mubr.bf16.gmra.mxu0 %v2841
      %v2943 = vpop.f32.mrf.mxu0
      %v2944 = vadd.f32 0.0, %v2943
      %v2945 = vpop.f32.mrf.mxu0
      %v2946 = vpop.f32.mrf.mxu0
      %v2947 = vadd.f32 0.0, %v2946
      %v2948 = vpop.f32.mrf.mxu0
      %2949 = vmatprep.mubr.bf16.mxu0 0
      %2950 = vmatmul.mubr.bf16.gmra.mxu0 %v2844
      %v2951 = vpop.f32.mrf.mxu0
      %v2952 = vadd.f32 0.0, %v2951
      %v2953 = vpop.f32.mrf.mxu0
      %v2954 = vpop.f32.mrf.mxu0
      %v2955 = vadd.f32 0.0, %v2954
      %v2956 = vpop.f32.mrf.mxu0
      %2957 = vmatprep.mubr.bf16.mxu0 0
      %2958 = vmatmul.mubr.bf16.gmra.mxu0 %v2847
      %v2959 = vpop.f32.mrf.mxu0
      %v2960 = vadd.f32 0.0, %v2959
      %v2961 = vpop.f32.mrf.mxu0
      %v2962 = vpop.f32.mrf.mxu0
      %v2963 = vadd.f32 0.0, %v2962
      %v2964 = vpop.f32.mrf.mxu0
      %2965 = vmatprep.mubr.bf16.mxu0 0
      %2966 = vmatmul.mubr.bf16.gmra.mxu0 %v2850
      %v2967 = vpop.f32.mrf.mxu0
      %v2968 = vadd.f32 0.0, %v2967
      %v2969 = vpop.f32.mrf.mxu0
      %v2970 = vpop.f32.mrf.mxu0
      %v2971 = vadd.f32 0.0, %v2970
      %v2972 = vpop.f32.mrf.mxu0
      %2973 = vmatprep.mubr.bf16.mxu0 0
      %2974 = vmatmul.mubr.bf16.gmra.mxu0 %v2853
      %v2975 = vpop.f32.mrf.mxu0
      %v2976 = vadd.f32 0.0, %v2975
      %v2977 = vpop.f32.mrf.mxu0
      %v2978 = vpop.f32.mrf.mxu0
      %v2979 = vadd.f32 0.0, %v2978
      %v2980 = vpop.f32.mrf.mxu0
      %2981 = vmatprep.mubr.bf16.mxu0 0
      %2982 = vmatmul.mubr.bf16.gmra.mxu0 %v2856
      %v2983 = vpop.f32.mrf.mxu0
      %v2984 = vadd.f32 0.0, %v2983
      %v2985 = vpop.f32.mrf.mxu0
      %v2986 = vpop.f32.mrf.mxu0
      %v2987 = vadd.f32 0.0, %v2986
      %v2988 = vpop.f32.mrf.mxu0
      %2989 = vmatprep.mubr.bf16.mxu0 0
      %2990 = vmatmul.mubr.bf16.gmra.mxu0 %v2859
      %v2991 = vpop.f32.mrf.mxu0
      %v2992 = vadd.f32 0.0, %v2991
      %v2993 = vpop.f32.mrf.mxu0
      %v2994 = vpop.f32.mrf.mxu0
      %v2995 = vadd.f32 0.0, %v2994
      %v2996 = vpop.f32.mrf.mxu0
      %2997 = vmatprep.mubr.bf16.mxu0 0
      %2998 = vmatmul.mubr.bf16.gmra.mxu0 %v2862
      %v2999 = vpop.f32.mrf.mxu0
      %v3000 = vadd.f32 0.0, %v2999
      %v3001 = vpop.f32.mrf.mxu0
      %v3002 = vpop.f32.mrf.mxu0
      %v3003 = vadd.f32 0.0, %v3002
      %v3004 = vpop.f32.mrf.mxu0
      %3005 = vmatprep.mubr.bf16.mxu0 0
      %3006 = vmatmul.mubr.bf16.gmra.mxu0 %v2865
      %v3007 = vpop.f32.mrf.mxu0
      %v3008 = vadd.f32 0.0, %v3007
      %v3009 = vpop.f32.mrf.mxu0
      %v3010 = vpop.f32.mrf.mxu0
      %v3011 = vadd.f32 0.0, %v3010
      %v3012 = vpop.f32.mrf.mxu0
      %3013 = vmatprep.mubr.bf16.mxu0 0
      %3014 = vmatmul.mubr.bf16.gmra.mxu0 %v2868
      %v3015 = vpop.f32.mrf.mxu0
      %v3016 = vadd.f32 0.0, %v3015
      %v3017 = vpop.f32.mrf.mxu0
      %v3018 = vpop.f32.mrf.mxu0
      %v3019 = vadd.f32 0.0, %v3018
      %v3020 = vpop.f32.mrf.mxu0
      %3021 = vmatprep.mubr.bf16.mxu0 0
      %3022 = vmatmul.mubr.bf16.gmra.mxu0 %v2871
      %v3023 = vpop.f32.mrf.mxu0
      %v3024 = vadd.f32 0.0, %v3023
      %v3025 = vpop.f32.mrf.mxu0
      %v3026 = vpop.f32.mrf.mxu0
      %v3027 = vadd.f32 0.0, %v3026
      %v3028 = vpop.f32.mrf.mxu0
      %3029 = vmatprep.mubr.bf16.mxu0 0
      %3030 = vmatmul.mubr.bf16.gmra.mxu0 %v2874
      %v3031 = vpop.f32.mrf.mxu0
      %v3032 = vadd.f32 0.0, %v3031
      %v3033 = vpop.f32.mrf.mxu0
      %v3034 = vpop.f32.mrf.mxu0
      %v3035 = vadd.f32 0.0, %v3034
      %v3036 = vpop.f32.mrf.mxu0
      %3037 = vmatprep.mubr.bf16.mxu0 0
      %3038 = vmatmul.mubr.bf16.gmra.mxu0 %v2877
      %v3039 = vpop.f32.mrf.mxu0
      %v3040 = vadd.f32 0.0, %v3039
      %v3041 = vpop.f32.mrf.mxu0
      %v3042 = vpop.f32.mrf.mxu0
      %v3043 = vadd.f32 0.0, %v3042
      %v3044 = vpop.f32.mrf.mxu0
      %3045 = vmatprep.mubr.bf16.mxu0 0
      %3046 = vmatmul.mubr.bf16.gmra.mxu0 %v2880
      %v3047 = vpop.f32.mrf.mxu0
      %v3048 = vadd.f32 0.0, %v3047
      %v3049 = vpop.f32.mrf.mxu0
      %v3050 = vpop.f32.mrf.mxu0
      %v3051 = vadd.f32 0.0, %v3050
      %v3052 = vpop.f32.mrf.mxu0
      %3053 = vmatprep.mubr.bf16.mxu0 0
      %3054 = vmatmul.mubr.bf16.gmra.mxu0 %v2883
      %v3055 = vpop.f32.mrf.mxu0
      %v3056 = vadd.f32 0.0, %v3055
      %v3057 = vpop.f32.mrf.mxu0
      %v3058 = vpop.f32.mrf.mxu0
      %v3059 = vadd.f32 0.0, %v3058
      %v3060 = vpop.f32.mrf.mxu0
      %3061 = vdwg.mxu0
      %v3062 = vadd.f32 %v2724, %v2920
      %v3063 = vadd.f32 %v2725, %v2923
      %v3064 = vadd.f32 %v2726, %v2928
      %v3065 = vadd.f32 %v2727, %v2931
      %v3066 = vadd.f32 %v2728, %v2936
      %v3067 = vadd.f32 %v2729, %v2939
      %v3068 = vadd.f32 %v2730, %v2944
      %v3069 = vadd.f32 %v2731, %v2947
      %v3070 = vadd.f32 %v2732, %v2952
      %v3071 = vadd.f32 %v2733, %v2955
      %v3072 = vadd.f32 %v2734, %v2960
      %v3073 = vadd.f32 %v2735, %v2963
      %v3074 = vadd.f32 %v2736, %v2968
      %v3075 = vadd.f32 %v2737, %v2971
      %v3076 = vadd.f32 %v2738, %v2976
      %v3077 = vadd.f32 %v2739, %v2979
      %v3078 = vadd.f32 %v2740, %v2984
      %v3079 = vadd.f32 %v2741, %v2987
      %v3080 = vadd.f32 %v2742, %v2992
      %v3081 = vadd.f32 %v2743, %v2995
      %v3082 = vadd.f32 %v2744, %v3000
      %v3083 = vadd.f32 %v2745, %v3003
      %v3084 = vadd.f32 %v2746, %v3008
      %v3085 = vadd.f32 %v2747, %v3011
      %v3086 = vadd.f32 %v2748, %v3016
      %v3087 = vadd.f32 %v2749, %v3019
      %v3088 = vadd.f32 %v2750, %v3024
      %v3089 = vadd.f32 %v2751, %v3027
      %v3090 = vadd.f32 %v2752, %v3032
      %v3091 = vadd.f32 %v2753, %v3035
      %v3092 = vadd.f32 %v2754, %v3040
      %v3093 = vadd.f32 %v2755, %v3043
      %v3094 = vadd.f32 %v2756, %v3048
      %v3095 = vadd.f32 %v2757, %v3051
      %v3096 = vadd.f32 %v2758, %v3056
      %v3097 = vadd.f32 %v2759, %v3059
      %v3098 = vld [vmem:[#allocation2 + $0x24] sm:$0xff]
      %v3099 = vld [vmem:[#allocation2 + $0x2c] sm:$0xff]
      %v3100 = vld [vmem:[#allocation2 + $0x34] sm:$0xff]
      %v3101 = vld [vmem:[#allocation2 + $0x3c] sm:$0xff]
      %v3102 = vld [vmem:[#allocation2 + $0x44] sm:$0xff]
      %v3103 = vld [vmem:[#allocation2 + $0x4c] sm:$0xff]
      %v3104 = vld [vmem:[#allocation2 + $0x54] sm:$0xff]
      %v3105 = vld [vmem:[#allocation2 + $0x5c] sm:$0xff]
      %v3106 = vld [vmem:[#allocation2 + $0x64] sm:$0xff]
      %v3107 = vld [vmem:[#allocation2 + $0x6c] sm:$0xff]
      %v3108 = vld [vmem:[#allocation2 + $0x74] sm:$0xff]
      %v3109 = vld [vmem:[#allocation2 + $0x7c] sm:$0xff]
      %v3110 = vld [vmem:[#allocation2 + $0x84] sm:$0xff]
      %v3111 = vld [vmem:[#allocation2 + $0x8c] sm:$0xff]
      %v3112 = vld [vmem:[#allocation2 + $0x94] sm:$0xff]
      %v3113 = vld [vmem:[#allocation2 + $0x9c] sm:$0xff]
      %v3114 = vld [vmem:[#allocation2 + $0xa4] sm:$0xff]
      %v3115 = vld [vmem:[#allocation2 + $0xac] sm:$0xff]
      %v3116 = vld [vmem:[#allocation2 + $0xb4] sm:$0xff]
      %v3117 = vld [vmem:[#allocation2 + $0xbc] sm:$0xff]
      %v3118 = vld [vmem:[#allocation2 + $0xc4] sm:$0xff]
      %v3119 = vld [vmem:[#allocation2 + $0xcc] sm:$0xff]
      %v3120 = vld [vmem:[#allocation2 + $0xd4] sm:$0xff]
      %v3121 = vld [vmem:[#allocation2 + $0xdc] sm:$0xff]
      %v3122 = vld [vmem:[#allocation2 + $0xe4] sm:$0xff]
      %v3123 = vld [vmem:[#allocation2 + $0xec] sm:$0xff]
      %v3124 = vld [vmem:[#allocation2 + $0xf4] sm:$0xff]
      %v3125 = vld [vmem:[#allocation2 + $0xfc] sm:$0xff]
      %v3126 = vld [vmem:[#allocation2 + $0x104] sm:$0xff]
      %v3127 = vld [vmem:[#allocation2 + $0x10c] sm:$0xff]
      %v3128 = vld [vmem:[#allocation2 + $0x114] sm:$0xff]
      %v3129 = vld [vmem:[#allocation2 + $0x11c] sm:$0xff]
      %v3130 = vld [vmem:[#allocation2 + $0x124] sm:$0xff]
      %v3131 = vld [vmem:[#allocation2 + $0x12c] sm:$0xff]
      %v3132 = vld [vmem:[#allocation2 + $0x134] sm:$0xff]
      %v3133 = vld [vmem:[#allocation2 + $0x13c] sm:$0xff]
      %v3134 = vpack.c.bf16 %v3099, %v3098
      %v3135 = vpack.c.bf16 %v3101, %v3100
      %v3136 = vpack.c.bf16 %v3103, %v3102
      %v3137 = vpack.c.bf16 %v3105, %v3104
      %v3138 = vpack.c.bf16 %v3107, %v3106
      %v3139 = vpack.c.bf16 %v3109, %v3108
      %v3140 = vpack.c.bf16 %v3111, %v3110
      %v3141 = vpack.c.bf16 %v3113, %v3112
      %v3142 = vpack.c.bf16 %v3115, %v3114
      %v3143 = vpack.c.bf16 %v3117, %v3116
      %v3144 = vpack.c.bf16 %v3119, %v3118
      %v3145 = vpack.c.bf16 %v3121, %v3120
      %v3146 = vpack.c.bf16 %v3123, %v3122
      %v3147 = vpack.c.bf16 %v3125, %v3124
      %v3148 = vpack.c.bf16 %v3127, %v3126
      %v3149 = vpack.c.bf16 %v3129, %v3128
      %v3150 = vpack.c.bf16 %v3131, %v3130
      %v3151 = vpack.c.bf16 %v3133, %v3132
      %s3152 = scalar_lea.vmem %s3, 96
      %v3153 = vld [vmem:[%s3152] sm:$0xf]
      %v3154 = vld [vmem:[%s3152 + $0x4] sm:$0xf]
      %v3155 = vld [vmem:[%s3152 + $0x8] sm:$0xf]
      %v3156 = vld [vmem:[%s3152 + $0xc] sm:$0xf]
      %v3161 = vunpack.c.l.b16 %v3153
      %v3162 = vunpack.c.l.b16 %v3154
      %v3163 = vunpack.c.l.b16 %v3155
      %v3164 = vunpack.c.l.b16 %v3156
      %v3165 = vpack.c.b16 %v3162, %v3161
      %v3166 = vpack.c.b16 %v3164, %v3163
      %v3170 = vsel %vm1101, %v3134, 0
      %v3173 = vsel %vm1101, %v3135, 0
      %v3176 = vsel %vm1101, %v3136, 0
      %v3179 = vsel %vm1101, %v3137, 0
      %v3182 = vsel %vm1101, %v3138, 0
      %v3185 = vsel %vm1101, %v3139, 0
      %v3188 = vsel %vm1101, %v3140, 0
      %v3191 = vsel %vm1101, %v3141, 0
      %v3194 = vsel %vm1101, %v3142, 0
      %v3197 = vsel %vm1101, %v3143, 0
      %v3200 = vsel %vm1101, %v3144, 0
      %v3203 = vsel %vm1101, %v3145, 0
      %v3206 = vsel %vm1101, %v3146, 0
      %v3209 = vsel %vm1101, %v3147, 0
      %v3212 = vsel %vm1101, %v3148, 0
      %v3215 = vsel %vm1101, %v3149, 0
      %v3218 = vsel %vm1101, %v3150, 0
      %v3221 = vsel %vm1101, %v3151, 0
      %3223 = vmatprep.subr.bf16.mxu0 0
      %3224 = vmatpush1.bf16.msra.mxu0 0
      %3225 = vmatprep.subr.bf16.mxu0 0
      %3226 = vmatpush1.bf16.msra.mxu0 0
      %3227 = vmatprep.subr.bf16.mxu0 0
      %3228 = vmatpush1.bf16.msra.mxu0 0
      %3229 = vmatprep.subr.bf16.mxu0 0
      %3230 = vmatpush1.bf16.msra.mxu0 0
      %3231 = vmatprep.subr.bf16.mxu0 0
      %3232 = vmatpush1.bf16.msra.mxu0 0
      %3233 = vmatprep.subr.bf16.mxu0 0
      %3234 = vmatpush1.bf16.msra.mxu0 0
      %3235 = vmatprep.subr.bf16.mxu0 0
      %3236 = vmatpush1.bf16.msra.mxu0 %v3166
      %3237 = vmatprep.subr.bf16.mxu0 0
      %3238 = vmatpush1.bf16.msra.mxu0 %v3165
      %3239 = vmatprep.subr.bf16.mxu0 0
      %3240 = vmatpush2.bf16.msra.mxu0 0
      %3241 = vmatprep.subr.bf16.mxu0 0
      %3242 = vmatpush2.bf16.msra.mxu0 0
      %3243 = vmatprep.subr.bf16.mxu0 0
      %3244 = vmatpush2.bf16.msra.mxu0 0
      %3245 = vmatprep.subr.bf16.mxu0 0
      %3246 = vmatpush2.bf16.msra.mxu0 0
      %3247 = vmatprep.subr.bf16.mxu0 0
      %3248 = vmatpush2.bf16.msra.mxu0 0
      %3249 = vmatprep.subr.bf16.mxu0 0
      %3250 = vmatpush2.bf16.msra.mxu0 0
      %3251 = vmatprep.subr.bf16.mxu0 0
      %3252 = vmatpush2.bf16.msra.mxu0 0
      %3253 = vmatprep.subr.bf16.mxu0 0
      %3254 = vmatpush2.bf16.msra.mxu0 0
      %3255 = vmatprep.mubr.bf16.mxu0 0
      %3256 = vmatmul.mubr.bf16.gmra.mxu0 %v3170
      %v3257 = vpop.f32.mrf.mxu0
      %v3258 = vadd.f32 0.0, %v3257
      %v3259 = vpop.f32.mrf.mxu0
      %v3260 = vpop.f32.mrf.mxu0
      %v3261 = vadd.f32 0.0, %v3260
      %v3262 = vpop.f32.mrf.mxu0
      %3263 = vmatprep.mubr.bf16.mxu0 0
      %3264 = vmatmul.mubr.bf16.gmra.mxu0 %v3173
      %v3265 = vpop.f32.mrf.mxu0
      %v3266 = vadd.f32 0.0, %v3265
      %v3267 = vpop.f32.mrf.mxu0
      %v3268 = vpop.f32.mrf.mxu0
      %v3269 = vadd.f32 0.0, %v3268
      %v3270 = vpop.f32.mrf.mxu0
      %3271 = vmatprep.mubr.bf16.mxu0 0
      %3272 = vmatmul.mubr.bf16.gmra.mxu0 %v3176
      %v3273 = vpop.f32.mrf.mxu0
      %v3274 = vadd.f32 0.0, %v3273
      %v3275 = vpop.f32.mrf.mxu0
      %v3276 = vpop.f32.mrf.mxu0
      %v3277 = vadd.f32 0.0, %v3276
      %v3278 = vpop.f32.mrf.mxu0
      %3279 = vmatprep.mubr.bf16.mxu0 0
      %3280 = vmatmul.mubr.bf16.gmra.mxu0 %v3179
      %v3281 = vpop.f32.mrf.mxu0
      %v3282 = vadd.f32 0.0, %v3281
      %v3283 = vpop.f32.mrf.mxu0
      %v3284 = vpop.f32.mrf.mxu0
      %v3285 = vadd.f32 0.0, %v3284
      %v3286 = vpop.f32.mrf.mxu0
      %3287 = vmatprep.mubr.bf16.mxu0 0
      %3288 = vmatmul.mubr.bf16.gmra.mxu0 %v3182
      %v3289 = vpop.f32.mrf.mxu0
      %v3290 = vadd.f32 0.0, %v3289
      %v3291 = vpop.f32.mrf.mxu0
      %v3292 = vpop.f32.mrf.mxu0
      %v3293 = vadd.f32 0.0, %v3292
      %v3294 = vpop.f32.mrf.mxu0
      %3295 = vmatprep.mubr.bf16.mxu0 0
      %3296 = vmatmul.mubr.bf16.gmra.mxu0 %v3185
      %v3297 = vpop.f32.mrf.mxu0
      %v3298 = vadd.f32 0.0, %v3297
      %v3299 = vpop.f32.mrf.mxu0
      %v3300 = vpop.f32.mrf.mxu0
      %v3301 = vadd.f32 0.0, %v3300
      %v3302 = vpop.f32.mrf.mxu0
      %3303 = vmatprep.mubr.bf16.mxu0 0
      %3304 = vmatmul.mubr.bf16.gmra.mxu0 %v3188
      %v3305 = vpop.f32.mrf.mxu0
      %v3306 = vadd.f32 0.0, %v3305
      %v3307 = vpop.f32.mrf.mxu0
      %v3308 = vpop.f32.mrf.mxu0
      %v3309 = vadd.f32 0.0, %v3308
      %v3310 = vpop.f32.mrf.mxu0
      %3311 = vmatprep.mubr.bf16.mxu0 0
      %3312 = vmatmul.mubr.bf16.gmra.mxu0 %v3191
      %v3313 = vpop.f32.mrf.mxu0
      %v3314 = vadd.f32 0.0, %v3313
      %v3315 = vpop.f32.mrf.mxu0
      %v3316 = vpop.f32.mrf.mxu0
      %v3317 = vadd.f32 0.0, %v3316
      %v3318 = vpop.f32.mrf.mxu0
      %3319 = vmatprep.mubr.bf16.mxu0 0
      %3320 = vmatmul.mubr.bf16.gmra.mxu0 %v3194
      %v3321 = vpop.f32.mrf.mxu0
      %v3322 = vadd.f32 0.0, %v3321
      %v3323 = vpop.f32.mrf.mxu0
      %v3324 = vpop.f32.mrf.mxu0
      %v3325 = vadd.f32 0.0, %v3324
      %v3326 = vpop.f32.mrf.mxu0
      %3327 = vmatprep.mubr.bf16.mxu0 0
      %3328 = vmatmul.mubr.bf16.gmra.mxu0 %v3197
      %v3329 = vpop.f32.mrf.mxu0
      %v3330 = vadd.f32 0.0, %v3329
      %v3331 = vpop.f32.mrf.mxu0
      %v3332 = vpop.f32.mrf.mxu0
      %v3333 = vadd.f32 0.0, %v3332
      %v3334 = vpop.f32.mrf.mxu0
      %3335 = vmatprep.mubr.bf16.mxu0 0
      %3336 = vmatmul.mubr.bf16.gmra.mxu0 %v3200
      %v3337 = vpop.f32.mrf.mxu0
      %v3338 = vadd.f32 0.0, %v3337
      %v3339 = vpop.f32.mrf.mxu0
      %v3340 = vpop.f32.mrf.mxu0
      %v3341 = vadd.f32 0.0, %v3340
      %v3342 = vpop.f32.mrf.mxu0
      %3343 = vmatprep.mubr.bf16.mxu0 0
      %3344 = vmatmul.mubr.bf16.gmra.mxu0 %v3203
      %v3345 = vpop.f32.mrf.mxu0
      %v3346 = vadd.f32 0.0, %v3345
      %v3347 = vpop.f32.mrf.mxu0
      %v3348 = vpop.f32.mrf.mxu0
      %v3349 = vadd.f32 0.0, %v3348
      %v3350 = vpop.f32.mrf.mxu0
      %3351 = vmatprep.mubr.bf16.mxu0 0
      %3352 = vmatmul.mubr.bf16.gmra.mxu0 %v3206
      %v3353 = vpop.f32.mrf.mxu0
      %v3354 = vadd.f32 0.0, %v3353
      %v3355 = vpop.f32.mrf.mxu0
      %v3356 = vpop.f32.mrf.mxu0
      %v3357 = vadd.f32 0.0, %v3356
      %v3358 = vpop.f32.mrf.mxu0
      %3359 = vmatprep.mubr.bf16.mxu0 0
      %3360 = vmatmul.mubr.bf16.gmra.mxu0 %v3209
      %v3361 = vpop.f32.mrf.mxu0
      %v3362 = vadd.f32 0.0, %v3361
      %v3363 = vpop.f32.mrf.mxu0
      %v3364 = vpop.f32.mrf.mxu0
      %v3365 = vadd.f32 0.0, %v3364
      %v3366 = vpop.f32.mrf.mxu0
      %3367 = vmatprep.mubr.bf16.mxu0 0
      %3368 = vmatmul.mubr.bf16.gmra.mxu0 %v3212
      %v3369 = vpop.f32.mrf.mxu0
      %v3370 = vadd.f32 0.0, %v3369
      %v3371 = vpop.f32.mrf.mxu0
      %v3372 = vpop.f32.mrf.mxu0
      %v3373 = vadd.f32 0.0, %v3372
      %v3374 = vpop.f32.mrf.mxu0
      %3375 = vmatprep.mubr.bf16.mxu0 0
      %3376 = vmatmul.mubr.bf16.gmra.mxu0 %v3215
      %v3377 = vpop.f32.mrf.mxu0
      %v3378 = vadd.f32 0.0, %v3377
      %v3379 = vpop.f32.mrf.mxu0
      %v3380 = vpop.f32.mrf.mxu0
      %v3381 = vadd.f32 0.0, %v3380
      %v3382 = vpop.f32.mrf.mxu0
      %3383 = vmatprep.mubr.bf16.mxu0 0
      %3384 = vmatmul.mubr.bf16.gmra.mxu0 %v3218
      %v3385 = vpop.f32.mrf.mxu0
      %v3386 = vadd.f32 0.0, %v3385
      %v3387 = vpop.f32.mrf.mxu0
      %v3388 = vpop.f32.mrf.mxu0
      %v3389 = vadd.f32 0.0, %v3388
      %v3390 = vpop.f32.mrf.mxu0
      %3391 = vmatprep.mubr.bf16.mxu0 0
      %3392 = vmatmul.mubr.bf16.gmra.mxu0 %v3221
      %v3393 = vpop.f32.mrf.mxu0
      %v3394 = vadd.f32 0.0, %v3393
      %v3395 = vpop.f32.mrf.mxu0
      %v3396 = vpop.f32.mrf.mxu0
      %v3397 = vadd.f32 0.0, %v3396
      %v3398 = vpop.f32.mrf.mxu0
      %3399 = vdwg.mxu0
      %v3400 = vadd.f32 %v3062, %v3258
      %v3401 = vadd.f32 %v3063, %v3261
      %v3402 = vadd.f32 %v3064, %v3266
      %v3403 = vadd.f32 %v3065, %v3269
      %v3404 = vadd.f32 %v3066, %v3274
      %v3405 = vadd.f32 %v3067, %v3277
      %v3406 = vadd.f32 %v3068, %v3282
      %v3407 = vadd.f32 %v3069, %v3285
      %v3408 = vadd.f32 %v3070, %v3290
      %v3409 = vadd.f32 %v3071, %v3293
      %v3410 = vadd.f32 %v3072, %v3298
      %v3411 = vadd.f32 %v3073, %v3301
      %v3412 = vadd.f32 %v3074, %v3306
      %v3413 = vadd.f32 %v3075, %v3309
      %v3414 = vadd.f32 %v3076, %v3314
      %v3415 = vadd.f32 %v3077, %v3317
      %v3416 = vadd.f32 %v3078, %v3322
      %v3417 = vadd.f32 %v3079, %v3325
      %v3418 = vadd.f32 %v3080, %v3330
      %v3419 = vadd.f32 %v3081, %v3333
      %v3420 = vadd.f32 %v3082, %v3338
      %v3421 = vadd.f32 %v3083, %v3341
      %v3422 = vadd.f32 %v3084, %v3346
      %v3423 = vadd.f32 %v3085, %v3349
      %v3424 = vadd.f32 %v3086, %v3354
      %v3425 = vadd.f32 %v3087, %v3357
      %v3426 = vadd.f32 %v3088, %v3362
      %v3427 = vadd.f32 %v3089, %v3365
      %v3428 = vadd.f32 %v3090, %v3370
      %v3429 = vadd.f32 %v3091, %v3373
      %v3430 = vadd.f32 %v3092, %v3378
      %v3431 = vadd.f32 %v3093, %v3381
      %v3432 = vadd.f32 %v3094, %v3386
      %v3433 = vadd.f32 %v3095, %v3389
      %v3434 = vadd.f32 %v3096, %v3394
      %v3435 = vadd.f32 %v3097, %v3397
      %v3436 = vld [vmem:[#allocation2 + $0x25] sm:$0xff]
      %v3437 = vld [vmem:[#allocation2 + $0x2d] sm:$0xff]
      %v3438 = vld [vmem:[#allocation2 + $0x35] sm:$0xff]
      %v3439 = vld [vmem:[#allocation2 + $0x3d] sm:$0xff]
      %v3440 = vld [vmem:[#allocation2 + $0x45] sm:$0xff]
      %v3441 = vld [vmem:[#allocation2 + $0x4d] sm:$0xff]
      %v3442 = vld [vmem:[#allocation2 + $0x55] sm:$0xff]
      %v3443 = vld [vmem:[#allocation2 + $0x5d] sm:$0xff]
      %v3444 = vld [vmem:[#allocation2 + $0x65] sm:$0xff]
      %v3445 = vld [vmem:[#allocation2 + $0x6d] sm:$0xff]
      %v3446 = vld [vmem:[#allocation2 + $0x75] sm:$0xff]
      %v3447 = vld [vmem:[#allocation2 + $0x7d] sm:$0xff]
      %v3448 = vld [vmem:[#allocation2 + $0x85] sm:$0xff]
      %v3449 = vld [vmem:[#allocation2 + $0x8d] sm:$0xff]
      %v3450 = vld [vmem:[#allocation2 + $0x95] sm:$0xff]
      %v3451 = vld [vmem:[#allocation2 + $0x9d] sm:$0xff]
      %v3452 = vld [vmem:[#allocation2 + $0xa5] sm:$0xff]
      %v3453 = vld [vmem:[#allocation2 + $0xad] sm:$0xff]
      %v3454 = vld [vmem:[#allocation2 + $0xb5] sm:$0xff]
      %v3455 = vld [vmem:[#allocation2 + $0xbd] sm:$0xff]
      %v3456 = vld [vmem:[#allocation2 + $0xc5] sm:$0xff]
      %v3457 = vld [vmem:[#allocation2 + $0xcd] sm:$0xff]
      %v3458 = vld [vmem:[#allocation2 + $0xd5] sm:$0xff]
      %v3459 = vld [vmem:[#allocation2 + $0xdd] sm:$0xff]
      %v3460 = vld [vmem:[#allocation2 + $0xe5] sm:$0xff]
      %v3461 = vld [vmem:[#allocation2 + $0xed] sm:$0xff]
      %v3462 = vld [vmem:[#allocation2 + $0xf5] sm:$0xff]
      %v3463 = vld [vmem:[#allocation2 + $0xfd] sm:$0xff]
      %v3464 = vld [vmem:[#allocation2 + $0x105] sm:$0xff]
      %v3465 = vld [vmem:[#allocation2 + $0x10d] sm:$0xff]
      %v3466 = vld [vmem:[#allocation2 + $0x115] sm:$0xff]
      %v3467 = vld [vmem:[#allocation2 + $0x11d] sm:$0xff]
      %v3468 = vld [vmem:[#allocation2 + $0x125] sm:$0xff]
      %v3469 = vld [vmem:[#allocation2 + $0x12d] sm:$0xff]
      %v3470 = vld [vmem:[#allocation2 + $0x135] sm:$0xff]
      %v3471 = vld [vmem:[#allocation2 + $0x13d] sm:$0xff]
      %v3472 = vpack.c.bf16 %v3437, %v3436
      %v3473 = vpack.c.bf16 %v3439, %v3438
      %v3474 = vpack.c.bf16 %v3441, %v3440
      %v3475 = vpack.c.bf16 %v3443, %v3442
      %v3476 = vpack.c.bf16 %v3445, %v3444
      %v3477 = vpack.c.bf16 %v3447, %v3446
      %v3478 = vpack.c.bf16 %v3449, %v3448
      %v3479 = vpack.c.bf16 %v3451, %v3450
      %v3480 = vpack.c.bf16 %v3453, %v3452
      %v3481 = vpack.c.bf16 %v3455, %v3454
      %v3482 = vpack.c.bf16 %v3457, %v3456
      %v3483 = vpack.c.bf16 %v3459, %v3458
      %v3484 = vpack.c.bf16 %v3461, %v3460
      %v3485 = vpack.c.bf16 %v3463, %v3462
      %v3486 = vpack.c.bf16 %v3465, %v3464
      %v3487 = vpack.c.bf16 %v3467, %v3466
      %v3488 = vpack.c.bf16 %v3469, %v3468
      %v3489 = vpack.c.bf16 %v3471, %v3470
      %s3490 = scalar_lea.vmem %s3, 112
      %v3491 = vld [vmem:[%s3490] sm:$0xf]
      %v3492 = vld [vmem:[%s3490 + $0x4] sm:$0xf]
      %v3493 = vld [vmem:[%s3490 + $0x8] sm:$0xf]
      %v3494 = vld [vmem:[%s3490 + $0xc] sm:$0xf]
      %v3499 = vunpack.c.l.b16 %v3491
      %v3500 = vunpack.c.l.b16 %v3492
      %v3501 = vunpack.c.l.b16 %v3493
      %v3502 = vunpack.c.l.b16 %v3494
      %v3503 = vpack.c.b16 %v3500, %v3499
      %v3504 = vpack.c.b16 %v3502, %v3501
      %v3508 = vsel %vm1101, %v3472, 0
      %v3511 = vsel %vm1101, %v3473, 0
      %v3514 = vsel %vm1101, %v3474, 0
      %v3517 = vsel %vm1101, %v3475, 0
      %v3520 = vsel %vm1101, %v3476, 0
      %v3523 = vsel %vm1101, %v3477, 0
      %v3526 = vsel %vm1101, %v3478, 0
      %v3529 = vsel %vm1101, %v3479, 0
      %v3532 = vsel %vm1101, %v3480, 0
      %v3535 = vsel %vm1101, %v3481, 0
      %v3538 = vsel %vm1101, %v3482, 0
      %v3541 = vsel %vm1101, %v3483, 0
      %v3544 = vsel %vm1101, %v3484, 0
      %v3547 = vsel %vm1101, %v3485, 0
      %v3550 = vsel %vm1101, %v3486, 0
      %v3553 = vsel %vm1101, %v3487, 0
      %v3556 = vsel %vm1101, %v3488, 0
      %v3559 = vsel %vm1101, %v3489, 0
      %3561 = vmatprep.subr.bf16.mxu0 0
      %3562 = vmatpush1.bf16.msra.mxu0 0
      %3563 = vmatprep.subr.bf16.mxu0 0
      %3564 = vmatpush1.bf16.msra.mxu0 0
      %3565 = vmatprep.subr.bf16.mxu0 0
      %3566 = vmatpush1.bf16.msra.mxu0 0
      %3567 = vmatprep.subr.bf16.mxu0 0
      %3568 = vmatpush1.bf16.msra.mxu0 0
      %3569 = vmatprep.subr.bf16.mxu0 0
      %3570 = vmatpush1.bf16.msra.mxu0 0
      %3571 = vmatprep.subr.bf16.mxu0 0
      %3572 = vmatpush1.bf16.msra.mxu0 0
      %3573 = vmatprep.subr.bf16.mxu0 0
      %3574 = vmatpush1.bf16.msra.mxu0 %v3504
      %3575 = vmatprep.subr.bf16.mxu0 0
      %3576 = vmatpush1.bf16.msra.mxu0 %v3503
      %3577 = vmatprep.subr.bf16.mxu0 0
      %3578 = vmatpush2.bf16.msra.mxu0 0
      %3579 = vmatprep.subr.bf16.mxu0 0
      %3580 = vmatpush2.bf16.msra.mxu0 0
      %3581 = vmatprep.subr.bf16.mxu0 0
      %3582 = vmatpush2.bf16.msra.mxu0 0
      %3583 = vmatprep.subr.bf16.mxu0 0
      %3584 = vmatpush2.bf16.msra.mxu0 0
      %3585 = vmatprep.subr.bf16.mxu0 0
      %3586 = vmatpush2.bf16.msra.mxu0 0
      %3587 = vmatprep.subr.bf16.mxu0 0
      %3588 = vmatpush2.bf16.msra.mxu0 0
      %3589 = vmatprep.subr.bf16.mxu0 0
      %3590 = vmatpush2.bf16.msra.mxu0 0
      %3591 = vmatprep.subr.bf16.mxu0 0
      %3592 = vmatpush2.bf16.msra.mxu0 0
      %3593 = vmatprep.mubr.bf16.mxu0 0
      %3594 = vmatmul.mubr.bf16.gmra.mxu0 %v3508
      %v3595 = vpop.f32.mrf.mxu0
      %v3596 = vadd.f32 0.0, %v3595
      %v3597 = vpop.f32.mrf.mxu0
      %v3598 = vpop.f32.mrf.mxu0
      %v3599 = vadd.f32 0.0, %v3598
      %v3600 = vpop.f32.mrf.mxu0
      %3601 = vmatprep.mubr.bf16.mxu0 0
      %3602 = vmatmul.mubr.bf16.gmra.mxu0 %v3511
      %v3603 = vpop.f32.mrf.mxu0
      %v3604 = vadd.f32 0.0, %v3603
      %v3605 = vpop.f32.mrf.mxu0
      %v3606 = vpop.f32.mrf.mxu0
      %v3607 = vadd.f32 0.0, %v3606
      %v3608 = vpop.f32.mrf.mxu0
      %3609 = vmatprep.mubr.bf16.mxu0 0
      %3610 = vmatmul.mubr.bf16.gmra.mxu0 %v3514
      %v3611 = vpop.f32.mrf.mxu0
      %v3612 = vadd.f32 0.0, %v3611
      %v3613 = vpop.f32.mrf.mxu0
      %v3614 = vpop.f32.mrf.mxu0
      %v3615 = vadd.f32 0.0, %v3614
      %v3616 = vpop.f32.mrf.mxu0
      %3617 = vmatprep.mubr.bf16.mxu0 0
      %3618 = vmatmul.mubr.bf16.gmra.mxu0 %v3517
      %v3619 = vpop.f32.mrf.mxu0
      %v3620 = vadd.f32 0.0, %v3619
      %v3621 = vpop.f32.mrf.mxu0
      %v3622 = vpop.f32.mrf.mxu0
      %v3623 = vadd.f32 0.0, %v3622
      %v3624 = vpop.f32.mrf.mxu0
      %3625 = vmatprep.mubr.bf16.mxu0 0
      %3626 = vmatmul.mubr.bf16.gmra.mxu0 %v3520
      %v3627 = vpop.f32.mrf.mxu0
      %v3628 = vadd.f32 0.0, %v3627
      %v3629 = vpop.f32.mrf.mxu0
      %v3630 = vpop.f32.mrf.mxu0
      %v3631 = vadd.f32 0.0, %v3630
      %v3632 = vpop.f32.mrf.mxu0
      %3633 = vmatprep.mubr.bf16.mxu0 0
      %3634 = vmatmul.mubr.bf16.gmra.mxu0 %v3523
      %v3635 = vpop.f32.mrf.mxu0
      %v3636 = vadd.f32 0.0, %v3635
      %v3637 = vpop.f32.mrf.mxu0
      %v3638 = vpop.f32.mrf.mxu0
      %v3639 = vadd.f32 0.0, %v3638
      %v3640 = vpop.f32.mrf.mxu0
      %3641 = vmatprep.mubr.bf16.mxu0 0
      %3642 = vmatmul.mubr.bf16.gmra.mxu0 %v3526
      %v3643 = vpop.f32.mrf.mxu0
      %v3644 = vadd.f32 0.0, %v3643
      %v3645 = vpop.f32.mrf.mxu0
      %v3646 = vpop.f32.mrf.mxu0
      %v3647 = vadd.f32 0.0, %v3646
      %v3648 = vpop.f32.mrf.mxu0
      %3649 = vmatprep.mubr.bf16.mxu0 0
      %3650 = vmatmul.mubr.bf16.gmra.mxu0 %v3529
      %v3651 = vpop.f32.mrf.mxu0
      %v3652 = vadd.f32 0.0, %v3651
      %v3653 = vpop.f32.mrf.mxu0
      %v3654 = vpop.f32.mrf.mxu0
      %v3655 = vadd.f32 0.0, %v3654
      %v3656 = vpop.f32.mrf.mxu0
      %3657 = vmatprep.mubr.bf16.mxu0 0
      %3658 = vmatmul.mubr.bf16.gmra.mxu0 %v3532
      %v3659 = vpop.f32.mrf.mxu0
      %v3660 = vadd.f32 0.0, %v3659
      %v3661 = vpop.f32.mrf.mxu0
      %v3662 = vpop.f32.mrf.mxu0
      %v3663 = vadd.f32 0.0, %v3662
      %v3664 = vpop.f32.mrf.mxu0
      %3665 = vmatprep.mubr.bf16.mxu0 0
      %3666 = vmatmul.mubr.bf16.gmra.mxu0 %v3535
      %v3667 = vpop.f32.mrf.mxu0
      %v3668 = vadd.f32 0.0, %v3667
      %v3669 = vpop.f32.mrf.mxu0
      %v3670 = vpop.f32.mrf.mxu0
      %v3671 = vadd.f32 0.0, %v3670
      %v3672 = vpop.f32.mrf.mxu0
      %3673 = vmatprep.mubr.bf16.mxu0 0
      %3674 = vmatmul.mubr.bf16.gmra.mxu0 %v3538
      %v3675 = vpop.f32.mrf.mxu0
      %v3676 = vadd.f32 0.0, %v3675
      %v3677 = vpop.f32.mrf.mxu0
      %v3678 = vpop.f32.mrf.mxu0
      %v3679 = vadd.f32 0.0, %v3678
      %v3680 = vpop.f32.mrf.mxu0
      %3681 = vmatprep.mubr.bf16.mxu0 0
      %3682 = vmatmul.mubr.bf16.gmra.mxu0 %v3541
      %v3683 = vpop.f32.mrf.mxu0
      %v3684 = vadd.f32 0.0, %v3683
      %v3685 = vpop.f32.mrf.mxu0
      %v3686 = vpop.f32.mrf.mxu0
      %v3687 = vadd.f32 0.0, %v3686
      %v3688 = vpop.f32.mrf.mxu0
      %3689 = vmatprep.mubr.bf16.mxu0 0
      %3690 = vmatmul.mubr.bf16.gmra.mxu0 %v3544
      %v3691 = vpop.f32.mrf.mxu0
      %v3692 = vadd.f32 0.0, %v3691
      %v3693 = vpop.f32.mrf.mxu0
      %v3694 = vpop.f32.mrf.mxu0
      %v3695 = vadd.f32 0.0, %v3694
      %v3696 = vpop.f32.mrf.mxu0
      %3697 = vmatprep.mubr.bf16.mxu0 0
      %3698 = vmatmul.mubr.bf16.gmra.mxu0 %v3547
      %v3699 = vpop.f32.mrf.mxu0
      %v3700 = vadd.f32 0.0, %v3699
      %v3701 = vpop.f32.mrf.mxu0
      %v3702 = vpop.f32.mrf.mxu0
      %v3703 = vadd.f32 0.0, %v3702
      %v3704 = vpop.f32.mrf.mxu0
      %3705 = vmatprep.mubr.bf16.mxu0 0
      %3706 = vmatmul.mubr.bf16.gmra.mxu0 %v3550
      %v3707 = vpop.f32.mrf.mxu0
      %v3708 = vadd.f32 0.0, %v3707
      %v3709 = vpop.f32.mrf.mxu0
      %v3710 = vpop.f32.mrf.mxu0
      %v3711 = vadd.f32 0.0, %v3710
      %v3712 = vpop.f32.mrf.mxu0
      %3713 = vmatprep.mubr.bf16.mxu0 0
      %3714 = vmatmul.mubr.bf16.gmra.mxu0 %v3553
      %v3715 = vpop.f32.mrf.mxu0
      %v3716 = vadd.f32 0.0, %v3715
      %v3717 = vpop.f32.mrf.mxu0
      %v3718 = vpop.f32.mrf.mxu0
      %v3719 = vadd.f32 0.0, %v3718
      %v3720 = vpop.f32.mrf.mxu0
      %3721 = vmatprep.mubr.bf16.mxu0 0
      %3722 = vmatmul.mubr.bf16.gmra.mxu0 %v3556
      %v3723 = vpop.f32.mrf.mxu0
      %v3724 = vadd.f32 0.0, %v3723
      %v3725 = vpop.f32.mrf.mxu0
      %v3726 = vpop.f32.mrf.mxu0
      %v3727 = vadd.f32 0.0, %v3726
      %v3728 = vpop.f32.mrf.mxu0
      %3729 = vmatprep.mubr.bf16.mxu0 0
      %3730 = vmatmul.mubr.bf16.gmra.mxu0 %v3559
      %v3731 = vpop.f32.mrf.mxu0
      %v3732 = vadd.f32 0.0, %v3731
      %v3733 = vpop.f32.mrf.mxu0
      %v3734 = vpop.f32.mrf.mxu0
      %v3735 = vadd.f32 0.0, %v3734
      %v3736 = vpop.f32.mrf.mxu0
      %3737 = vdwg.mxu0
      %v3738 = vadd.f32 %v3400, %v3596
      %v3739 = vadd.f32 %v3401, %v3599
      %v3740 = vadd.f32 %v3402, %v3604
      %v3741 = vadd.f32 %v3403, %v3607
      %v3742 = vadd.f32 %v3404, %v3612
      %v3743 = vadd.f32 %v3405, %v3615
      %v3744 = vadd.f32 %v3406, %v3620
      %v3745 = vadd.f32 %v3407, %v3623
      %v3746 = vadd.f32 %v3408, %v3628
      %v3747 = vadd.f32 %v3409, %v3631
      %v3748 = vadd.f32 %v3410, %v3636
      %v3749 = vadd.f32 %v3411, %v3639
      %v3750 = vadd.f32 %v3412, %v3644
      %v3751 = vadd.f32 %v3413, %v3647
      %v3752 = vadd.f32 %v3414, %v3652
      %v3753 = vadd.f32 %v3415, %v3655
      %v3754 = vadd.f32 %v3416, %v3660
      %v3755 = vadd.f32 %v3417, %v3663
      %v3756 = vadd.f32 %v3418, %v3668
      %v3757 = vadd.f32 %v3419, %v3671
      %v3758 = vadd.f32 %v3420, %v3676
      %v3759 = vadd.f32 %v3421, %v3679
      %v3760 = vadd.f32 %v3422, %v3684
      %v3761 = vadd.f32 %v3423, %v3687
      %v3762 = vadd.f32 %v3424, %v3692
      %v3763 = vadd.f32 %v3425, %v3695
      %v3764 = vadd.f32 %v3426, %v3700
      %v3765 = vadd.f32 %v3427, %v3703
      %v3766 = vadd.f32 %v3428, %v3708
      %v3767 = vadd.f32 %v3429, %v3711
      %v3768 = vadd.f32 %v3430, %v3716
      %v3769 = vadd.f32 %v3431, %v3719
      %v3770 = vadd.f32 %v3432, %v3724
      %v3771 = vadd.f32 %v3433, %v3727
      %v3772 = vadd.f32 %v3434, %v3732
      %v3773 = vadd.f32 %v3435, %v3735
      %v3774 = vld [vmem:[#allocation2 + $0x26] sm:$0xff]
      %v3775 = vld [vmem:[#allocation2 + $0x2e] sm:$0xff]
      %v3776 = vld [vmem:[#allocation2 + $0x36] sm:$0xff]
      %v3777 = vld [vmem:[#allocation2 + $0x3e] sm:$0xff]
      %v3778 = vld [vmem:[#allocation2 + $0x46] sm:$0xff]
      %v3779 = vld [vmem:[#allocation2 + $0x4e] sm:$0xff]
      %v3780 = vld [vmem:[#allocation2 + $0x56] sm:$0xff]
      %v3781 = vld [vmem:[#allocation2 + $0x5e] sm:$0xff]
      %v3782 = vld [vmem:[#allocation2 + $0x66] sm:$0xff]
      %v3783 = vld [vmem:[#allocation2 + $0x6e] sm:$0xff]
      %v3784 = vld [vmem:[#allocation2 + $0x76] sm:$0xff]
      %v3785 = vld [vmem:[#allocation2 + $0x7e] sm:$0xff]
      %v3786 = vld [vmem:[#allocation2 + $0x86] sm:$0xff]
      %v3787 = vld [vmem:[#allocation2 + $0x8e] sm:$0xff]
      %v3788 = vld [vmem:[#allocation2 + $0x96] sm:$0xff]
      %v3789 = vld [vmem:[#allocation2 + $0x9e] sm:$0xff]
      %v3790 = vld [vmem:[#allocation2 + $0xa6] sm:$0xff]
      %v3791 = vld [vmem:[#allocation2 + $0xae] sm:$0xff]
      %v3792 = vld [vmem:[#allocation2 + $0xb6] sm:$0xff]
      %v3793 = vld [vmem:[#allocation2 + $0xbe] sm:$0xff]
      %v3794 = vld [vmem:[#allocation2 + $0xc6] sm:$0xff]
      %v3795 = vld [vmem:[#allocation2 + $0xce] sm:$0xff]
      %v3796 = vld [vmem:[#allocation2 + $0xd6] sm:$0xff]
      %v3797 = vld [vmem:[#allocation2 + $0xde] sm:$0xff]
      %v3798 = vld [vmem:[#allocation2 + $0xe6] sm:$0xff]
      %v3799 = vld [vmem:[#allocation2 + $0xee] sm:$0xff]
      %v3800 = vld [vmem:[#allocation2 + $0xf6] sm:$0xff]
      %v3801 = vld [vmem:[#allocation2 + $0xfe] sm:$0xff]
      %v3802 = vld [vmem:[#allocation2 + $0x106] sm:$0xff]
      %v3803 = vld [vmem:[#allocation2 + $0x10e] sm:$0xff]
      %v3804 = vld [vmem:[#allocation2 + $0x116] sm:$0xff]
      %v3805 = vld [vmem:[#allocation2 + $0x11e] sm:$0xff]
      %v3806 = vld [vmem:[#allocation2 + $0x126] sm:$0xff]
      %v3807 = vld [vmem:[#allocation2 + $0x12e] sm:$0xff]
      %v3808 = vld [vmem:[#allocation2 + $0x136] sm:$0xff]
      %v3809 = vld [vmem:[#allocation2 + $0x13e] sm:$0xff]
      %v3810 = vpack.c.bf16 %v3775, %v3774
      %v3811 = vpack.c.bf16 %v3777, %v3776
      %v3812 = vpack.c.bf16 %v3779, %v3778
      %v3813 = vpack.c.bf16 %v3781, %v3780
      %v3814 = vpack.c.bf16 %v3783, %v3782
      %v3815 = vpack.c.bf16 %v3785, %v3784
      %v3816 = vpack.c.bf16 %v3787, %v3786
      %v3817 = vpack.c.bf16 %v3789, %v3788
      %v3818 = vpack.c.bf16 %v3791, %v3790
      %v3819 = vpack.c.bf16 %v3793, %v3792
      %v3820 = vpack.c.bf16 %v3795, %v3794
      %v3821 = vpack.c.bf16 %v3797, %v3796
      %v3822 = vpack.c.bf16 %v3799, %v3798
      %v3823 = vpack.c.bf16 %v3801, %v3800
      %v3824 = vpack.c.bf16 %v3803, %v3802
      %v3825 = vpack.c.bf16 %v3805, %v3804
      %v3826 = vpack.c.bf16 %v3807, %v3806
      %v3827 = vpack.c.bf16 %v3809, %v3808
      %s3828 = scalar_lea.vmem %s3, 128
      %v3829 = vld [vmem:[%s3828] sm:$0xf]
      %v3830 = vld [vmem:[%s3828 + $0x4] sm:$0xf]
      %v3831 = vld [vmem:[%s3828 + $0x8] sm:$0xf]
      %v3832 = vld [vmem:[%s3828 + $0xc] sm:$0xf]
      %v3837 = vunpack.c.l.b16 %v3829
      %v3838 = vunpack.c.l.b16 %v3830
      %v3839 = vunpack.c.l.b16 %v3831
      %v3840 = vunpack.c.l.b16 %v3832
      %v3841 = vpack.c.b16 %v3838, %v3837
      %v3842 = vpack.c.b16 %v3840, %v3839
      %v3846 = vsel %vm1101, %v3810, 0
      %v3849 = vsel %vm1101, %v3811, 0
      %v3852 = vsel %vm1101, %v3812, 0
      %v3855 = vsel %vm1101, %v3813, 0
      %v3858 = vsel %vm1101, %v3814, 0
      %v3861 = vsel %vm1101, %v3815, 0
      %v3864 = vsel %vm1101, %v3816, 0
      %v3867 = vsel %vm1101, %v3817, 0
      %v3870 = vsel %vm1101, %v3818, 0
      %v3873 = vsel %vm1101, %v3819, 0
      %v3876 = vsel %vm1101, %v3820, 0
      %v3879 = vsel %vm1101, %v3821, 0
      %v3882 = vsel %vm1101, %v3822, 0
      %v3885 = vsel %vm1101, %v3823, 0
      %v3888 = vsel %vm1101, %v3824, 0
      %v3891 = vsel %vm1101, %v3825, 0
      %v3894 = vsel %vm1101, %v3826, 0
      %v3897 = vsel %vm1101, %v3827, 0
      %3899 = vmatprep.subr.bf16.mxu0 0
      %3900 = vmatpush1.bf16.msra.mxu0 0
      %3901 = vmatprep.subr.bf16.mxu0 0
      %3902 = vmatpush1.bf16.msra.mxu0 0
      %3903 = vmatprep.subr.bf16.mxu0 0
      %3904 = vmatpush1.bf16.msra.mxu0 0
      %3905 = vmatprep.subr.bf16.mxu0 0
      %3906 = vmatpush1.bf16.msra.mxu0 0
      %3907 = vmatprep.subr.bf16.mxu0 0
      %3908 = vmatpush1.bf16.msra.mxu0 0
      %3909 = vmatprep.subr.bf16.mxu0 0
      %3910 = vmatpush1.bf16.msra.mxu0 0
      %3911 = vmatprep.subr.bf16.mxu0 0
      %3912 = vmatpush1.bf16.msra.mxu0 %v3842
      %3913 = vmatprep.subr.bf16.mxu0 0
      %3914 = vmatpush1.bf16.msra.mxu0 %v3841
      %3915 = vmatprep.subr.bf16.mxu0 0
      %3916 = vmatpush2.bf16.msra.mxu0 0
      %3917 = vmatprep.subr.bf16.mxu0 0
      %3918 = vmatpush2.bf16.msra.mxu0 0
      %3919 = vmatprep.subr.bf16.mxu0 0
      %3920 = vmatpush2.bf16.msra.mxu0 0
      %3921 = vmatprep.subr.bf16.mxu0 0
      %3922 = vmatpush2.bf16.msra.mxu0 0
      %3923 = vmatprep.subr.bf16.mxu0 0
      %3924 = vmatpush2.bf16.msra.mxu0 0
      %3925 = vmatprep.subr.bf16.mxu0 0
      %3926 = vmatpush2.bf16.msra.mxu0 0
      %3927 = vmatprep.subr.bf16.mxu0 0
      %3928 = vmatpush2.bf16.msra.mxu0 0
      %3929 = vmatprep.subr.bf16.mxu0 0
      %3930 = vmatpush2.bf16.msra.mxu0 0
      %3931 = vmatprep.mubr.bf16.mxu0 0
      %3932 = vmatmul.mubr.bf16.gmra.mxu0 %v3846
      %v3933 = vpop.f32.mrf.mxu0
      %v3934 = vadd.f32 0.0, %v3933
      %v3935 = vpop.f32.mrf.mxu0
      %v3936 = vpop.f32.mrf.mxu0
      %v3937 = vadd.f32 0.0, %v3936
      %v3938 = vpop.f32.mrf.mxu0
      %3939 = vmatprep.mubr.bf16.mxu0 0
      %3940 = vmatmul.mubr.bf16.gmra.mxu0 %v3849
      %v3941 = vpop.f32.mrf.mxu0
      %v3942 = vadd.f32 0.0, %v3941
      %v3943 = vpop.f32.mrf.mxu0
      %v3944 = vpop.f32.mrf.mxu0
      %v3945 = vadd.f32 0.0, %v3944
      %v3946 = vpop.f32.mrf.mxu0
      %3947 = vmatprep.mubr.bf16.mxu0 0
      %3948 = vmatmul.mubr.bf16.gmra.mxu0 %v3852
      %v3949 = vpop.f32.mrf.mxu0
      %v3950 = vadd.f32 0.0, %v3949
      %v3951 = vpop.f32.mrf.mxu0
      %v3952 = vpop.f32.mrf.mxu0
      %v3953 = vadd.f32 0.0, %v3952
      %v3954 = vpop.f32.mrf.mxu0
      %3955 = vmatprep.mubr.bf16.mxu0 0
      %3956 = vmatmul.mubr.bf16.gmra.mxu0 %v3855
      %v3957 = vpop.f32.mrf.mxu0
      %v3958 = vadd.f32 0.0, %v3957
      %v3959 = vpop.f32.mrf.mxu0
      %v3960 = vpop.f32.mrf.mxu0
      %v3961 = vadd.f32 0.0, %v3960
      %v3962 = vpop.f32.mrf.mxu0
      %3963 = vmatprep.mubr.bf16.mxu0 0
      %3964 = vmatmul.mubr.bf16.gmra.mxu0 %v3858
      %v3965 = vpop.f32.mrf.mxu0
      %v3966 = vadd.f32 0.0, %v3965
      %v3967 = vpop.f32.mrf.mxu0
      %v3968 = vpop.f32.mrf.mxu0
      %v3969 = vadd.f32 0.0, %v3968
      %v3970 = vpop.f32.mrf.mxu0
      %3971 = vmatprep.mubr.bf16.mxu0 0
      %3972 = vmatmul.mubr.bf16.gmra.mxu0 %v3861
      %v3973 = vpop.f32.mrf.mxu0
      %v3974 = vadd.f32 0.0, %v3973
      %v3975 = vpop.f32.mrf.mxu0
      %v3976 = vpop.f32.mrf.mxu0
      %v3977 = vadd.f32 0.0, %v3976
      %v3978 = vpop.f32.mrf.mxu0
      %3979 = vmatprep.mubr.bf16.mxu0 0
      %3980 = vmatmul.mubr.bf16.gmra.mxu0 %v3864
      %v3981 = vpop.f32.mrf.mxu0
      %v3982 = vadd.f32 0.0, %v3981
      %v3983 = vpop.f32.mrf.mxu0
      %v3984 = vpop.f32.mrf.mxu0
      %v3985 = vadd.f32 0.0, %v3984
      %v3986 = vpop.f32.mrf.mxu0
      %3987 = vmatprep.mubr.bf16.mxu0 0
      %3988 = vmatmul.mubr.bf16.gmra.mxu0 %v3867
      %v3989 = vpop.f32.mrf.mxu0
      %v3990 = vadd.f32 0.0, %v3989
      %v3991 = vpop.f32.mrf.mxu0
      %v3992 = vpop.f32.mrf.mxu0
      %v3993 = vadd.f32 0.0, %v3992
      %v3994 = vpop.f32.mrf.mxu0
      %3995 = vmatprep.mubr.bf16.mxu0 0
      %3996 = vmatmul.mubr.bf16.gmra.mxu0 %v3870
      %v3997 = vpop.f32.mrf.mxu0
      %v3998 = vadd.f32 0.0, %v3997
      %v3999 = vpop.f32.mrf.mxu0
      %v4000 = vpop.f32.mrf.mxu0
      %v4001 = vadd.f32 0.0, %v4000
      %v4002 = vpop.f32.mrf.mxu0
      %4003 = vmatprep.mubr.bf16.mxu0 0
      %4004 = vmatmul.mubr.bf16.gmra.mxu0 %v3873
      %v4005 = vpop.f32.mrf.mxu0
      %v4006 = vadd.f32 0.0, %v4005
      %v4007 = vpop.f32.mrf.mxu0
      %v4008 = vpop.f32.mrf.mxu0
      %v4009 = vadd.f32 0.0, %v4008
      %v4010 = vpop.f32.mrf.mxu0
      %4011 = vmatprep.mubr.bf16.mxu0 0
      %4012 = vmatmul.mubr.bf16.gmra.mxu0 %v3876
      %v4013 = vpop.f32.mrf.mxu0
      %v4014 = vadd.f32 0.0, %v4013
      %v4015 = vpop.f32.mrf.mxu0
      %v4016 = vpop.f32.mrf.mxu0
      %v4017 = vadd.f32 0.0, %v4016
      %v4018 = vpop.f32.mrf.mxu0
      %4019 = vmatprep.mubr.bf16.mxu0 0
      %4020 = vmatmul.mubr.bf16.gmra.mxu0 %v3879
      %v4021 = vpop.f32.mrf.mxu0
      %v4022 = vadd.f32 0.0, %v4021
      %v4023 = vpop.f32.mrf.mxu0
      %v4024 = vpop.f32.mrf.mxu0
      %v4025 = vadd.f32 0.0, %v4024
      %v4026 = vpop.f32.mrf.mxu0
      %4027 = vmatprep.mubr.bf16.mxu0 0
      %4028 = vmatmul.mubr.bf16.gmra.mxu0 %v3882
      %v4029 = vpop.f32.mrf.mxu0
      %v4030 = vadd.f32 0.0, %v4029
      %v4031 = vpop.f32.mrf.mxu0
      %v4032 = vpop.f32.mrf.mxu0
      %v4033 = vadd.f32 0.0, %v4032
      %v4034 = vpop.f32.mrf.mxu0
      %4035 = vmatprep.mubr.bf16.mxu0 0
      %4036 = vmatmul.mubr.bf16.gmra.mxu0 %v3885
      %v4037 = vpop.f32.mrf.mxu0
      %v4038 = vadd.f32 0.0, %v4037
      %v4039 = vpop.f32.mrf.mxu0
      %v4040 = vpop.f32.mrf.mxu0
      %v4041 = vadd.f32 0.0, %v4040
      %v4042 = vpop.f32.mrf.mxu0
      %4043 = vmatprep.mubr.bf16.mxu0 0
      %4044 = vmatmul.mubr.bf16.gmra.mxu0 %v3888
      %v4045 = vpop.f32.mrf.mxu0
      %v4046 = vadd.f32 0.0, %v4045
      %v4047 = vpop.f32.mrf.mxu0
      %v4048 = vpop.f32.mrf.mxu0
      %v4049 = vadd.f32 0.0, %v4048
      %v4050 = vpop.f32.mrf.mxu0
      %4051 = vmatprep.mubr.bf16.mxu0 0
      %4052 = vmatmul.mubr.bf16.gmra.mxu0 %v3891
      %v4053 = vpop.f32.mrf.mxu0
      %v4054 = vadd.f32 0.0, %v4053
      %v4055 = vpop.f32.mrf.mxu0
      %v4056 = vpop.f32.mrf.mxu0
      %v4057 = vadd.f32 0.0, %v4056
      %v4058 = vpop.f32.mrf.mxu0
      %4059 = vmatprep.mubr.bf16.mxu0 0
      %4060 = vmatmul.mubr.bf16.gmra.mxu0 %v3894
      %v4061 = vpop.f32.mrf.mxu0
      %v4062 = vadd.f32 0.0, %v4061
      %v4063 = vpop.f32.mrf.mxu0
      %v4064 = vpop.f32.mrf.mxu0
      %v4065 = vadd.f32 0.0, %v4064
      %v4066 = vpop.f32.mrf.mxu0
      %4067 = vmatprep.mubr.bf16.mxu0 0
      %4068 = vmatmul.mubr.bf16.gmra.mxu0 %v3897
      %v4069 = vpop.f32.mrf.mxu0
      %v4070 = vadd.f32 0.0, %v4069
      %v4071 = vpop.f32.mrf.mxu0
      %v4072 = vpop.f32.mrf.mxu0
      %v4073 = vadd.f32 0.0, %v4072
      %v4074 = vpop.f32.mrf.mxu0
      %4075 = vdwg.mxu0
      %v4076 = vadd.f32 %v3738, %v3934
      %v4077 = vadd.f32 %v3739, %v3937
      %v4078 = vadd.f32 %v3740, %v3942
      %v4079 = vadd.f32 %v3741, %v3945
      %v4080 = vadd.f32 %v3742, %v3950
      %v4081 = vadd.f32 %v3743, %v3953
      %v4082 = vadd.f32 %v3744, %v3958
      %v4083 = vadd.f32 %v3745, %v3961
      %v4084 = vadd.f32 %v3746, %v3966
      %v4085 = vadd.f32 %v3747, %v3969
      %v4086 = vadd.f32 %v3748, %v3974
      %v4087 = vadd.f32 %v3749, %v3977
      %v4088 = vadd.f32 %v3750, %v3982
      %v4089 = vadd.f32 %v3751, %v3985
      %v4090 = vadd.f32 %v3752, %v3990
      %v4091 = vadd.f32 %v3753, %v3993
      %v4092 = vadd.f32 %v3754, %v3998
      %v4093 = vadd.f32 %v3755, %v4001
      %v4094 = vadd.f32 %v3756, %v4006
      %v4095 = vadd.f32 %v3757, %v4009
      %v4096 = vadd.f32 %v3758, %v4014
      %v4097 = vadd.f32 %v3759, %v4017
      %v4098 = vadd.f32 %v3760, %v4022
      %v4099 = vadd.f32 %v3761, %v4025
      %v4100 = vadd.f32 %v3762, %v4030
      %v4101 = vadd.f32 %v3763, %v4033
      %v4102 = vadd.f32 %v3764, %v4038
      %v4103 = vadd.f32 %v3765, %v4041
      %v4104 = vadd.f32 %v3766, %v4046
      %v4105 = vadd.f32 %v3767, %v4049
      %v4106 = vadd.f32 %v3768, %v4054
      %v4107 = vadd.f32 %v3769, %v4057
      %v4108 = vadd.f32 %v3770, %v4062
      %v4109 = vadd.f32 %v3771, %v4065
      %v4110 = vadd.f32 %v3772, %v4070
      %v4111 = vadd.f32 %v3773, %v4073
      %v4112 = vld [vmem:[%s4] sm:$0x1]
      %v4114 = vlaneseq
      %v4115 = vshrl.u32 %v4114, 7
      %v4116 = vsub.s32 0, %v4115
      %v4117 = vrot.slane %v4112, %v4116
      %v4119 = vadd.f32 %v4076, %v4117
      %v4120 = vadd.f32 %v4077, %v4117
      %v4121 = vadd.f32 %v4078, %v4117
      %v4122 = vadd.f32 %v4079, %v4117
      %v4123 = vadd.f32 %v4080, %v4117
      %v4124 = vadd.f32 %v4081, %v4117
      %v4125 = vadd.f32 %v4082, %v4117
      %v4126 = vadd.f32 %v4083, %v4117
      %v4127 = vadd.f32 %v4084, %v4117
      %v4128 = vadd.f32 %v4085, %v4117
      %v4129 = vadd.f32 %v4086, %v4117
      %v4130 = vadd.f32 %v4087, %v4117
      %v4131 = vadd.f32 %v4088, %v4117
      %v4132 = vadd.f32 %v4089, %v4117
      %v4133 = vadd.f32 %v4090, %v4117
      %v4134 = vadd.f32 %v4091, %v4117
      %v4135 = vadd.f32 %v4092, %v4117
      %v4136 = vadd.f32 %v4093, %v4117
      %v4137 = vadd.f32 %v4094, %v4117
      %v4138 = vadd.f32 %v4095, %v4117
      %v4139 = vadd.f32 %v4096, %v4117
      %v4140 = vadd.f32 %v4097, %v4117
      %v4141 = vadd.f32 %v4098, %v4117
      %v4142 = vadd.f32 %v4099, %v4117
      %v4143 = vadd.f32 %v4100, %v4117
      %v4144 = vadd.f32 %v4101, %v4117
      %v4145 = vadd.f32 %v4102, %v4117
      %v4146 = vadd.f32 %v4103, %v4117
      %v4147 = vadd.f32 %v4104, %v4117
      %v4148 = vadd.f32 %v4105, %v4117
      %v4149 = vadd.f32 %v4106, %v4117
      %v4150 = vadd.f32 %v4107, %v4117
      %v4151 = vadd.f32 %v4108, %v4117
      %v4152 = vadd.f32 %v4109, %v4117
      %v4153 = vadd.f32 %v4110, %v4117
      %v4154 = vadd.f32 %v4111, %v4117
      %v4155 = vld [vmem:[%s10] sm:$0xff]
      %v4156 = vld [vmem:[%s10 + $0x8] sm:$0xff]
      %v4157 = vld [vmem:[%s10 + $0x10] sm:$0xff]
      %v4158 = vld [vmem:[%s10 + $0x18] sm:$0xff]
      %v4159 = vld [vmem:[%s10 + $0x20] sm:$0xff]
      %v4160 = vld [vmem:[%s10 + $0x28] sm:$0xff]
      %v4161 = vld [vmem:[%s10 + $0x30] sm:$0xff]
      %v4162 = vld [vmem:[%s10 + $0x38] sm:$0xff]
      %v4163 = vld [vmem:[%s10 + $0x40] sm:$0xff]
      %v4164 = vld [vmem:[%s10 + $0x48] sm:$0xff]
      %v4165 = vld [vmem:[%s10 + $0x50] sm:$0xff]
      %v4166 = vld [vmem:[%s10 + $0x58] sm:$0xff]
      %v4167 = vld [vmem:[%s10 + $0x60] sm:$0xff]
      %v4168 = vld [vmem:[%s10 + $0x68] sm:$0xff]
      %v4169 = vld [vmem:[%s10 + $0x70] sm:$0xff]
      %v4170 = vld [vmem:[%s10 + $0x78] sm:$0xff]
      %v4171 = vld [vmem:[%s10 + $0x80] sm:$0xff]
      %v4172 = vld [vmem:[%s10 + $0x88] sm:$0xff]
      %v4173 = vld [vmem:[%s10 + $0x90] sm:$0xff]
      %v4174 = vld [vmem:[%s10 + $0x98] sm:$0xff]
      %v4175 = vld [vmem:[%s10 + $0xa0] sm:$0xff]
      %v4176 = vld [vmem:[%s10 + $0xa8] sm:$0xff]
      %v4177 = vld [vmem:[%s10 + $0xb0] sm:$0xff]
      %v4178 = vld [vmem:[%s10 + $0xb8] sm:$0xff]
      %v4179 = vld [vmem:[%s10 + $0xc0] sm:$0xff]
      %v4180 = vld [vmem:[%s10 + $0xc8] sm:$0xff]
      %v4181 = vld [vmem:[%s10 + $0xd0] sm:$0xff]
      %v4182 = vld [vmem:[%s10 + $0xd8] sm:$0xff]
      %v4183 = vld [vmem:[%s10 + $0xe0] sm:$0xff]
      %v4184 = vld [vmem:[%s10 + $0xe8] sm:$0xff]
      %v4185 = vld [vmem:[%s10 + $0xf0] sm:$0xff]
      %v4186 = vld [vmem:[%s10 + $0xf8] sm:$0xff]
      %v4187 = vld [vmem:[%s10 + $0x100] sm:$0xff]
      %v4188 = vld [vmem:[%s10 + $0x108] sm:$0xff]
      %v4189 = vld [vmem:[%s10 + $0x110] sm:$0xff]
      %v4190 = vld [vmem:[%s10 + $0x118] sm:$0xff]
      %4192 = vset.pattern.permute.xlu0 0
      %4193 = vperm.xlu0 %4192, %v4155
      %v4194 = vpop.permute.xlu0 %4193
      %4197 = vset.pattern.permute.xlu0 0
      %4198 = vperm.xlu0 %4197, %v4156
      %v4199 = vpop.permute.xlu0 %4198
      %4202 = vset.pattern.permute.xlu0 0
      %4203 = vperm.xlu0 %4202, %v4157
      %v4204 = vpop.permute.xlu0 %4203
      %4207 = vset.pattern.permute.xlu0 0
      %4208 = vperm.xlu0 %4207, %v4158
      %v4209 = vpop.permute.xlu0 %4208
      %4212 = vset.pattern.permute.xlu0 0
      %4213 = vperm.xlu0 %4212, %v4159
      %v4214 = vpop.permute.xlu0 %4213
      %4217 = vset.pattern.permute.xlu0 0
      %4218 = vperm.xlu0 %4217, %v4160
      %v4219 = vpop.permute.xlu0 %4218
      %4222 = vset.pattern.permute.xlu0 0
      %4223 = vperm.xlu0 %4222, %v4161
      %v4224 = vpop.permute.xlu0 %4223
      %4227 = vset.pattern.permute.xlu0 0
      %4228 = vperm.xlu0 %4227, %v4162
      %v4229 = vpop.permute.xlu0 %4228
      %4232 = vset.pattern.permute.xlu0 0
      %4233 = vperm.xlu0 %4232, %v4163
      %v4234 = vpop.permute.xlu0 %4233
      %4237 = vset.pattern.permute.xlu0 0
      %4238 = vperm.xlu0 %4237, %v4164
      %v4239 = vpop.permute.xlu0 %4238
      %4242 = vset.pattern.permute.xlu0 0
      %4243 = vperm.xlu0 %4242, %v4165
      %v4244 = vpop.permute.xlu0 %4243
      %4247 = vset.pattern.permute.xlu0 0
      %4248 = vperm.xlu0 %4247, %v4166
      %v4249 = vpop.permute.xlu0 %4248
      %4252 = vset.pattern.permute.xlu0 0
      %4253 = vperm.xlu0 %4252, %v4167
      %v4254 = vpop.permute.xlu0 %4253
      %4257 = vset.pattern.permute.xlu0 0
      %4258 = vperm.xlu0 %4257, %v4168
      %v4259 = vpop.permute.xlu0 %4258
      %4262 = vset.pattern.permute.xlu0 0
      %4263 = vperm.xlu0 %4262, %v4169
      %v4264 = vpop.permute.xlu0 %4263
      %4267 = vset.pattern.permute.xlu0 0
      %4268 = vperm.xlu0 %4267, %v4170
      %v4269 = vpop.permute.xlu0 %4268
      %4272 = vset.pattern.permute.xlu0 0
      %4273 = vperm.xlu0 %4272, %v4171
      %v4274 = vpop.permute.xlu0 %4273
      %4277 = vset.pattern.permute.xlu0 0
      %4278 = vperm.xlu0 %4277, %v4172
      %v4279 = vpop.permute.xlu0 %4278
      %4282 = vset.pattern.permute.xlu0 0
      %4283 = vperm.xlu0 %4282, %v4173
      %v4284 = vpop.permute.xlu0 %4283
      %4287 = vset.pattern.permute.xlu0 0
      %4288 = vperm.xlu0 %4287, %v4174
      %v4289 = vpop.permute.xlu0 %4288
      %4292 = vset.pattern.permute.xlu0 0
      %4293 = vperm.xlu0 %4292, %v4175
      %v4294 = vpop.permute.xlu0 %4293
      %4297 = vset.pattern.permute.xlu0 0
      %4298 = vperm.xlu0 %4297, %v4176
      %v4299 = vpop.permute.xlu0 %4298
      %4302 = vset.pattern.permute.xlu0 0
      %4303 = vperm.xlu0 %4302, %v4177
      %v4304 = vpop.permute.xlu0 %4303
      %4307 = vset.pattern.permute.xlu0 0
      %4308 = vperm.xlu0 %4307, %v4178
      %v4309 = vpop.permute.xlu0 %4308
      %4312 = vset.pattern.permute.xlu0 0
      %4313 = vperm.xlu0 %4312, %v4179
      %v4314 = vpop.permute.xlu0 %4313
      %4317 = vset.pattern.permute.xlu0 0
      %4318 = vperm.xlu0 %4317, %v4180
      %v4319 = vpop.permute.xlu0 %4318
      %4322 = vset.pattern.permute.xlu0 0
      %4323 = vperm.xlu0 %4322, %v4181
      %v4324 = vpop.permute.xlu0 %4323
      %4327 = vset.pattern.permute.xlu0 0
      %4328 = vperm.xlu0 %4327, %v4182
      %v4329 = vpop.permute.xlu0 %4328
      %4332 = vset.pattern.permute.xlu0 0
      %4333 = vperm.xlu0 %4332, %v4183
      %v4334 = vpop.permute.xlu0 %4333
      %4337 = vset.pattern.permute.xlu0 0
      %4338 = vperm.xlu0 %4337, %v4184
      %v4339 = vpop.permute.xlu0 %4338
      %4342 = vset.pattern.permute.xlu0 0
      %4343 = vperm.xlu0 %4342, %v4185
      %v4344 = vpop.permute.xlu0 %4343
      %4347 = vset.pattern.permute.xlu0 0
      %4348 = vperm.xlu0 %4347, %v4186
      %v4349 = vpop.permute.xlu0 %4348
      %4352 = vset.pattern.permute.xlu0 0
      %4353 = vperm.xlu0 %4352, %v4187
      %v4354 = vpop.permute.xlu0 %4353
      %4357 = vset.pattern.permute.xlu0 0
      %4358 = vperm.xlu0 %4357, %v4188
      %v4359 = vpop.permute.xlu0 %4358
      %4362 = vset.pattern.permute.xlu0 0
      %4363 = vperm.xlu0 %4362, %v4189
      %v4364 = vpop.permute.xlu0 %4363
      %4367 = vset.pattern.permute.xlu0 0
      %4368 = vperm.xlu0 %4367, %v4190
      %v4369 = vpop.permute.xlu0 %4368
      %v4371 = vmul.f32 %v4119, %v4194
      %v4372 = vmul.f32 %v4120, %v4199
      %v4373 = vmul.f32 %v4121, %v4204
      %v4374 = vmul.f32 %v4122, %v4209
      %v4375 = vmul.f32 %v4123, %v4214
      %v4376 = vmul.f32 %v4124, %v4219
      %v4377 = vmul.f32 %v4125, %v4224
      %v4378 = vmul.f32 %v4126, %v4229
      %v4379 = vmul.f32 %v4127, %v4234
      %v4380 = vmul.f32 %v4128, %v4239
      %v4381 = vmul.f32 %v4129, %v4244
      %v4382 = vmul.f32 %v4130, %v4249
      %v4383 = vmul.f32 %v4131, %v4254
      %v4384 = vmul.f32 %v4132, %v4259
      %v4385 = vmul.f32 %v4133, %v4264
      %v4386 = vmul.f32 %v4134, %v4269
      %v4387 = vmul.f32 %v4135, %v4274
      %v4388 = vmul.f32 %v4136, %v4279
      %v4389 = vmul.f32 %v4137, %v4284
      %v4390 = vmul.f32 %v4138, %v4289
      %v4391 = vmul.f32 %v4139, %v4294
      %v4392 = vmul.f32 %v4140, %v4299
      %v4393 = vmul.f32 %v4141, %v4304
      %v4394 = vmul.f32 %v4142, %v4309
      %v4395 = vmul.f32 %v4143, %v4314
      %v4396 = vmul.f32 %v4144, %v4319
      %v4397 = vmul.f32 %v4145, %v4324
      %v4398 = vmul.f32 %v4146, %v4329
      %v4399 = vmul.f32 %v4147, %v4334
      %v4400 = vmul.f32 %v4148, %v4339
      %v4401 = vmul.f32 %v4149, %v4344
      %v4402 = vmul.f32 %v4150, %v4349
      %v4403 = vmul.f32 %v4151, %v4354
      %v4404 = vmul.f32 %v4152, %v4359
      %v4405 = vmul.f32 %v4153, %v4364
      %v4406 = vmul.f32 %v4154, %v4369
      %v4407 = vsel %vm1101, %v4371, 0.0
      %v4408 = vsel %vm1101, %v4372, 0.0
      %v4409 = vadd.f32 %v4407, %v4408
      %v4410 = vsel %vm1101, %v4373, 0.0
      %v4411 = vadd.f32 %v4409, %v4410
      %v4412 = vsel %vm1101, %v4374, 0.0
      %v4413 = vadd.f32 %v4411, %v4412
      %v4414 = vsel %vm1101, %v4375, 0.0
      %v4415 = vadd.f32 %v4413, %v4414
      %v4416 = vsel %vm1101, %v4376, 0.0
      %v4417 = vadd.f32 %v4415, %v4416
      %v4418 = vsel %vm1101, %v4377, 0.0
      %v4419 = vadd.f32 %v4417, %v4418
      %v4420 = vsel %vm1101, %v4378, 0.0
      %v4421 = vadd.f32 %v4419, %v4420
      %v4422 = vsel %vm1101, %v4379, 0.0
      %v4423 = vadd.f32 %v4421, %v4422
      %v4424 = vsel %vm1101, %v4380, 0.0
      %v4425 = vadd.f32 %v4423, %v4424
      %v4426 = vsel %vm1101, %v4381, 0.0
      %v4427 = vadd.f32 %v4425, %v4426
      %v4428 = vsel %vm1101, %v4382, 0.0
      %v4429 = vadd.f32 %v4427, %v4428
      %v4430 = vsel %vm1101, %v4383, 0.0
      %v4431 = vadd.f32 %v4429, %v4430
      %v4432 = vsel %vm1101, %v4384, 0.0
      %v4433 = vadd.f32 %v4431, %v4432
      %v4434 = vsel %vm1101, %v4385, 0.0
      %v4435 = vadd.f32 %v4433, %v4434
      %v4436 = vsel %vm1101, %v4386, 0.0
      %v4437 = vadd.f32 %v4435, %v4436
      %v4438 = vsel %vm1101, %v4387, 0.0
      %v4439 = vadd.f32 %v4437, %v4438
      %v4440 = vsel %vm1101, %v4388, 0.0
      %v4441 = vadd.f32 %v4439, %v4440
      %v4442 = vsel %vm1101, %v4389, 0.0
      %v4443 = vadd.f32 %v4441, %v4442
      %v4444 = vsel %vm1101, %v4390, 0.0
      %v4445 = vadd.f32 %v4443, %v4444
      %v4446 = vsel %vm1101, %v4391, 0.0
      %v4447 = vadd.f32 %v4445, %v4446
      %v4448 = vsel %vm1101, %v4392, 0.0
      %v4449 = vadd.f32 %v4447, %v4448
      %v4450 = vsel %vm1101, %v4393, 0.0
      %v4451 = vadd.f32 %v4449, %v4450
      %v4452 = vsel %vm1101, %v4394, 0.0
      %v4453 = vadd.f32 %v4451, %v4452
      %v4454 = vsel %vm1101, %v4395, 0.0
      %v4455 = vadd.f32 %v4453, %v4454
      %v4456 = vsel %vm1101, %v4396, 0.0
      %v4457 = vadd.f32 %v4455, %v4456
      %v4458 = vsel %vm1101, %v4397, 0.0
      %v4459 = vadd.f32 %v4457, %v4458
      %v4460 = vsel %vm1101, %v4398, 0.0
      %v4461 = vadd.f32 %v4459, %v4460
      %v4462 = vsel %vm1101, %v4399, 0.0
      %v4463 = vadd.f32 %v4461, %v4462
      %v4464 = vsel %vm1101, %v4400, 0.0
      %v4465 = vadd.f32 %v4463, %v4464
      %v4466 = vsel %vm1101, %v4401, 0.0
      %v4467 = vadd.f32 %v4465, %v4466
      %v4468 = vsel %vm1101, %v4402, 0.0
      %v4469 = vadd.f32 %v4467, %v4468
      %v4470 = vsel %vm1101, %v4403, 0.0
      %v4471 = vadd.f32 %v4469, %v4470
      %v4472 = vsel %vm1101, %v4404, 0.0
      %v4473 = vadd.f32 %v4471, %v4472
      %v4474 = vsel %vm1101, %v4405, 0.0
      %v4475 = vadd.f32 %v4473, %v4474
      %v4476 = vsel %vm1101, %v4406, 0.0
      %v4477 = vadd.f32 %v4475, %v4476
      %v4478 = vrot.slane %v4477, 4
      %v4479 = vadd.f32 %v4477, %v4478
      %v4480 = vrot.slane %v4479, 2
      %v4481 = vadd.f32 %v4479, %v4480
      %v4482 = vrot.slane %v4481, 1
      %v4483 = vadd.f32 %v4481, %v4482
      %v4484 = vmul.f32 %v4483, 0.015625
      %v4485 = vld [vmem:[%s8] sm:$0xff]
      %v4486 = vld [vmem:[%s8 + $0x8] sm:$0xff]
      %v4487 = vld [vmem:[%s8 + $0x10] sm:$0xff]
      %v4488 = vld [vmem:[%s8 + $0x18] sm:$0xff]
      %v4490 = vsel %vm1101, %v4484, 0
      %4492 = vmatprep.subr.mxu0 0.0
      %4493 = vmatpush1.msra.mxu0 0.0
      %4494 = vmatprep.subr.mxu0 0.0
      %4495 = vmatpush1.msra.mxu0 0.0
      %4496 = vmatprep.subr.mxu0 0.0
      %4497 = vmatpush1.msra.mxu0 0.0
      %4498 = vmatprep.subr.mxu0 0.0
      %4499 = vmatpush1.msra.mxu0 0.0
      %4500 = vmatprep.subr.mxu0 0.0
      %4501 = vmatpush1.msra.mxu0 0.0
      %4502 = vmatprep.subr.mxu0 0.0
      %4503 = vmatpush1.msra.mxu0 0.0
      %4504 = vmatprep.subr.mxu0 0.0
      %4505 = vmatpush1.msra.mxu0 0.0
      %4506 = vmatprep.subr.mxu0 0.0
      %4507 = vmatpush1.msra.mxu0 0.0
      %4508 = vmatprep.subr.mxu0 0.0
      %4509 = vmatpush1.msra.mxu0 0.0
      %4510 = vmatprep.subr.mxu0 0.0
      %4511 = vmatpush1.msra.mxu0 0.0
      %4512 = vmatprep.subr.mxu0 0.0
      %4513 = vmatpush1.msra.mxu0 0.0
      %4514 = vmatprep.subr.mxu0 0.0
      %4515 = vmatpush1.msra.mxu0 0.0
      %4516 = vmatprep.subr.mxu0 0.0
      %4517 = vmatpush1.msra.mxu0 %v4488
      %4518 = vmatprep.subr.mxu0 0.0
      %4519 = vmatpush1.msra.mxu0 %v4487
      %4520 = vmatprep.subr.mxu0 0.0
      %4521 = vmatpush1.msra.mxu0 %v4486
      %4522 = vmatprep.subr.mxu0 0.0
      %4523 = vmatpush1.msra.mxu0 %v4485
      %4524 = vmatprep.subr.mxu0 0.0
      %4525 = vmatpush2.msra.mxu0 0.0
      %4526 = vmatprep.subr.mxu0 0.0
      %4527 = vmatpush2.msra.mxu0 0.0
      %4528 = vmatprep.subr.mxu0 0.0
      %4529 = vmatpush2.msra.mxu0 0.0
      %4530 = vmatprep.subr.mxu0 0.0
      %4531 = vmatpush2.msra.mxu0 0.0
      %4532 = vmatprep.subr.mxu0 0.0
      %4533 = vmatpush2.msra.mxu0 0.0
      %4534 = vmatprep.subr.mxu0 0.0
      %4535 = vmatpush2.msra.mxu0 0.0
      %4536 = vmatprep.subr.mxu0 0.0
      %4537 = vmatpush2.msra.mxu0 0.0
      %4538 = vmatprep.subr.mxu0 0.0
      %4539 = vmatpush2.msra.mxu0 0.0
      %4540 = vmatprep.subr.mxu0 0.0
      %4541 = vmatpush2.msra.mxu0 0.0
      %4542 = vmatprep.subr.mxu0 0.0
      %4543 = vmatpush2.msra.mxu0 0.0
      %4544 = vmatprep.subr.mxu0 0.0
      %4545 = vmatpush2.msra.mxu0 0.0
      %4546 = vmatprep.subr.mxu0 0.0
      %4547 = vmatpush2.msra.mxu0 0.0
      %4548 = vmatprep.subr.mxu0 0.0
      %4549 = vmatpush2.msra.mxu0 0.0
      %4550 = vmatprep.subr.mxu0 0.0
      %4551 = vmatpush2.msra.mxu0 0.0
      %4552 = vmatprep.subr.mxu0 0.0
      %4553 = vmatpush2.msra.mxu0 0.0
      %4554 = vmatprep.subr.mxu0 0.0
      %4555 = vmatpush2.msra.mxu0 0.0
      %4556 = vmatprep.mubr.f32.mxu0 0.0
      %4557 = vmatmul.mubr.f32.gmra.mxu0 %v4490
      %v4558 = vpop.f32.mrf.mxu0
      %v4559 = vadd.f32 0.0, %v4558
      %v4560 = vpop.f32.mrf.mxu0
      %4561 = vdwg.mxu0
      %v4562 = vmax.f32 %v4559, 0.0
      %v4563 = vld [vmem:[%s9] sm:$0x3]
      %vm4564 = vcmask 15360
      %v4566 = vsel %vm4564, %v4562, 0
      %vm4568 = vcmask 1041408
      %v4570 = vsel %vm4568, %v4563, 0
      %4572 = vmatprep.subr.mxu0 0.0
      %4573 = vmatpush1.msra.mxu0 0.0
      %4574 = vmatprep.subr.mxu0 0.0
      %4575 = vmatpush1.msra.mxu0 0.0
      %4576 = vmatprep.subr.mxu0 0.0
      %4577 = vmatpush1.msra.mxu0 0.0
      %4578 = vmatprep.subr.mxu0 0.0
      %4579 = vmatpush1.msra.mxu0 0.0
      %4580 = vmatprep.subr.mxu0 0.0
      %4581 = vmatpush1.msra.mxu0 0.0
      %4582 = vmatprep.subr.mxu0 0.0
      %4583 = vmatpush1.msra.mxu0 0.0
      %4584 = vmatprep.subr.mxu0 0.0
      %4585 = vmatpush1.msra.mxu0 0.0
      %4586 = vmatprep.subr.mxu0 0.0
      %4587 = vmatpush1.msra.mxu0 0.0
      %4588 = vmatprep.subr.mxu0 0.0
      %4589 = vmatpush1.msra.mxu0 0.0
      %4590 = vmatprep.subr.mxu0 0.0
      %4591 = vmatpush1.msra.mxu0 0.0
      %4592 = vmatprep.subr.mxu0 0.0
      %4593 = vmatpush1.msra.mxu0 0.0
      %4594 = vmatprep.subr.mxu0 0.0
      %4595 = vmatpush1.msra.mxu0 0.0
      %4596 = vmatprep.subr.mxu0 0.0
      %4597 = vmatpush1.msra.mxu0 0.0
      %4598 = vmatprep.subr.mxu0 0.0
      %4599 = vmatpush1.msra.mxu0 0.0
      %4600 = vmatprep.subr.mxu0 0.0
      %4601 = vmatpush1.msra.mxu0 0.0
      %4602 = vmatprep.subr.mxu0 0.0
      %4603 = vmatpush1.msra.mxu0 %v4570
      %4604 = vmatprep.subr.mxu0 0.0
      %4605 = vmatpush2.msra.mxu0 0.0
      %4606 = vmatprep.subr.mxu0 0.0
      %4607 = vmatpush2.msra.mxu0 0.0
      %4608 = vmatprep.subr.mxu0 0.0
      %4609 = vmatpush2.msra.mxu0 0.0
      %4610 = vmatprep.subr.mxu0 0.0
      %4611 = vmatpush2.msra.mxu0 0.0
      %4612 = vmatprep.subr.mxu0 0.0
      %4613 = vmatpush2.msra.mxu0 0.0
      %4614 = vmatprep.subr.mxu0 0.0
      %4615 = vmatpush2.msra.mxu0 0.0
      %4616 = vmatprep.subr.mxu0 0.0
      %4617 = vmatpush2.msra.mxu0 0.0
      %4618 = vmatprep.subr.mxu0 0.0
      %4619 = vmatpush2.msra.mxu0 0.0
      %4620 = vmatprep.subr.mxu0 0.0
      %4621 = vmatpush2.msra.mxu0 0.0
      %4622 = vmatprep.subr.mxu0 0.0
      %4623 = vmatpush2.msra.mxu0 0.0
      %4624 = vmatprep.subr.mxu0 0.0
      %4625 = vmatpush2.msra.mxu0 0.0
      %4626 = vmatprep.subr.mxu0 0.0
      %4627 = vmatpush2.msra.mxu0 0.0
      %4628 = vmatprep.subr.mxu0 0.0
      %4629 = vmatpush2.msra.mxu0 0.0
      %4630 = vmatprep.subr.mxu0 0.0
      %4631 = vmatpush2.msra.mxu0 0.0
      %4632 = vmatprep.subr.mxu0 0.0
      %4633 = vmatpush2.msra.mxu0 0.0
      %4634 = vmatprep.subr.mxu0 0.0
      %4635 = vmatpush2.msra.mxu0 0.0
      %4636 = vmatprep.mubr.f32.mxu0 0.0
      %4637 = vmatmul.mubr.f32.gmra.mxu0 %v4566
      %v4638 = vpop.f32.mrf.mxu0
      %v4639 = vadd.f32 0.0, %v4638
      %v4640 = vpop.f32.mrf.mxu0
      %4641 = vdwg.mxu0
      %v4642 = vxor.u32 %v4639, 2147483648
      %v4643 = vmul.f32 %v4642, 1.442695
      %v4644 = vpow.pop %v4643
      %v4645 = vadd.f32 %v4644, 1.0
      %v4646 = vrcp.pop %v4645
      %v4647 = vmul.f32 1.0, %v4646
      %v4648 = vld [vmem:[%s401] sm:$0xf]
      %v4649 = vld [vmem:[%s401 + $0x4] sm:$0xf]
      %v4650 = vld [vmem:[%s401 + $0x8] sm:$0xf]
      %v4651 = vld [vmem:[%s401 + $0xc] sm:$0xf]
      %v4652 = vld [vmem:[%s401 + $0x10] sm:$0xf]
      %v4653 = vld [vmem:[%s401 + $0x14] sm:$0xf]
      %v4654 = vld [vmem:[%s401 + $0x18] sm:$0xf]
      %v4655 = vld [vmem:[%s401 + $0x1c] sm:$0xf]
      %v4656 = vld [vmem:[%s401 + $0x20] sm:$0xf]
      %v4657 = vld [vmem:[%s401 + $0x24] sm:$0xf]
      %v4658 = vld [vmem:[%s401 + $0x28] sm:$0xf]
      %v4659 = vld [vmem:[%s401 + $0x2c] sm:$0xf]
      %v4660 = vld [vmem:[%s401 + $0x30] sm:$0xf]
      %v4661 = vld [vmem:[%s401 + $0x34] sm:$0xf]
      %v4662 = vld [vmem:[%s401 + $0x38] sm:$0xf]
      %v4663 = vld [vmem:[%s401 + $0x3c] sm:$0xf]
      %v4664 = vld [vmem:[%s401 + $0x40] sm:$0xf]
      %v4665 = vld [vmem:[%s401 + $0x44] sm:$0xf]
      %v4666 = vld [vmem:[%s401 + $0x48] sm:$0xf]
      %v4667 = vld [vmem:[%s401 + $0x4c] sm:$0xf]
      %v4668 = vld [vmem:[%s401 + $0x50] sm:$0xf]
      %v4669 = vld [vmem:[%s401 + $0x54] sm:$0xf]
      %v4670 = vld [vmem:[%s401 + $0x58] sm:$0xf]
      %v4671 = vld [vmem:[%s401 + $0x5c] sm:$0xf]
      %v4672 = vld [vmem:[%s401 + $0x60] sm:$0xf]
      %v4673 = vld [vmem:[%s401 + $0x64] sm:$0xf]
      %v4674 = vld [vmem:[%s401 + $0x68] sm:$0xf]
      %v4675 = vld [vmem:[%s401 + $0x6c] sm:$0xf]
      %v4676 = vld [vmem:[%s401 + $0x70] sm:$0xf]
      %v4677 = vld [vmem:[%s401 + $0x74] sm:$0xf]
      %v4678 = vld [vmem:[%s401 + $0x78] sm:$0xf]
      %v4679 = vld [vmem:[%s401 + $0x7c] sm:$0xf]
      %v4680 = vld [vmem:[%s401 + $0x80] sm:$0xf]
      %v4681 = vld [vmem:[%s401 + $0x84] sm:$0xf]
      %v4682 = vld [vmem:[%s401 + $0x88] sm:$0xf]
      %v4683 = vld [vmem:[%s401 + $0x8c] sm:$0xf]
      %v4684 = vld [vmem:[%s6] sm:$0xf]
      %v4685 = vld [vmem:[%s6 + $0x4] sm:$0xf]
      %v4686 = vld [vmem:[%s7] sm:$0x1]
      %v4688 = vlaneseq
      %v4689 = vshrl.u32 %v4688, 7
      %v4690 = vsub.s32 0, %v4689
      %v4691 = vrot.slane %v4686, %v4690
      %v4729 = vunpack.c.l.b16 %v4648
      %v4730 = vunpack.c.l.b16 %v4649
      %v4731 = vunpack.c.l.b16 %v4650
      %v4732 = vunpack.c.l.b16 %v4651
      %v4733 = vunpack.c.l.b16 %v4652
      %v4734 = vunpack.c.l.b16 %v4653
      %v4735 = vunpack.c.l.b16 %v4654
      %v4736 = vunpack.c.l.b16 %v4655
      %v4737 = vunpack.c.l.b16 %v4656
      %v4738 = vunpack.c.l.b16 %v4657
      %v4739 = vunpack.c.l.b16 %v4658
      %v4740 = vunpack.c.l.b16 %v4659
      %v4741 = vunpack.c.l.b16 %v4660
      %v4742 = vunpack.c.l.b16 %v4661
      %v4743 = vunpack.c.l.b16 %v4662
      %v4744 = vunpack.c.l.b16 %v4663
      %v4745 = vunpack.c.l.b16 %v4664
      %v4746 = vunpack.c.l.b16 %v4665
      %v4747 = vunpack.c.l.b16 %v4666
      %v4748 = vunpack.c.l.b16 %v4667
      %v4749 = vunpack.c.l.b16 %v4668
      %v4750 = vunpack.c.l.b16 %v4669
      %v4751 = vunpack.c.l.b16 %v4670
      %v4752 = vunpack.c.l.b16 %v4671
      %v4753 = vunpack.c.l.b16 %v4672
      %v4754 = vunpack.c.l.b16 %v4673
      %v4755 = vunpack.c.l.b16 %v4674
      %v4756 = vunpack.c.l.b16 %v4675
      %v4757 = vunpack.c.l.b16 %v4676
      %v4758 = vunpack.c.l.b16 %v4677
      %v4759 = vunpack.c.l.b16 %v4678
      %v4760 = vunpack.c.l.b16 %v4679
      %v4761 = vunpack.c.l.b16 %v4680
      %v4762 = vunpack.c.l.b16 %v4681
      %v4763 = vunpack.c.l.b16 %v4682
      %v4764 = vunpack.c.l.b16 %v4683
      %v4765 = vpack.c.b16 %v4730, %v4729
      %v4766 = vpack.c.b16 %v4732, %v4731
      %v4767 = vpack.c.b16 %v4734, %v4733
      %v4768 = vpack.c.b16 %v4736, %v4735
      %v4769 = vpack.c.b16 %v4738, %v4737
      %v4770 = vpack.c.b16 %v4740, %v4739
      %v4771 = vpack.c.b16 %v4742, %v4741
      %v4772 = vpack.c.b16 %v4744, %v4743
      %v4773 = vpack.c.b16 %v4746, %v4745
      %v4774 = vpack.c.b16 %v4748, %v4747
      %v4775 = vpack.c.b16 %v4750, %v4749
      %v4776 = vpack.c.b16 %v4752, %v4751
      %v4777 = vpack.c.b16 %v4754, %v4753
      %v4778 = vpack.c.b16 %v4756, %v4755
      %v4779 = vpack.c.b16 %v4758, %v4757
      %v4780 = vpack.c.b16 %v4760, %v4759
      %v4781 = vpack.c.b16 %v4762, %v4761
      %v4782 = vpack.c.b16 %v4764, %v4763
      %v4785 = vunpack.c.l.b16 %v4684
      %v4786 = vunpack.c.l.b16 %v4685
      %v4787 = vpack.c.b16 %v4786, %v4785
      %v4790 = vsel %vm707, %v4765, 0
      %v4793 = vsel %vm707, %v4766, 0
      %v4796 = vsel %vm707, %v4767, 0
      %v4799 = vsel %vm707, %v4768, 0
      %v4802 = vsel %vm707, %v4769, 0
      %v4805 = vsel %vm707, %v4770, 0
      %v4808 = vsel %vm707, %v4771, 0
      %v4811 = vsel %vm707, %v4772, 0
      %v4814 = vsel %vm707, %v4773, 0
      %v4817 = vsel %vm707, %v4774, 0
      %v4820 = vsel %vm707, %v4775, 0
      %v4823 = vsel %vm707, %v4776, 0
      %v4826 = vsel %vm707, %v4777, 0
      %v4829 = vsel %vm707, %v4778, 0
      %v4832 = vsel %vm707, %v4779, 0
      %v4835 = vsel %vm707, %v4780, 0
      %v4838 = vsel %vm707, %v4781, 0
      %v4841 = vsel %vm707, %v4782, 0
      %4843 = vmatprep.subr.bf16.mxu0 0
      %4844 = vmatpush1.bf16.msra.mxu0 0
      %4845 = vmatprep.subr.bf16.mxu0 0
      %4846 = vmatpush1.bf16.msra.mxu0 0
      %4847 = vmatprep.subr.bf16.mxu0 0
      %4848 = vmatpush1.bf16.msra.mxu0 0
      %4849 = vmatprep.subr.bf16.mxu0 0
      %4850 = vmatpush1.bf16.msra.mxu0 0
      %4851 = vmatprep.subr.bf16.mxu0 0
      %4852 = vmatpush1.bf16.msra.mxu0 0
      %4853 = vmatprep.subr.bf16.mxu0 0
      %4854 = vmatpush1.bf16.msra.mxu0 0
      %4855 = vmatprep.subr.bf16.mxu0 0
      %4856 = vmatpush1.bf16.msra.mxu0 0
      %4857 = vmatprep.subr.bf16.mxu0 0
      %4858 = vmatpush1.bf16.msra.mxu0 %v4787
      %4859 = vmatprep.subr.bf16.mxu0 0
      %4860 = vmatpush2.bf16.msra.mxu0 0
      %4861 = vmatprep.subr.bf16.mxu0 0
      %4862 = vmatpush2.bf16.msra.mxu0 0
      %4863 = vmatprep.subr.bf16.mxu0 0
      %4864 = vmatpush2.bf16.msra.mxu0 0
      %4865 = vmatprep.subr.bf16.mxu0 0
      %4866 = vmatpush2.bf16.msra.mxu0 0
      %4867 = vmatprep.subr.bf16.mxu0 0
      %4868 = vmatpush2.bf16.msra.mxu0 0
      %4869 = vmatprep.subr.bf16.mxu0 0
      %4870 = vmatpush2.bf16.msra.mxu0 0
      %4871 = vmatprep.subr.bf16.mxu0 0
      %4872 = vmatpush2.bf16.msra.mxu0 0
      %4873 = vmatprep.subr.bf16.mxu0 0
      %4874 = vmatpush2.bf16.msra.mxu0 0
      %4875 = vmatprep.mubr.bf16.mxu0 0
      %4876 = vmatmul.mubr.bf16.gmra.mxu0 %v4790
      %v4877 = vpop.f32.mrf.mxu0
      %v4878 = vadd.f32 %v4691, %v4877
      %v4879 = vpop.f32.mrf.mxu0
      %v4880 = vpop.f32.mrf.mxu0
      %v4881 = vadd.f32 %v4691, %v4880
      %v4882 = vpop.f32.mrf.mxu0
      %4883 = vmatprep.mubr.bf16.mxu0 0
      %4884 = vmatmul.mubr.bf16.gmra.mxu0 %v4793
      %v4885 = vpop.f32.mrf.mxu0
      %v4886 = vadd.f32 %v4691, %v4885
      %v4887 = vpop.f32.mrf.mxu0
      %v4888 = vpop.f32.mrf.mxu0
      %v4889 = vadd.f32 %v4691, %v4888
      %v4890 = vpop.f32.mrf.mxu0
      %4891 = vmatprep.mubr.bf16.mxu0 0
      %4892 = vmatmul.mubr.bf16.gmra.mxu0 %v4796
      %v4893 = vpop.f32.mrf.mxu0
      %v4894 = vadd.f32 %v4691, %v4893
      %v4895 = vpop.f32.mrf.mxu0
      %v4896 = vpop.f32.mrf.mxu0
      %v4897 = vadd.f32 %v4691, %v4896
      %v4898 = vpop.f32.mrf.mxu0
      %4899 = vmatprep.mubr.bf16.mxu0 0
      %4900 = vmatmul.mubr.bf16.gmra.mxu0 %v4799
      %v4901 = vpop.f32.mrf.mxu0
      %v4902 = vadd.f32 %v4691, %v4901
      %v4903 = vpop.f32.mrf.mxu0
      %v4904 = vpop.f32.mrf.mxu0
      %v4905 = vadd.f32 %v4691, %v4904
      %v4906 = vpop.f32.mrf.mxu0
      %4907 = vmatprep.mubr.bf16.mxu0 0
      %4908 = vmatmul.mubr.bf16.gmra.mxu0 %v4802
      %v4909 = vpop.f32.mrf.mxu0
      %v4910 = vadd.f32 %v4691, %v4909
      %v4911 = vpop.f32.mrf.mxu0
      %v4912 = vpop.f32.mrf.mxu0
      %v4913 = vadd.f32 %v4691, %v4912
      %v4914 = vpop.f32.mrf.mxu0
      %4915 = vmatprep.mubr.bf16.mxu0 0
      %4916 = vmatmul.mubr.bf16.gmra.mxu0 %v4805
      %v4917 = vpop.f32.mrf.mxu0
      %v4918 = vadd.f32 %v4691, %v4917
      %v4919 = vpop.f32.mrf.mxu0
      %v4920 = vpop.f32.mrf.mxu0
      %v4921 = vadd.f32 %v4691, %v4920
      %v4922 = vpop.f32.mrf.mxu0
      %4923 = vmatprep.mubr.bf16.mxu0 0
      %4924 = vmatmul.mubr.bf16.gmra.mxu0 %v4808
      %v4925 = vpop.f32.mrf.mxu0
      %v4926 = vadd.f32 %v4691, %v4925
      %v4927 = vpop.f32.mrf.mxu0
      %v4928 = vpop.f32.mrf.mxu0
      %v4929 = vadd.f32 %v4691, %v4928
      %v4930 = vpop.f32.mrf.mxu0
      %4931 = vmatprep.mubr.bf16.mxu0 0
      %4932 = vmatmul.mubr.bf16.gmra.mxu0 %v4811
      %v4933 = vpop.f32.mrf.mxu0
      %v4934 = vadd.f32 %v4691, %v4933
      %v4935 = vpop.f32.mrf.mxu0
      %v4936 = vpop.f32.mrf.mxu0
      %v4937 = vadd.f32 %v4691, %v4936
      %v4938 = vpop.f32.mrf.mxu0
      %4939 = vmatprep.mubr.bf16.mxu0 0
      %4940 = vmatmul.mubr.bf16.gmra.mxu0 %v4814
      %v4941 = vpop.f32.mrf.mxu0
      %v4942 = vadd.f32 %v4691, %v4941
      %v4943 = vpop.f32.mrf.mxu0
      %v4944 = vpop.f32.mrf.mxu0
      %v4945 = vadd.f32 %v4691, %v4944
      %v4946 = vpop.f32.mrf.mxu0
      %4947 = vmatprep.mubr.bf16.mxu0 0
      %4948 = vmatmul.mubr.bf16.gmra.mxu0 %v4817
      %v4949 = vpop.f32.mrf.mxu0
      %v4950 = vadd.f32 %v4691, %v4949
      %v4951 = vpop.f32.mrf.mxu0
      %v4952 = vpop.f32.mrf.mxu0
      %v4953 = vadd.f32 %v4691, %v4952
      %v4954 = vpop.f32.mrf.mxu0
      %4955 = vmatprep.mubr.bf16.mxu0 0
      %4956 = vmatmul.mubr.bf16.gmra.mxu0 %v4820
      %v4957 = vpop.f32.mrf.mxu0
      %v4958 = vadd.f32 %v4691, %v4957
      %v4959 = vpop.f32.mrf.mxu0
      %v4960 = vpop.f32.mrf.mxu0
      %v4961 = vadd.f32 %v4691, %v4960
      %v4962 = vpop.f32.mrf.mxu0
      %4963 = vmatprep.mubr.bf16.mxu0 0
      %4964 = vmatmul.mubr.bf16.gmra.mxu0 %v4823
      %v4965 = vpop.f32.mrf.mxu0
      %v4966 = vadd.f32 %v4691, %v4965
      %v4967 = vpop.f32.mrf.mxu0
      %v4968 = vpop.f32.mrf.mxu0
      %v4969 = vadd.f32 %v4691, %v4968
      %v4970 = vpop.f32.mrf.mxu0
      %4971 = vmatprep.mubr.bf16.mxu0 0
      %4972 = vmatmul.mubr.bf16.gmra.mxu0 %v4826
      %v4973 = vpop.f32.mrf.mxu0
      %v4974 = vadd.f32 %v4691, %v4973
      %v4975 = vpop.f32.mrf.mxu0
      %v4976 = vpop.f32.mrf.mxu0
      %v4977 = vadd.f32 %v4691, %v4976
      %v4978 = vpop.f32.mrf.mxu0
      %4979 = vmatprep.mubr.bf16.mxu0 0
      %4980 = vmatmul.mubr.bf16.gmra.mxu0 %v4829
      %v4981 = vpop.f32.mrf.mxu0
      %v4982 = vadd.f32 %v4691, %v4981
      %v4983 = vpop.f32.mrf.mxu0
      %v4984 = vpop.f32.mrf.mxu0
      %v4985 = vadd.f32 %v4691, %v4984
      %v4986 = vpop.f32.mrf.mxu0
      %4987 = vmatprep.mubr.bf16.mxu0 0
      %4988 = vmatmul.mubr.bf16.gmra.mxu0 %v4832
      %v4989 = vpop.f32.mrf.mxu0
      %v4990 = vadd.f32 %v4691, %v4989
      %v4991 = vpop.f32.mrf.mxu0
      %v4992 = vpop.f32.mrf.mxu0
      %v4993 = vadd.f32 %v4691, %v4992
      %v4994 = vpop.f32.mrf.mxu0
      %4995 = vmatprep.mubr.bf16.mxu0 0
      %4996 = vmatmul.mubr.bf16.gmra.mxu0 %v4835
      %v4997 = vpop.f32.mrf.mxu0
      %v4998 = vadd.f32 %v4691, %v4997
      %v4999 = vpop.f32.mrf.mxu0
      %v5000 = vpop.f32.mrf.mxu0
      %v5001 = vadd.f32 %v4691, %v5000
      %v5002 = vpop.f32.mrf.mxu0
      %5003 = vmatprep.mubr.bf16.mxu0 0
      %5004 = vmatmul.mubr.bf16.gmra.mxu0 %v4838
      %v5005 = vpop.f32.mrf.mxu0
      %v5006 = vadd.f32 %v4691, %v5005
      %v5007 = vpop.f32.mrf.mxu0
      %v5008 = vpop.f32.mrf.mxu0
      %v5009 = vadd.f32 %v4691, %v5008
      %v5010 = vpop.f32.mrf.mxu0
      %5011 = vmatprep.mubr.bf16.mxu0 0
      %5012 = vmatmul.mubr.bf16.gmra.mxu0 %v4841
      %v5013 = vpop.f32.mrf.mxu0
      %v5014 = vadd.f32 %v4691, %v5013
      %v5015 = vpop.f32.mrf.mxu0
      %v5016 = vpop.f32.mrf.mxu0
      %v5017 = vadd.f32 %v4691, %v5016
      %v5018 = vpop.f32.mrf.mxu0
      %5019 = vdwg.mxu0
      %v5020 = vlaneseq
      %v5021 = vshrl.u32 %v5020, 7
      %v5022 = vsub.s32 0, %v5021
      %v5023 = vrot.slane %v4647, %v5022
      %v5024 = vmul.f32 %v4119, %v5023
      %v5025 = vmul.f32 %v4120, %v5023
      %v5026 = vmul.f32 %v4121, %v5023
      %v5027 = vmul.f32 %v4122, %v5023
      %v5028 = vmul.f32 %v4123, %v5023
      %v5029 = vmul.f32 %v4124, %v5023
      %v5030 = vmul.f32 %v4125, %v5023
      %v5031 = vmul.f32 %v4126, %v5023
      %v5032 = vmul.f32 %v4127, %v5023
      %v5033 = vmul.f32 %v4128, %v5023
      %v5034 = vmul.f32 %v4129, %v5023
      %v5035 = vmul.f32 %v4130, %v5023
      %v5036 = vmul.f32 %v4131, %v5023
      %v5037 = vmul.f32 %v4132, %v5023
      %v5038 = vmul.f32 %v4133, %v5023
      %v5039 = vmul.f32 %v4134, %v5023
      %v5040 = vmul.f32 %v4135, %v5023
      %v5041 = vmul.f32 %v4136, %v5023
      %v5042 = vmul.f32 %v4137, %v5023
      %v5043 = vmul.f32 %v4138, %v5023
      %v5044 = vmul.f32 %v4139, %v5023
      %v5045 = vmul.f32 %v4140, %v5023
      %v5046 = vmul.f32 %v4141, %v5023
      %v5047 = vmul.f32 %v4142, %v5023
      %v5048 = vmul.f32 %v4143, %v5023
      %v5049 = vmul.f32 %v4144, %v5023
      %v5050 = vmul.f32 %v4145, %v5023
      %v5051 = vmul.f32 %v4146, %v5023
      %v5052 = vmul.f32 %v4147, %v5023
      %v5053 = vmul.f32 %v4148, %v5023
      %v5054 = vmul.f32 %v4149, %v5023
      %v5055 = vmul.f32 %v4150, %v5023
      %v5056 = vmul.f32 %v4151, %v5023
      %v5057 = vmul.f32 %v4152, %v5023
      %v5058 = vmul.f32 %v4153, %v5023
      %v5059 = vmul.f32 %v4154, %v5023
      %v5060 = vadd.f32 %v5024, %v4878
      %v5061 = vadd.f32 %v5025, %v4881
      %v5062 = vadd.f32 %v5026, %v4886
      %v5063 = vadd.f32 %v5027, %v4889
      %v5064 = vadd.f32 %v5028, %v4894
      %v5065 = vadd.f32 %v5029, %v4897
      %v5066 = vadd.f32 %v5030, %v4902
      %v5067 = vadd.f32 %v5031, %v4905
      %v5068 = vadd.f32 %v5032, %v4910
      %v5069 = vadd.f32 %v5033, %v4913
      %v5070 = vadd.f32 %v5034, %v4918
      %v5071 = vadd.f32 %v5035, %v4921
      %v5072 = vadd.f32 %v5036, %v4926
      %v5073 = vadd.f32 %v5037, %v4929
      %v5074 = vadd.f32 %v5038, %v4934
      %v5075 = vadd.f32 %v5039, %v4937
      %v5076 = vadd.f32 %v5040, %v4942
      %v5077 = vadd.f32 %v5041, %v4945
      %v5078 = vadd.f32 %v5042, %v4950
      %v5079 = vadd.f32 %v5043, %v4953
      %v5080 = vadd.f32 %v5044, %v4958
      %v5081 = vadd.f32 %v5045, %v4961
      %v5082 = vadd.f32 %v5046, %v4966
      %v5083 = vadd.f32 %v5047, %v4969
      %v5084 = vadd.f32 %v5048, %v4974
      %v5085 = vadd.f32 %v5049, %v4977
      %v5086 = vadd.f32 %v5050, %v4982
      %v5087 = vadd.f32 %v5051, %v4985
      %v5088 = vadd.f32 %v5052, %v4990
      %v5089 = vadd.f32 %v5053, %v4993
      %v5090 = vadd.f32 %v5054, %v4998
      %v5091 = vadd.f32 %v5055, %v5001
      %v5092 = vadd.f32 %v5056, %v5006
      %v5093 = vadd.f32 %v5057, %v5009
      %v5094 = vadd.f32 %v5058, %v5014
      %v5095 = vadd.f32 %v5059, %v5017
      %5096 = vst.msk [vmem:[%s406] sm:$0xff] %vm1101, %v5060
      %5097 = vst.msk [vmem:[%s406 + $0x8] sm:$0xff] %vm1101, %v5061
      %5098 = vst.msk [vmem:[%s406 + $0x10] sm:$0xff] %vm1101, %v5062
      %5099 = vst.msk [vmem:[%s406 + $0x18] sm:$0xff] %vm1101, %v5063
      %5100 = vst.msk [vmem:[%s406 + $0x20] sm:$0xff] %vm1101, %v5064
      %5101 = vst.msk [vmem:[%s406 + $0x28] sm:$0xff] %vm1101, %v5065
      %5102 = vst.msk [vmem:[%s406 + $0x30] sm:$0xff] %vm1101, %v5066
      %5103 = vst.msk [vmem:[%s406 + $0x38] sm:$0xff] %vm1101, %v5067
      %5104 = vst.msk [vmem:[%s406 + $0x40] sm:$0xff] %vm1101, %v5068
      %5105 = vst.msk [vmem:[%s406 + $0x48] sm:$0xff] %vm1101, %v5069
      %5106 = vst.msk [vmem:[%s406 + $0x50] sm:$0xff] %vm1101, %v5070
      %5107 = vst.msk [vmem:[%s406 + $0x58] sm:$0xff] %vm1101, %v5071
      %5108 = vst.msk [vmem:[%s406 + $0x60] sm:$0xff] %vm1101, %v5072
      %5109 = vst.msk [vmem:[%s406 + $0x68] sm:$0xff] %vm1101, %v5073
      %5110 = vst.msk [vmem:[%s406 + $0x70] sm:$0xff] %vm1101, %v5074
      %5111 = vst.msk [vmem:[%s406 + $0x78] sm:$0xff] %vm1101, %v5075
      %5112 = vst.msk [vmem:[%s406 + $0x80] sm:$0xff] %vm1101, %v5076
      %5113 = vst.msk [vmem:[%s406 + $0x88] sm:$0xff] %vm1101, %v5077
      %5114 = vst.msk [vmem:[%s406 + $0x90] sm:$0xff] %vm1101, %v5078
      %5115 = vst.msk [vmem:[%s406 + $0x98] sm:$0xff] %vm1101, %v5079
      %5116 = vst.msk [vmem:[%s406 + $0xa0] sm:$0xff] %vm1101, %v5080
      %5117 = vst.msk [vmem:[%s406 + $0xa8] sm:$0xff] %vm1101, %v5081
      %5118 = vst.msk [vmem:[%s406 + $0xb0] sm:$0xff] %vm1101, %v5082
      %5119 = vst.msk [vmem:[%s406 + $0xb8] sm:$0xff] %vm1101, %v5083
      %5120 = vst.msk [vmem:[%s406 + $0xc0] sm:$0xff] %vm1101, %v5084
      %5121 = vst.msk [vmem:[%s406 + $0xc8] sm:$0xff] %vm1101, %v5085
      %5122 = vst.msk [vmem:[%s406 + $0xd0] sm:$0xff] %vm1101, %v5086
      %5123 = vst.msk [vmem:[%s406 + $0xd8] sm:$0xff] %vm1101, %v5087
      %5124 = vst.msk [vmem:[%s406 + $0xe0] sm:$0xff] %vm1101, %v5088
      %5125 = vst.msk [vmem:[%s406 + $0xe8] sm:$0xff] %vm1101, %v5089
      %5126 = vst.msk [vmem:[%s406 + $0xf0] sm:$0xff] %vm1101, %v5090
      %5127 = vst.msk [vmem:[%s406 + $0xf8] sm:$0xff] %vm1101, %v5091
      %5128 = vst.msk [vmem:[%s406 + $0x100] sm:$0xff] %vm1101, %v5092
      %5129 = vst.msk [vmem:[%s406 + $0x108] sm:$0xff] %vm1101, %v5093
      %5130 = vst.msk [vmem:[%s406 + $0x110] sm:$0xff] %vm1101, %v5094
      %5131 = vst.msk [vmem:[%s406 + $0x118] sm:$0xff] %vm1101, %v5095
      %p5132 = scmp.lt.s32.totalorder %s22, 1
      %s5133 = scalar_select %p5132, %s22, 1
      %s5134 = smul.addr %s5133, 36
      %s5135 = smul.addr %s5134, 8
      %s5136 = scalar_lea.vmem %s11, %s5135
      // Predicated region
      $region65: #{bottleneck_ir_se_forward.1} parent=63 // pred_check
        %p5137 = pneg %p281
      $region66: #{bottleneck_ir_se_forward.1} parent=63 // pred_check_branch
        %5139 = sbr.rel (%p5137) target = $region68
      $region67: #{bottleneck_ir_se_forward.1} parent=63 // pred_region
        _
      $region68: #{bottleneck_ir_se_forward.1} parent=63 // pred_fallthru
        _
    $region64: #{bottleneck_ir_se_forward.1} parent=5 // pred_fallthru
      _
    %p5140 = scmp.le.s32.totalorder 2, %s17
    // Predicated region
    $region69: #{bottleneck_ir_se_forward.1} parent=5 // pred_check
      %p5141 = pneg %p5140
    $region70: #{bottleneck_ir_se_forward.1} parent=5 // pred_check_branch
      %5143 = sbr.rel (%p5141) target = $region72
    $region71: #{bottleneck_ir_se_forward.1} parent=5 // pred_region
      %s5144 = ssub.s32 %s17, 2
      // Predicated region
      $region73: #{bottleneck_ir_se_forward.1} parent=71 // pred_check
        %p5145 = pneg %p287
      $region74: #{bottleneck_ir_se_forward.1} parent=71 // pred_check_branch
        %5147 = sbr.rel (%p5145) target = $region76
      $region75: #{bottleneck_ir_se_forward.1} parent=71 // pred_region
        %p5148 = scmp.lt.s32.totalorder %s23, 1
        %s5149 = scalar_select %p5148, %s23, 1
        %s5150 = smul.addr %s5149, 36
        %s5151 = smul.addr %s5150, 8
        %s5152 = scalar_lea.vmem %s11, %s5151
      $region76: #{bottleneck_ir_se_forward.1} parent=71 // pred_fallthru
        _
    $region72: #{bottleneck_ir_se_forward.1} parent=5 // pred_fallthru
      _
  $region6: #{bottleneck_ir_se_forward.1} parent=0 // loop_footer
    %s21 = sadd.s32 1, %s17
  $region7: #{bottleneck_ir_se_forward.1} parent=0 // loop_footer_branch
    %16 = sbr.rel target = $region3
  $region8: #{bottleneck_ir_se_forward.1} parent=0 // loop_exit
    _

</llo_original>
